<compile_context>
chip_gen: v7x
topology: tpu7x:2x2x1
jax: 0.10.0
libtpu: 0.0.40
codegen_flags: <defaults>
</compile_context>

<pallas_src>
import jax
import jax.numpy as jnp
from jax.experimental import pallas as pl
from jax.experimental.pallas import tpu as pltpu

IN_DIM = 1536
HID_DIM = 768
OUT_DIM = 1024
LN_EPS = 1e-5

VMEM_LIMIT_BYTES = 48 * 1024 * 1024


def _image_proj_kernel(x_ref, w1_ref, b1_ref, gamma_ref, beta_ref,
                       w2_ref, b2_ref, o_ref):
    """Fused Linear -> GELU(exact) -> LayerNorm -> Linear for one row-tile."""
    # Linear 1: (tm, IN_DIM) @ (IN_DIM, HID_DIM) + b1   [bf16 MXU, f32 acc]
    h = jnp.dot(x_ref[...], w1_ref[...], preferred_element_type=jnp.float32)
    h = h + b1_ref[...]

    # Exact GELU (torch.nn.GELU default): 0.5*x*(1+erf(x/sqrt(2))), f32.
    h = 0.5 * h * (1.0 + jax.lax.erf(h * 0.7071067811865475))

    # LayerNorm over the feature axis (eps=1e-5), affine, f32.
    mean = jnp.mean(h, axis=-1, keepdims=True)
    centered = h - mean
    var = jnp.mean(centered * centered, axis=-1, keepdims=True)
    h = centered * jax.lax.rsqrt(var + LN_EPS)
    h = h * gamma_ref[...] + beta_ref[...]

    # Linear 2: (tm, HID_DIM) @ (HID_DIM, OUT_DIM) + b2   [bf16 MXU, f32 acc]
    out = jnp.dot(h.astype(w2_ref.dtype), w2_ref[...],
                  preferred_element_type=jnp.float32)
    out = out + b2_ref[...]
    o_ref[...] = out.astype(o_ref.dtype)


def _pick_tm(m, target=512):
    """Row-tile: large & MXU-friendly for big M, but keep >= 2 grid steps
    (so both v7x TensorCores get work) and modest padding for small M."""
    if m >= 2 * target:
        return target
    half = (m + 1) // 2
    return max(8, pl.cdiv(half, 8) * 8)   # multiple of the 8-sublane tile


def image_proj_model_p(x, params, tm=None):
    """x: (B, S, IN_DIM) -> (B, S, OUT_DIM) via the fused Pallas kernel."""
    B, S, C = x.shape
    assert C == IN_DIM
    M = B * S
    tm = _pick_tm(M) if tm is None else tm
    m_pad = pl.cdiv(M, tm) * tm

    # bf16 activations/weights feed the MXU (f32 accumulation in-kernel) and
    # halve the recurring x DMA; output stays in x.dtype.
    x2d = x.reshape(M, C).astype(jnp.bfloat16)
    if m_pad != M:
        x2d = jnp.pad(x2d, ((0, m_pad - M), (0, 0)))

    w1 = params["w1"].astype(jnp.bfloat16)
    w2 = params["w2"].astype(jnp.bfloat16)
    b1 = params["b1"].astype(jnp.float32)
    gamma = params["gamma"].astype(jnp.float32)
    beta = params["beta"].astype(jnp.float32)
    b2 = params["b2"].astype(jnp.float32)

    def const(shape):
        # Same block for every grid step -> Pallas skips re-DMA.
        return pl.BlockSpec(shape, lambda i: (0, 0))

    out2d = pl.pallas_call(
        _image_proj_kernel,
        out_shape=jax.ShapeDtypeStruct((m_pad, OUT_DIM), x.dtype),
        grid_spec=pltpu.PrefetchScalarGridSpec(
            num_scalar_prefetch=0,
            grid=(m_pad // tm,),
            in_specs=[
                pl.BlockSpec((tm, IN_DIM), lambda i: (i, 0)),  # x rows
                const((IN_DIM, HID_DIM)),                      # W1
                const((1, HID_DIM)),                           # b1
                const((1, HID_DIM)),                           # LN gamma
                const((1, HID_DIM)),                           # LN beta
                const((HID_DIM, OUT_DIM)),                     # W2
                const((1, OUT_DIM)),                           # b2
            ],
            # OUT_DIM = 1024 = 8*128: lane-dense, unmasked stores.
            out_specs=pl.BlockSpec((tm, OUT_DIM), lambda i: (i, 0)),
        ),
        compiler_params=pltpu.CompilerParams(
            dimension_semantics=("parallel",),
            vmem_limit_bytes=VMEM_LIMIT_BYTES,
        ),
    )(x2d, w1, b1, gamma, beta, w2, b2)

    return out2d[:M].reshape(B, S, OUT_DIM)


def sd_model_forward(noisy_latents, timesteps, simg_f_p, timg_f_g, params):
    """Pallas/JAX equivalent of SDModel.forward (minus the external UNet)."""
    extra_image_embeddings_p = image_proj_model_p(simg_f_p, params)   # (B, Sp, 1024)
    extra_image_embeddings_g = timg_f_g                               # (B, Sg, 1024)
    encoder_image_hidden_states = jnp.concatenate(
        [extra_image_embeddings_p, extra_image_embeddings_g], axis=1)
    # TODO(synk): pred_noise = unet(noisy_latents, timesteps,
    #             class_labels=timg_f_g,
    #             encoder_hidden_states=encoder_image_hidden_states).sample
    return encoder_image_hidden_states


def init_params(key):
    """Deterministic synthetic parameter init (shapes from ImageProjModel_p)."""
    k1, k2, k3, k4 = jax.random.split(key, 4)
    # Weights stored as (in, out) so the kernel does x @ W directly
    # (equivalent to PyTorch's x @ W.T with W of shape (out, in)).
    w1 = jax.random.normal(k1, (IN_DIM, HID_DIM), jnp.float32) * (1.0 / IN_DIM ** 0.5)
    b1 = jax.random.normal(k2, (1, HID_DIM), jnp.float32) * 0.01
    gamma = jnp.ones((1, HID_DIM), jnp.float32)
    beta = jnp.zeros((1, HID_DIM), jnp.float32)
    w2 = jax.random.normal(k3, (HID_DIM, OUT_DIM), jnp.float32) * (1.0 / HID_DIM ** 0.5)
    b2 = jax.random.normal(k4, (1, OUT_DIM), jnp.float32) * 0.01
    return {"w1": w1, "b1": b1, "gamma": gamma, "beta": beta, "w2": w2, "b2": b2}


def _reference_proj(x, p):
    """Pure-JAX reference mirroring the kernel's bf16-input / f32-accumulate
    numerics (so the check isolates implementation, not precision policy)."""
    hp = jax.lax.Precision.HIGHEST
    xb = x.astype(jnp.bfloat16).astype(jnp.float32)
    w1 = p["w1"].astype(jnp.bfloat16).astype(jnp.float32)
    w2 = p["w2"].astype(jnp.bfloat16).astype(jnp.float32)
    h = jnp.dot(xb, w1, precision=hp) + p["b1"]
    h = 0.5 * h * (1.0 + jax.lax.erf(h * 0.7071067811865475))
    mean = jnp.mean(h, axis=-1, keepdims=True)
    var = jnp.mean((h - mean) ** 2, axis=-1, keepdims=True)
    h = (h - mean) * jax.lax.rsqrt(var + LN_EPS) * p["gamma"] + p["beta"]
    h = h.astype(jnp.bfloat16).astype(jnp.float32)
    return jnp.dot(h, w2, precision=hp) + p["b2"]


if __name__ == "__main__":
    key = jax.random.PRNGKey(0)
    kp, ka, kb, kc = jax.random.split(key, 4)

    B, Sp, Sg = 2, 8, 4
    params = init_params(kp)

    # Inputs implied by SDModel.forward (small shapes).
    noisy_latents = jax.random.normal(ka, (B, 4, 16, 16), jnp.float32)  # NCHW latents
    timesteps = jnp.array([10, 500], dtype=jnp.int32)
    simg_f_p = jax.random.normal(kb, (B, Sp, IN_DIM), jnp.float32)
    timg_f_g = jax.random.normal(kc, (B, Sg, OUT_DIM), jnp.float32)

    fwd = jax.jit(sd_model_forward)
    out = fwd(noisy_latents, timesteps, simg_f_p, timg_f_g, params)
    out = jax.block_until_ready(out)

    # Correctness: compare against a pure-JAX reference with matching bf16
    # input casts + f32 accumulation (only accumulation order differs).
    ref_p = _reference_proj(simg_f_p, params)
    ref = jnp.concatenate([ref_p, timg_f_g], axis=1)
    assert out.shape == (B, Sp + Sg, OUT_DIM)
    err = float(jnp.max(jnp.abs(out - ref)))
    assert jnp.allclose(out, ref, atol=1e-2, rtol=1e-2), err

    print("KERNEL_OK")
</pallas_src>

<mosaic_0001>
module attributes {stable_mosaic.version = 11 : i64} {
  func.func @_image_proj_kernel(%arg0: i32, %arg1: memref<8x1536xbf16, #tpu.memory_space<vmem>>, %arg2: memref<1536x768xbf16, #tpu.memory_space<vmem>>, %arg3: memref<1x768xf32, #tpu.memory_space<vmem>>, %arg4: memref<1x768xf32, #tpu.memory_space<vmem>>, %arg5: memref<1x768xf32, #tpu.memory_space<vmem>>, %arg6: memref<768x1024xbf16, #tpu.memory_space<vmem>>, %arg7: memref<1x1024xf32, #tpu.memory_space<vmem>>, %arg8: memref<8x1024xf32, #tpu.memory_space<vmem>>) attributes {dimension_semantics = [#tpu.dimension_semantics<parallel>], iteration_bounds = array<i64: 2>, scalar_prefetch = 0 : i64, scratch_operands = 0 : i64, tpu.core_type = #tpu.core_type<tc>, window_params = [{transform_indices = @transform_0, window_bounds = array<i64: 8, 1536>}, {pipeline_mode = #tpu.pipeline_mode<synchronous>, transform_indices = @transform_1, window_bounds = array<i64: 1536, 768>}, {pipeline_mode = #tpu.pipeline_mode<synchronous>, transform_indices = @transform_2, window_bounds = array<i64: 1, 768>}, {pipeline_mode = #tpu.pipeline_mode<synchronous>, transform_indices = @transform_3, window_bounds = array<i64: 1, 768>}, {pipeline_mode = #tpu.pipeline_mode<synchronous>, transform_indices = @transform_4, window_bounds = array<i64: 1, 768>}, {pipeline_mode = #tpu.pipeline_mode<synchronous>, transform_indices = @transform_5, window_bounds = array<i64: 768, 1024>}, {pipeline_mode = #tpu.pipeline_mode<synchronous>, transform_indices = @transform_6, window_bounds = array<i64: 1, 1024>}, {transform_indices = @transform_7, window_bounds = array<i64: 8, 1024>}]} {
    %c0 = arith.constant 0 : index
    %c0_0 = arith.constant 0 : index
    %0 = vector.load %arg1[%c0, %c0_0] : memref<8x1536xbf16, #tpu.memory_space<vmem>>, vector<8x1536xbf16>
    %c0_1 = arith.constant 0 : index
    %c0_2 = arith.constant 0 : index
    %1 = vector.load %arg2[%c0_1, %c0_2] : memref<1536x768xbf16, #tpu.memory_space<vmem>>, vector<1536x768xbf16>
    %cst = arith.constant dense<0.000000e+00> : vector<8x768xf32>
    %2 = tpu.matmul %0, %1, %cst {dimension_numbers = #tpu.dot_dimension_numbers<[1], [0], [0], [1], [0, 0, 1, 1], [], []>} : vector<8x1536xbf16>, vector<1536x768xbf16>, vector<8x768xf32> -> vector<8x768xf32>
    %c0_3 = arith.constant 0 : index
    %c0_4 = arith.constant 0 : index
    %3 = vector.load %arg3[%c0_3, %c0_4] : memref<1x768xf32, #tpu.memory_space<vmem>>, vector<1x768xf32>
    %4 = vector.broadcast %3 : vector<1x768xf32> to vector<8x768xf32>
    %5 = arith.addf %2, %4 : vector<8x768xf32>
    %cst_5 = arith.constant 5.000000e-01 : f32
    %6 = vector.broadcast %cst_5 : f32 to vector<8x768xf32>
    %7 = arith.mulf %6, %5 : vector<8x768xf32>
    %cst_6 = arith.constant 0.707106769 : f32
    %8 = vector.broadcast %cst_6 : f32 to vector<8x768xf32>
    %9 = arith.mulf %5, %8 : vector<8x768xf32>
    %10 = math.erf %9 : vector<8x768xf32>
    %cst_7 = arith.constant 1.000000e+00 : f32
    %11 = vector.broadcast %cst_7 : f32 to vector<8x768xf32>
    %12 = arith.addf %11, %10 : vector<8x768xf32>
    %13 = arith.mulf %7, %12 : vector<8x768xf32>
    %cst_8 = arith.constant dense<0.000000e+00> : vector<8xf32>
    %14 = vector.multi_reduction <add>, %13, %cst_8 [1] : vector<8x768xf32> to vector<8xf32>
    %15 = vector.shape_cast %14 : vector<8xf32> to vector<8x1xf32>
    %cst_9 = arith.constant 7.680000e+02 : f32
    %16 = vector.broadcast %cst_9 : f32 to vector<8x1xf32>
    %17 = arith.divf %15, %16 : vector<8x1xf32>
    %18 = vector.broadcast %17 : vector<8x1xf32> to vector<8x768xf32>
    %19 = arith.subf %13, %18 : vector<8x768xf32>
    %20 = arith.mulf %19, %19 : vector<8x768xf32>
    %cst_10 = arith.constant dense<0.000000e+00> : vector<8xf32>
    %21 = vector.multi_reduction <add>, %20, %cst_10 [1] : vector<8x768xf32> to vector<8xf32>
    %22 = vector.shape_cast %21 : vector<8xf32> to vector<8x1xf32>
    %cst_11 = arith.constant 7.680000e+02 : f32
    %23 = vector.broadcast %cst_11 : f32 to vector<8x1xf32>
    %24 = arith.divf %22, %23 : vector<8x1xf32>
    %cst_12 = arith.constant 9.99999974E-6 : f32
    %25 = vector.broadcast %cst_12 : f32 to vector<8x1xf32>
    %26 = arith.addf %24, %25 : vector<8x1xf32>
    %27 = math.rsqrt %26 : vector<8x1xf32>
    %28 = vector.broadcast %27 : vector<8x1xf32> to vector<8x768xf32>
    %29 = arith.mulf %19, %28 : vector<8x768xf32>
    %c0_13 = arith.constant 0 : index
    %c0_14 = arith.constant 0 : index
    %30 = vector.load %arg4[%c0_13, %c0_14] : memref<1x768xf32, #tpu.memory_space<vmem>>, vector<1x768xf32>
    %31 = vector.broadcast %30 : vector<1x768xf32> to vector<8x768xf32>
    %32 = arith.mulf %29, %31 : vector<8x768xf32>
    %c0_15 = arith.constant 0 : index
    %c0_16 = arith.constant 0 : index
    %33 = vector.load %arg5[%c0_15, %c0_16] : memref<1x768xf32, #tpu.memory_space<vmem>>, vector<1x768xf32>
    %34 = vector.broadcast %33 : vector<1x768xf32> to vector<8x768xf32>
    %35 = arith.addf %32, %34 : vector<8x768xf32>
    %36 = arith.truncf %35 : vector<8x768xf32> to vector<8x768xbf16>
    %c0_17 = arith.constant 0 : index
    %c0_18 = arith.constant 0 : index
    %37 = vector.load %arg6[%c0_17, %c0_18] : memref<768x1024xbf16, #tpu.memory_space<vmem>>, vector<768x1024xbf16>
    %cst_19 = arith.constant dense<0.000000e+00> : vector<8x1024xf32>
    %38 = tpu.matmul %36, %37, %cst_19 {dimension_numbers = #tpu.dot_dimension_numbers<[1], [0], [0], [1], [0, 0, 1, 1], [], []>} : vector<8x768xbf16>, vector<768x1024xbf16>, vector<8x1024xf32> -> vector<8x1024xf32>
    %c0_20 = arith.constant 0 : index
    %c0_21 = arith.constant 0 : index
    %39 = vector.load %arg7[%c0_20, %c0_21] : memref<1x1024xf32, #tpu.memory_space<vmem>>, vector<1x1024xf32>
    %40 = vector.broadcast %39 : vector<1x1024xf32> to vector<8x1024xf32>
    %41 = arith.addf %38, %40 : vector<8x1024xf32>
    %c0_22 = arith.constant 0 : index
    %c0_23 = arith.constant 0 : index
    %42 = vector.load %arg8[%c0_22, %c0_23] : memref<8x1024xf32, #tpu.memory_space<vmem>>, vector<8x1024xf32>
    tpu.vector_store %arg8[%c0_22, %c0_23], %41 {strides = array<i32>} : memref<8x1024xf32, #tpu.memory_space<vmem>>, vector<8x1024xf32>,
    return
  }
  func.func @transform_0(%arg0: i32) -> (i32, i32) {
    %c0_i32 = arith.constant 0 : i32
    %c0_i32_0 = arith.constant 0 : i32
    return %arg0, %c0_i32 : i32, i32
  }
  func.func @transform_1(%arg0: i32) -> (i32, i32) {
    %c0_i32 = arith.constant 0 : i32
    %c0_i32_0 = arith.constant 0 : i32
    %c0_i32_1 = arith.constant 0 : i32
    return %c0_i32, %c0_i32_0 : i32, i32
  }
  func.func @transform_2(%arg0: i32) -> (i32, i32) {
    %c0_i32 = arith.constant 0 : i32
    %c0_i32_0 = arith.constant 0 : i32
    %c0_i32_1 = arith.constant 0 : i32
    return %c0_i32, %c0_i32_0 : i32, i32
  }
  func.func @transform_3(%arg0: i32) -> (i32, i32) {
    %c0_i32 = arith.constant 0 : i32
    %c0_i32_0 = arith.constant 0 : i32
    %c0_i32_1 = arith.constant 0 : i32
    return %c0_i32, %c0_i32_0 : i32, i32
  }
  func.func @transform_4(%arg0: i32) -> (i32, i32) {
    %c0_i32 = arith.constant 0 : i32
    %c0_i32_0 = arith.constant 0 : i32
    %c0_i32_1 = arith.constant 0 : i32
    return %c0_i32, %c0_i32_0 : i32, i32
  }
  func.func @transform_5(%arg0: i32) -> (i32, i32) {
    %c0_i32 = arith.constant 0 : i32
    %c0_i32_0 = arith.constant 0 : i32
    %c0_i32_1 = arith.constant 0 : i32
    return %c0_i32, %c0_i32_0 : i32, i32
  }
  func.func @transform_6(%arg0: i32) -> (i32, i32) {
    %c0_i32 = arith.constant 0 : i32
    %c0_i32_0 = arith.constant 0 : i32
    %c0_i32_1 = arith.constant 0 : i32
    return %c0_i32, %c0_i32_0 : i32, i32
  }
  func.func @transform_7(%arg0: i32) -> (i32, i32) {
    %c0_i32 = arith.constant 0 : i32
    %c0_i32_0 = arith.constant 0 : i32
    return %arg0, %c0_i32 : i32, i32
  }
}

</mosaic_0001>

<llo_original>
// kernel: sd_model_forward.1
$region0: #{sd_model_forward.1}
  #allocation0 [shape = 'u32[]', space=smem, size = 0x4, offset = 0x4, fixed_abs, tag = 'smem constant byte address 0x4 - core index']
  #allocation1 [shape = 'u32[144,128]{1,0:T(1,128)}', space=vmem, size = 0x12000, scoped, tag = 'internal scratch']
  %s0 = inlined_call_operand.vmem [shape: bf16[16,1536], index: 0, kind: input, shape index: {}]
  %s1 = inlined_call_operand.vmem [shape: bf16[1536,768], index: 1, kind: input, shape index: {}]
  %s2 = inlined_call_operand.vmem [shape: f32[1,768], index: 2, kind: input, shape index: {}]
  %s3 = inlined_call_operand.vmem [shape: f32[1,768], index: 3, kind: input, shape index: {}]
  %s4 = inlined_call_operand.vmem [shape: f32[1,768], index: 4, kind: input, shape index: {}]
  %s5 = inlined_call_operand.vmem [shape: bf16[768,1024], index: 5, kind: input, shape index: {}]
  %s6 = inlined_call_operand.vmem [shape: f32[1,1024], index: 6, kind: input, shape index: {}]
  %s7 = inlined_call_operand.vmem [shape: f32[16,1024], index: 7, kind: output, shape index: {}]
  %s8 = sld [smem:[#allocation0]]
  $region61: #{sd_model_forward.1} parent=0
    _
  %s10 = ssub.s32 1, %s8
  %s11 = scalar_select 0, %s10, %s8
  loop: start=0, step=1, limit=4
  $region2: #{sd_model_forward.1} parent=0 // loop_pre_header
    _
  $region3: #{sd_model_forward.1} parent=0 // loop_header
    %s13 = sphi 0, %s17
    %p14 = scmp.ge.s32.totalorder %s13, 4
    %s23 = sphi 0, %s25
    %s26 = sphi 0, %s23
    %s27 = sphi 0, %s26
    %s43 = sphi 0, %s27
    %s47 = sphi 0, %s47
    %s49 = sphi 0, %s47
    %s50 = sphi 0, %s49
    %s64 = sphi 0, %s50
    %s68 = sphi 0, %s68
    %s70 = sphi 0, %s68
    %s71 = sphi 0, %s70
    %s85 = sphi 0, %s71
    %s89 = sphi 0, %s89
    %s91 = sphi 0, %s89
    %s92 = sphi 0, %s91
    %s106 = sphi 0, %s92
    %s110 = sphi 0, %s110
    %s112 = sphi 0, %s110
    %s113 = sphi 0, %s112
    %s127 = sphi 0, %s113
    %s131 = sphi 0, %s131
    %s133 = sphi 0, %s131
    %s134 = sphi 0, %s133
    %s148 = sphi 0, %s134
    %s152 = sphi 0, %s152
    %s154 = sphi 0, %s152
    %s155 = sphi 0, %s154
    %s169 = sphi 0, %s155
    %s175 = sphi 0, %s177
    %s178 = sphi 0, %s175
    %s179 = sphi 0, %s178
    %s195 = sphi 0, %s179
  $region4: #{sd_model_forward.1} parent=0 // loop_header_branch
    %16 = sbr.rel (%p14) target = $region8
  $region5: #{sd_model_forward.1} parent=0 // loop_body
    %s18 = ssub.s32 %s13, 1
    %s19 = ssub.s32 %s13, 2
    %s20 = sadd.s32 %s13, 1
    %s21 = ssub.s32 %s13, %s20
    %p22 = scmp.eq.s32.totalorder %s21, 0
    %s24 = sadd.s32 %s23, 1
    %s25 = scalar_select %p22, %s23, %s24
    %p28 = pneg %p22
    %p29 = scmp.eq.s32.totalorder %s13, 1
    %p30 = por %p28, %p29
    %p31 = scmp.ne.s32.totalorder %s23, %s26
    %p32 = scmp.eq.s32.totalorder %s13, 0
    %p33 = por %p31, %p32
    %p34 = scmp.ne.s32.totalorder %s23, %s26
    %p35 = scmp.eq.s32.totalorder %s18, 1
    %p36 = por %p34, %p35
    %p37 = scmp.ne.s32.totalorder %s26, %s27
    %p38 = scmp.eq.s32.totalorder %s18, 0
    %p39 = por %p37, %p38
    %p40 = scmp.ne.s32.totalorder %s26, %s27
    %p41 = scmp.eq.s32.totalorder %s19, 1
    %p42 = por %p40, %p41
    %p44 = scmp.ne.s32.totalorder %s27, %s43
    %p45 = scmp.eq.s32.totalorder %s19, 0
    %p46 = por %p44, %p45
    %s48 = sadd.s32 %s47, 1
    %p51 = scmp.eq.s32.totalorder %s13, 1
    %p52 = scmp.ne.s32.totalorder %s47, %s49
    %p53 = scmp.eq.s32.totalorder %s13, 0
    %p54 = por %p52, %p53
    %p55 = scmp.ne.s32.totalorder %s47, %s49
    %p56 = scmp.eq.s32.totalorder %s18, 1
    %p57 = por %p55, %p56
    %p58 = scmp.ne.s32.totalorder %s49, %s50
    %p59 = scmp.eq.s32.totalorder %s18, 0
    %p60 = por %p58, %p59
    %p61 = scmp.ne.s32.totalorder %s49, %s50
    %p62 = scmp.eq.s32.totalorder %s19, 1
    %p63 = por %p61, %p62
    %p65 = scmp.ne.s32.totalorder %s50, %s64
    %p66 = scmp.eq.s32.totalorder %s19, 0
    %p67 = por %p65, %p66
    %s69 = sadd.s32 %s68, 1
    %p72 = scmp.eq.s32.totalorder %s13, 1
    %p73 = scmp.ne.s32.totalorder %s68, %s70
    %p74 = scmp.eq.s32.totalorder %s13, 0
    %p75 = por %p73, %p74
    %p76 = scmp.ne.s32.totalorder %s68, %s70
    %p77 = scmp.eq.s32.totalorder %s18, 1
    %p78 = por %p76, %p77
    %p79 = scmp.ne.s32.totalorder %s70, %s71
    %p80 = scmp.eq.s32.totalorder %s18, 0
    %p81 = por %p79, %p80
    %p82 = scmp.ne.s32.totalorder %s70, %s71
    %p83 = scmp.eq.s32.totalorder %s19, 1
    %p84 = por %p82, %p83
    %p86 = scmp.ne.s32.totalorder %s71, %s85
    %p87 = scmp.eq.s32.totalorder %s19, 0
    %p88 = por %p86, %p87
    %s90 = sadd.s32 %s89, 1
    %p93 = scmp.eq.s32.totalorder %s13, 1
    %p94 = scmp.ne.s32.totalorder %s89, %s91
    %p95 = scmp.eq.s32.totalorder %s13, 0
    %p96 = por %p94, %p95
    %p97 = scmp.ne.s32.totalorder %s89, %s91
    %p98 = scmp.eq.s32.totalorder %s18, 1
    %p99 = por %p97, %p98
    %p100 = scmp.ne.s32.totalorder %s91, %s92
    %p101 = scmp.eq.s32.totalorder %s18, 0
    %p102 = por %p100, %p101
    %p103 = scmp.ne.s32.totalorder %s91, %s92
    %p104 = scmp.eq.s32.totalorder %s19, 1
    %p105 = por %p103, %p104
    %p107 = scmp.ne.s32.totalorder %s92, %s106
    %p108 = scmp.eq.s32.totalorder %s19, 0
    %p109 = por %p107, %p108
    %s111 = sadd.s32 %s110, 1
    %p114 = scmp.eq.s32.totalorder %s13, 1
    %p115 = scmp.ne.s32.totalorder %s110, %s112
    %p116 = scmp.eq.s32.totalorder %s13, 0
    %p117 = por %p115, %p116
    %p118 = scmp.ne.s32.totalorder %s110, %s112
    %p119 = scmp.eq.s32.totalorder %s18, 1
    %p120 = por %p118, %p119
    %p121 = scmp.ne.s32.totalorder %s112, %s113
    %p122 = scmp.eq.s32.totalorder %s18, 0
    %p123 = por %p121, %p122
    %p124 = scmp.ne.s32.totalorder %s112, %s113
    %p125 = scmp.eq.s32.totalorder %s19, 1
    %p126 = por %p124, %p125
    %p128 = scmp.ne.s32.totalorder %s113, %s127
    %p129 = scmp.eq.s32.totalorder %s19, 0
    %p130 = por %p128, %p129
    %s132 = sadd.s32 %s131, 1
    %p135 = scmp.eq.s32.totalorder %s13, 1
    %p136 = scmp.ne.s32.totalorder %s131, %s133
    %p137 = scmp.eq.s32.totalorder %s13, 0
    %p138 = por %p136, %p137
    %p139 = scmp.ne.s32.totalorder %s131, %s133
    %p140 = scmp.eq.s32.totalorder %s18, 1
    %p141 = por %p139, %p140
    %p142 = scmp.ne.s32.totalorder %s133, %s134
    %p143 = scmp.eq.s32.totalorder %s18, 0
    %p144 = por %p142, %p143
    %p145 = scmp.ne.s32.totalorder %s133, %s134
    %p146 = scmp.eq.s32.totalorder %s19, 1
    %p147 = por %p145, %p146
    %p149 = scmp.ne.s32.totalorder %s134, %s148
    %p150 = scmp.eq.s32.totalorder %s19, 0
    %p151 = por %p149, %p150
    %s153 = sadd.s32 %s152, 1
    %p156 = scmp.eq.s32.totalorder %s13, 1
    %p157 = scmp.ne.s32.totalorder %s152, %s154
    %p158 = scmp.eq.s32.totalorder %s13, 0
    %p159 = por %p157, %p158
    %p160 = scmp.ne.s32.totalorder %s152, %s154
    %p161 = scmp.eq.s32.totalorder %s18, 1
    %p162 = por %p160, %p161
    %p163 = scmp.ne.s32.totalorder %s154, %s155
    %p164 = scmp.eq.s32.totalorder %s18, 0
    %p165 = por %p163, %p164
    %p166 = scmp.ne.s32.totalorder %s154, %s155
    %p167 = scmp.eq.s32.totalorder %s19, 1
    %p168 = por %p166, %p167
    %p170 = scmp.ne.s32.totalorder %s155, %s169
    %p171 = scmp.eq.s32.totalorder %s19, 0
    %p172 = por %p170, %p171
    %s173 = ssub.s32 %s13, %s20
    %p174 = scmp.eq.s32.totalorder %s173, 0
    %s176 = sadd.s32 %s175, 1
    %s177 = scalar_select %p174, %s175, %s176
    %p180 = pneg %p174
    %p181 = scmp.eq.s32.totalorder %s13, 1
    %p182 = por %p180, %p181
    %p183 = scmp.ne.s32.totalorder %s175, %s178
    %p184 = scmp.eq.s32.totalorder %s13, 0
    %p185 = por %p183, %p184
    %p186 = scmp.ne.s32.totalorder %s175, %s178
    %p187 = scmp.eq.s32.totalorder %s18, 1
    %p188 = por %p186, %p187
    %p189 = scmp.ne.s32.totalorder %s178, %s179
    %p190 = scmp.eq.s32.totalorder %s18, 0
    %p191 = por %p189, %p190
    %p192 = scmp.ne.s32.totalorder %s178, %s179
    %p193 = scmp.eq.s32.totalorder %s19, 1
    %p194 = por %p192, %p193
    %p196 = scmp.ne.s32.totalorder %s179, %s195
    %p197 = scmp.eq.s32.totalorder %s19, 0
    %p198 = por %p196, %p197
    %p199 = scmp.le.s32.totalorder 1, %s13
    %p200 = scmp.lt.s32.totalorder %s13, 3
    %p201 = pnand %p199, %p200
    %p202 = pneg %p201
    // Predicated region
    $region9: #{sd_model_forward.1} parent=5 // pred_check
      _
    $region10: #{sd_model_forward.1} parent=5 // pred_check_branch
      %204 = sbr.rel (%p201) target = $region12
    $region11: #{sd_model_forward.1} parent=5 // pred_region
      %s205 = ssub.s32 %s13, 1
      // Predicated region
      $region13: #{sd_model_forward.1} parent=11 // pred_check
        %p206 = pneg %p60
      $region14: #{sd_model_forward.1} parent=11 // pred_check_branch
        %208 = sbr.rel (%p206) target = $region16
      $region15: #{sd_model_forward.1} parent=11 // pred_region
        _
      $region16: #{sd_model_forward.1} parent=11 // pred_fallthru
        _
      // Predicated region
      $region17: #{sd_model_forward.1} parent=11 // pred_check
        %p209 = pneg %p81
      $region18: #{sd_model_forward.1} parent=11 // pred_check_branch
        %211 = sbr.rel (%p209) target = $region20
      $region19: #{sd_model_forward.1} parent=11 // pred_region
        _
      $region20: #{sd_model_forward.1} parent=11 // pred_fallthru
        _
      // Predicated region
      $region21: #{sd_model_forward.1} parent=11 // pred_check
        %p212 = pneg %p102
      $region22: #{sd_model_forward.1} parent=11 // pred_check_branch
        %214 = sbr.rel (%p212) target = $region24
      $region23: #{sd_model_forward.1} parent=11 // pred_region
        _
      $region24: #{sd_model_forward.1} parent=11 // pred_fallthru
        _
      // Predicated region
      $region25: #{sd_model_forward.1} parent=11 // pred_check
        %p215 = pneg %p123
      $region26: #{sd_model_forward.1} parent=11 // pred_check_branch
        %217 = sbr.rel (%p215) target = $region28
      $region27: #{sd_model_forward.1} parent=11 // pred_region
        _
      $region28: #{sd_model_forward.1} parent=11 // pred_fallthru
        _
      // Predicated region
      $region29: #{sd_model_forward.1} parent=11 // pred_check
        %p218 = pneg %p144
      $region30: #{sd_model_forward.1} parent=11 // pred_check_branch
        %220 = sbr.rel (%p218) target = $region32
      $region31: #{sd_model_forward.1} parent=11 // pred_region
        _
      $region32: #{sd_model_forward.1} parent=11 // pred_fallthru
        _
      // Predicated region
      $region33: #{sd_model_forward.1} parent=11 // pred_check
        %p221 = pneg %p165
      $region34: #{sd_model_forward.1} parent=11 // pred_check_branch
        %223 = sbr.rel (%p221) target = $region36
      $region35: #{sd_model_forward.1} parent=11 // pred_region
        _
      $region36: #{sd_model_forward.1} parent=11 // pred_fallthru
        _
    $region12: #{sd_model_forward.1} parent=5 // pred_fallthru
      _
    %p224 = scmp.lt.s32.totalorder %s13, 2
    // Predicated region
    $region37: #{sd_model_forward.1} parent=5 // pred_check
      %p225 = pneg %p224
    $region38: #{sd_model_forward.1} parent=5 // pred_check_branch
      %227 = sbr.rel (%p225) target = $region40
    $region39: #{sd_model_forward.1} parent=5 // pred_region
      // Predicated region
      $region41: #{sd_model_forward.1} parent=39 // pred_check
        %p228 = pneg %p33
      $region42: #{sd_model_forward.1} parent=39 // pred_check_branch
        %230 = sbr.rel (%p228) target = $region44
      $region43: #{sd_model_forward.1} parent=39 // pred_region
        %p231 = scmp.lt.s32.totalorder %s13, 1
        %s232 = scalar_select %p231, %s13, 1
        %s233 = smul.addr %s232, 12
        %s234 = smul.addr %s233, 4
        %s235 = scalar_lea.vmem %s0, %s234
      $region44: #{sd_model_forward.1} parent=39 // pred_fallthru
        _
    $region40: #{sd_model_forward.1} parent=5 // pred_fallthru
      _
    %p236 = scmp.le.s32.totalorder 1, %s13
    %p237 = scmp.lt.s32.totalorder %s13, 3
    %p238 = pnand %p236, %p237
    %p239 = pneg %p238
    // Predicated region
    $region45: #{sd_model_forward.1} parent=5 // pred_check
      _
    $region46: #{sd_model_forward.1} parent=5 // pred_check_branch
      %241 = sbr.rel (%p238) target = $region48
    $region47: #{sd_model_forward.1} parent=5 // pred_region
      %s242 = ssub.s32 %s13, 1
      %p243 = scmp.lt.s32.totalorder %s18, 1
      %s244 = scalar_select %p243, %s18, 1
      %s245 = smul.addr %s244, 12
      %s246 = smul.addr %s245, 4
      %s247 = scalar_lea.vmem %s0, %s246
      %p248 = pneg %p39
      %p249 = pneg %p36
      %p250 = pneg %p60
      %p251 = pneg %p57
      %p252 = pneg %p81
      %p253 = pneg %p78
      %p254 = pneg %p102
      %p255 = pneg %p99
      %p256 = pneg %p123
      %p257 = pneg %p120
      %p258 = pneg %p144
      %p259 = pneg %p141
      %p260 = pneg %p165
      %p261 = pneg %p162
      %p262 = pneg %p191
      %p263 = pneg %p188
      %p264 = scmp.lt.s32.totalorder %s18, 1
      %s265 = scalar_select %p264, %s18, 1
      %s266 = smul.addr %s265, 8
      %s267 = smul.addr %s266, 8
      %s268 = scalar_lea.vmem %s7, %s267
      %p269 = scmp.lt.s32.totalorder %s18, 1
      %s270 = scalar_select %p269, %s18, 1
      %s271 = smul.addr %s270, 12
      %s272 = smul.addr %s271, 4
      %s273 = scalar_lea.vmem %s0, %s272
      %p274 = scmp.lt.s32.totalorder %s18, 1
      %s275 = scalar_select %p274, %s18, 1
      %s276 = smul.addr %s275, 8
      %s277 = smul.addr %s276, 8
      %s278 = scalar_lea.vmem %s7, %s277
      %v279 = vld [vmem:[%s273] sm:$0xff]
      %v280 = vld [vmem:[%s273 + $0x8] sm:$0xff]
      %v281 = vld [vmem:[%s273 + $0x10] sm:$0xff]
      %v282 = vld [vmem:[%s273 + $0x18] sm:$0xff]
      %v283 = vld [vmem:[%s273 + $0x20] sm:$0xff]
      %v284 = vld [vmem:[%s273 + $0x28] sm:$0xff]
      %v285 = vld [vmem:[%s1] sm:$0xff]
      %v286 = vld [vmem:[%s1 + $0x8] sm:$0xff]
      %v287 = vld [vmem:[%s1 + $0x10] sm:$0xff]
      %v288 = vld [vmem:[%s1 + $0x18] sm:$0xff]
      %v289 = vld [vmem:[%s1 + $0x20] sm:$0xff]
      %v290 = vld [vmem:[%s1 + $0x28] sm:$0xff]
      %v291 = vld [vmem:[%s1 + $0x30] sm:$0xff]
      %v292 = vld [vmem:[%s1 + $0x38] sm:$0xff]
      %v293 = vld [vmem:[%s1 + $0x40] sm:$0xff]
      %v294 = vld [vmem:[%s1 + $0x48] sm:$0xff]
      %v295 = vld [vmem:[%s1 + $0x50] sm:$0xff]
      %v296 = vld [vmem:[%s1 + $0x58] sm:$0xff]
      %v297 = vld [vmem:[%s1 + $0x60] sm:$0xff]
      %v298 = vld [vmem:[%s1 + $0x68] sm:$0xff]
      %v299 = vld [vmem:[%s1 + $0x70] sm:$0xff]
      %v300 = vld [vmem:[%s1 + $0x78] sm:$0xff]
      %v301 = vld [vmem:[%s1 + $0x80] sm:$0xff]
      %v302 = vld [vmem:[%s1 + $0x88] sm:$0xff]
      %v303 = vld [vmem:[%s1 + $0x90] sm:$0xff]
      %v304 = vld [vmem:[%s1 + $0x98] sm:$0xff]
      %v305 = vld [vmem:[%s1 + $0xa0] sm:$0xff]
      %v306 = vld [vmem:[%s1 + $0xa8] sm:$0xff]
      %v307 = vld [vmem:[%s1 + $0xb0] sm:$0xff]
      %v308 = vld [vmem:[%s1 + $0xb8] sm:$0xff]
      %v309 = vld [vmem:[%s1 + $0xc0] sm:$0xff]
      %v310 = vld [vmem:[%s1 + $0xc8] sm:$0xff]
      %v311 = vld [vmem:[%s1 + $0xd0] sm:$0xff]
      %v312 = vld [vmem:[%s1 + $0xd8] sm:$0xff]
      %v313 = vld [vmem:[%s1 + $0xe0] sm:$0xff]
      %v314 = vld [vmem:[%s1 + $0xe8] sm:$0xff]
      %v315 = vld [vmem:[%s1 + $0xf0] sm:$0xff]
      %v316 = vld [vmem:[%s1 + $0xf8] sm:$0xff]
      %v317 = vld [vmem:[%s1 + $0x100] sm:$0xff]
      %v318 = vld [vmem:[%s1 + $0x108] sm:$0xff]
      %v319 = vld [vmem:[%s1 + $0x110] sm:$0xff]
      %v320 = vld [vmem:[%s1 + $0x118] sm:$0xff]
      %v321 = vld [vmem:[%s1 + $0x120] sm:$0xff]
      %v322 = vld [vmem:[%s1 + $0x128] sm:$0xff]
      %v323 = vld [vmem:[%s1 + $0x130] sm:$0xff]
      %v324 = vld [vmem:[%s1 + $0x138] sm:$0xff]
      %v325 = vld [vmem:[%s1 + $0x140] sm:$0xff]
      %v326 = vld [vmem:[%s1 + $0x148] sm:$0xff]
      %v327 = vld [vmem:[%s1 + $0x150] sm:$0xff]
      %v328 = vld [vmem:[%s1 + $0x158] sm:$0xff]
      %v329 = vld [vmem:[%s1 + $0x160] sm:$0xff]
      %v330 = vld [vmem:[%s1 + $0x168] sm:$0xff]
      %v331 = vld [vmem:[%s1 + $0x170] sm:$0xff]
      %v332 = vld [vmem:[%s1 + $0x178] sm:$0xff]
      %v333 = vld [vmem:[%s1 + $0x180] sm:$0xff]
      %v334 = vld [vmem:[%s1 + $0x188] sm:$0xff]
      %v335 = vld [vmem:[%s1 + $0x190] sm:$0xff]
      %v336 = vld [vmem:[%s1 + $0x198] sm:$0xff]
      %v337 = vld [vmem:[%s1 + $0x1a0] sm:$0xff]
      %v338 = vld [vmem:[%s1 + $0x1a8] sm:$0xff]
      %v339 = vld [vmem:[%s1 + $0x1b0] sm:$0xff]
      %v340 = vld [vmem:[%s1 + $0x1b8] sm:$0xff]
      %v341 = vld [vmem:[%s1 + $0x1c0] sm:$0xff]
      %v342 = vld [vmem:[%s1 + $0x1c8] sm:$0xff]
      %v343 = vld [vmem:[%s1 + $0x1d0] sm:$0xff]
      %v344 = vld [vmem:[%s1 + $0x1d8] sm:$0xff]
      %v345 = vld [vmem:[%s1 + $0x1e0] sm:$0xff]
      %v346 = vld [vmem:[%s1 + $0x1e8] sm:$0xff]
      %v347 = vld [vmem:[%s1 + $0x1f0] sm:$0xff]
      %v348 = vld [vmem:[%s1 + $0x1f8] sm:$0xff]
      %v349 = vld [vmem:[%s1 + $0x200] sm:$0xff]
      %v350 = vld [vmem:[%s1 + $0x208] sm:$0xff]
      %v351 = vld [vmem:[%s1 + $0x210] sm:$0xff]
      %v352 = vld [vmem:[%s1 + $0x218] sm:$0xff]
      %v353 = vld [vmem:[%s1 + $0x220] sm:$0xff]
      %v354 = vld [vmem:[%s1 + $0x228] sm:$0xff]
      %v355 = vld [vmem:[%s1 + $0x230] sm:$0xff]
      %v356 = vld [vmem:[%s1 + $0x238] sm:$0xff]
      %v357 = vld [vmem:[%s1 + $0x240] sm:$0xff]
      %v358 = vld [vmem:[%s1 + $0x248] sm:$0xff]
      %v359 = vld [vmem:[%s1 + $0x250] sm:$0xff]
      %v360 = vld [vmem:[%s1 + $0x258] sm:$0xff]
      %v361 = vld [vmem:[%s1 + $0x260] sm:$0xff]
      %v362 = vld [vmem:[%s1 + $0x268] sm:$0xff]
      %v363 = vld [vmem:[%s1 + $0x270] sm:$0xff]
      %v364 = vld [vmem:[%s1 + $0x278] sm:$0xff]
      %v365 = vld [vmem:[%s1 + $0x280] sm:$0xff]
      %v366 = vld [vmem:[%s1 + $0x288] sm:$0xff]
      %v367 = vld [vmem:[%s1 + $0x290] sm:$0xff]
      %v368 = vld [vmem:[%s1 + $0x298] sm:$0xff]
      %v369 = vld [vmem:[%s1 + $0x2a0] sm:$0xff]
      %v370 = vld [vmem:[%s1 + $0x2a8] sm:$0xff]
      %v371 = vld [vmem:[%s1 + $0x2b0] sm:$0xff]
      %v372 = vld [vmem:[%s1 + $0x2b8] sm:$0xff]
      %v373 = vld [vmem:[%s1 + $0x2c0] sm:$0xff]
      %v374 = vld [vmem:[%s1 + $0x2c8] sm:$0xff]
      %v375 = vld [vmem:[%s1 + $0x2d0] sm:$0xff]
      %v376 = vld [vmem:[%s1 + $0x2d8] sm:$0xff]
      %v377 = vld [vmem:[%s1 + $0x2e0] sm:$0xff]
      %v378 = vld [vmem:[%s1 + $0x2e8] sm:$0xff]
      %v379 = vld [vmem:[%s1 + $0x2f0] sm:$0xff]
      %v380 = vld [vmem:[%s1 + $0x2f8] sm:$0xff]
      %v381 = vld [vmem:[%s1 + $0x300] sm:$0xff]
      %v382 = vld [vmem:[%s1 + $0x308] sm:$0xff]
      %v383 = vld [vmem:[%s1 + $0x310] sm:$0xff]
      %v384 = vld [vmem:[%s1 + $0x318] sm:$0xff]
      %v385 = vld [vmem:[%s1 + $0x320] sm:$0xff]
      %v386 = vld [vmem:[%s1 + $0x328] sm:$0xff]
      %v387 = vld [vmem:[%s1 + $0x330] sm:$0xff]
      %v388 = vld [vmem:[%s1 + $0x338] sm:$0xff]
      %v389 = vld [vmem:[%s1 + $0x340] sm:$0xff]
      %v390 = vld [vmem:[%s1 + $0x348] sm:$0xff]
      %v391 = vld [vmem:[%s1 + $0x350] sm:$0xff]
      %v392 = vld [vmem:[%s1 + $0x358] sm:$0xff]
      %v393 = vld [vmem:[%s1 + $0x360] sm:$0xff]
      %v394 = vld [vmem:[%s1 + $0x368] sm:$0xff]
      %v395 = vld [vmem:[%s1 + $0x370] sm:$0xff]
      %v396 = vld [vmem:[%s1 + $0x378] sm:$0xff]
      %v397 = vld [vmem:[%s1 + $0x380] sm:$0xff]
      %v398 = vld [vmem:[%s1 + $0x388] sm:$0xff]
      %v399 = vld [vmem:[%s1 + $0x390] sm:$0xff]
      %v400 = vld [vmem:[%s1 + $0x398] sm:$0xff]
      %v401 = vld [vmem:[%s1 + $0x3a0] sm:$0xff]
      %v402 = vld [vmem:[%s1 + $0x3a8] sm:$0xff]
      %v403 = vld [vmem:[%s1 + $0x3b0] sm:$0xff]
      %v404 = vld [vmem:[%s1 + $0x3b8] sm:$0xff]
      %v405 = vld [vmem:[%s1 + $0x3c0] sm:$0xff]
      %v406 = vld [vmem:[%s1 + $0x3c8] sm:$0xff]
      %v407 = vld [vmem:[%s1 + $0x3d0] sm:$0xff]
      %v408 = vld [vmem:[%s1 + $0x3d8] sm:$0xff]
      %v409 = vld [vmem:[%s1 + $0x3e0] sm:$0xff]
      %v410 = vld [vmem:[%s1 + $0x3e8] sm:$0xff]
      %v411 = vld [vmem:[%s1 + $0x3f0] sm:$0xff]
      %v412 = vld [vmem:[%s1 + $0x3f8] sm:$0xff]
      %v413 = vld [vmem:[%s1 + $0x400] sm:$0xff]
      %v414 = vld [vmem:[%s1 + $0x408] sm:$0xff]
      %v415 = vld [vmem:[%s1 + $0x410] sm:$0xff]
      %v416 = vld [vmem:[%s1 + $0x418] sm:$0xff]
      %v417 = vld [vmem:[%s1 + $0x420] sm:$0xff]
      %v418 = vld [vmem:[%s1 + $0x428] sm:$0xff]
      %v419 = vld [vmem:[%s1 + $0x430] sm:$0xff]
      %v420 = vld [vmem:[%s1 + $0x438] sm:$0xff]
      %v421 = vld [vmem:[%s1 + $0x440] sm:$0xff]
      %v422 = vld [vmem:[%s1 + $0x448] sm:$0xff]
      %v423 = vld [vmem:[%s1 + $0x450] sm:$0xff]
      %v424 = vld [vmem:[%s1 + $0x458] sm:$0xff]
      %v425 = vld [vmem:[%s1 + $0x460] sm:$0xff]
      %v426 = vld [vmem:[%s1 + $0x468] sm:$0xff]
      %v427 = vld [vmem:[%s1 + $0x470] sm:$0xff]
      %v428 = vld [vmem:[%s1 + $0x478] sm:$0xff]
      %v429 = vld [vmem:[%s1 + $0x480] sm:$0xff]
      %v430 = vld [vmem:[%s1 + $0x488] sm:$0xff]
      %v431 = vld [vmem:[%s1 + $0x490] sm:$0xff]
      %v432 = vld [vmem:[%s1 + $0x498] sm:$0xff]
      %v433 = vld [vmem:[%s1 + $0x4a0] sm:$0xff]
      %v434 = vld [vmem:[%s1 + $0x4a8] sm:$0xff]
      %v435 = vld [vmem:[%s1 + $0x4b0] sm:$0xff]
      %v436 = vld [vmem:[%s1 + $0x4b8] sm:$0xff]
      %v437 = vld [vmem:[%s1 + $0x4c0] sm:$0xff]
      %v438 = vld [vmem:[%s1 + $0x4c8] sm:$0xff]
      %v439 = vld [vmem:[%s1 + $0x4d0] sm:$0xff]
      %v440 = vld [vmem:[%s1 + $0x4d8] sm:$0xff]
      %v441 = vld [vmem:[%s1 + $0x4e0] sm:$0xff]
      %v442 = vld [vmem:[%s1 + $0x4e8] sm:$0xff]
      %v443 = vld [vmem:[%s1 + $0x4f0] sm:$0xff]
      %v444 = vld [vmem:[%s1 + $0x4f8] sm:$0xff]
      %v445 = vld [vmem:[%s1 + $0x500] sm:$0xff]
      %v446 = vld [vmem:[%s1 + $0x508] sm:$0xff]
      %v447 = vld [vmem:[%s1 + $0x510] sm:$0xff]
      %v448 = vld [vmem:[%s1 + $0x518] sm:$0xff]
      %v449 = vld [vmem:[%s1 + $0x520] sm:$0xff]
      %v450 = vld [vmem:[%s1 + $0x528] sm:$0xff]
      %v451 = vld [vmem:[%s1 + $0x530] sm:$0xff]
      %v452 = vld [vmem:[%s1 + $0x538] sm:$0xff]
      %v453 = vld [vmem:[%s1 + $0x540] sm:$0xff]
      %v454 = vld [vmem:[%s1 + $0x548] sm:$0xff]
      %v455 = vld [vmem:[%s1 + $0x550] sm:$0xff]
      %v456 = vld [vmem:[%s1 + $0x558] sm:$0xff]
      %v457 = vld [vmem:[%s1 + $0x560] sm:$0xff]
      %v458 = vld [vmem:[%s1 + $0x568] sm:$0xff]
      %v459 = vld [vmem:[%s1 + $0x570] sm:$0xff]
      %v460 = vld [vmem:[%s1 + $0x578] sm:$0xff]
      %v461 = vld [vmem:[%s1 + $0x580] sm:$0xff]
      %v462 = vld [vmem:[%s1 + $0x588] sm:$0xff]
      %v463 = vld [vmem:[%s1 + $0x590] sm:$0xff]
      %v464 = vld [vmem:[%s1 + $0x598] sm:$0xff]
      %v465 = vld [vmem:[%s1 + $0x5a0] sm:$0xff]
      %v466 = vld [vmem:[%s1 + $0x5a8] sm:$0xff]
      %v467 = vld [vmem:[%s1 + $0x5b0] sm:$0xff]
      %v468 = vld [vmem:[%s1 + $0x5b8] sm:$0xff]
      %v469 = vld [vmem:[%s1 + $0x5c0] sm:$0xff]
      %v470 = vld [vmem:[%s1 + $0x5c8] sm:$0xff]
      %v471 = vld [vmem:[%s1 + $0x5d0] sm:$0xff]
      %v472 = vld [vmem:[%s1 + $0x5d8] sm:$0xff]
      %v473 = vld [vmem:[%s1 + $0x5e0] sm:$0xff]
      %v474 = vld [vmem:[%s1 + $0x5e8] sm:$0xff]
      %v475 = vld [vmem:[%s1 + $0x5f0] sm:$0xff]
      %v476 = vld [vmem:[%s1 + $0x5f8] sm:$0xff]
      %v477 = vld [vmem:[%s1 + $0x600] sm:$0xff]
      %v478 = vld [vmem:[%s1 + $0x608] sm:$0xff]
      %v479 = vld [vmem:[%s1 + $0x610] sm:$0xff]
      %v480 = vld [vmem:[%s1 + $0x618] sm:$0xff]
      %v481 = vld [vmem:[%s1 + $0x620] sm:$0xff]
      %v482 = vld [vmem:[%s1 + $0x628] sm:$0xff]
      %v483 = vld [vmem:[%s1 + $0x630] sm:$0xff]
      %v484 = vld [vmem:[%s1 + $0x638] sm:$0xff]
      %v485 = vld [vmem:[%s1 + $0x640] sm:$0xff]
      %v486 = vld [vmem:[%s1 + $0x648] sm:$0xff]
      %v487 = vld [vmem:[%s1 + $0x650] sm:$0xff]
      %v488 = vld [vmem:[%s1 + $0x658] sm:$0xff]
      %v489 = vld [vmem:[%s1 + $0x660] sm:$0xff]
      %v490 = vld [vmem:[%s1 + $0x668] sm:$0xff]
      %v491 = vld [vmem:[%s1 + $0x670] sm:$0xff]
      %v492 = vld [vmem:[%s1 + $0x678] sm:$0xff]
      %v493 = vld [vmem:[%s1 + $0x680] sm:$0xff]
      %v494 = vld [vmem:[%s1 + $0x688] sm:$0xff]
      %v495 = vld [vmem:[%s1 + $0x690] sm:$0xff]
      %v496 = vld [vmem:[%s1 + $0x698] sm:$0xff]
      %v497 = vld [vmem:[%s1 + $0x6a0] sm:$0xff]
      %v498 = vld [vmem:[%s1 + $0x6a8] sm:$0xff]
      %v499 = vld [vmem:[%s1 + $0x6b0] sm:$0xff]
      %v500 = vld [vmem:[%s1 + $0x6b8] sm:$0xff]
      %v501 = vld [vmem:[%s1 + $0x6c0] sm:$0xff]
      %v502 = vld [vmem:[%s1 + $0x6c8] sm:$0xff]
      %v503 = vld [vmem:[%s1 + $0x6d0] sm:$0xff]
      %v504 = vld [vmem:[%s1 + $0x6d8] sm:$0xff]
      %v505 = vld [vmem:[%s1 + $0x6e0] sm:$0xff]
      %v506 = vld [vmem:[%s1 + $0x6e8] sm:$0xff]
      %v507 = vld [vmem:[%s1 + $0x6f0] sm:$0xff]
      %v508 = vld [vmem:[%s1 + $0x6f8] sm:$0xff]
      %v509 = vld [vmem:[%s1 + $0x700] sm:$0xff]
      %v510 = vld [vmem:[%s1 + $0x708] sm:$0xff]
      %v511 = vld [vmem:[%s1 + $0x710] sm:$0xff]
      %v512 = vld [vmem:[%s1 + $0x718] sm:$0xff]
      %v513 = vld [vmem:[%s1 + $0x720] sm:$0xff]
      %v514 = vld [vmem:[%s1 + $0x728] sm:$0xff]
      %v515 = vld [vmem:[%s1 + $0x730] sm:$0xff]
      %v516 = vld [vmem:[%s1 + $0x738] sm:$0xff]
      %v517 = vld [vmem:[%s1 + $0x740] sm:$0xff]
      %v518 = vld [vmem:[%s1 + $0x748] sm:$0xff]
      %v519 = vld [vmem:[%s1 + $0x750] sm:$0xff]
      %v520 = vld [vmem:[%s1 + $0x758] sm:$0xff]
      %v521 = vld [vmem:[%s1 + $0x760] sm:$0xff]
      %v522 = vld [vmem:[%s1 + $0x768] sm:$0xff]
      %v523 = vld [vmem:[%s1 + $0x770] sm:$0xff]
      %v524 = vld [vmem:[%s1 + $0x778] sm:$0xff]
      %v525 = vld [vmem:[%s1 + $0x780] sm:$0xff]
      %v526 = vld [vmem:[%s1 + $0x788] sm:$0xff]
      %v527 = vld [vmem:[%s1 + $0x790] sm:$0xff]
      %v528 = vld [vmem:[%s1 + $0x798] sm:$0xff]
      %v529 = vld [vmem:[%s1 + $0x7a0] sm:$0xff]
      %v530 = vld [vmem:[%s1 + $0x7a8] sm:$0xff]
      %v531 = vld [vmem:[%s1 + $0x7b0] sm:$0xff]
      %v532 = vld [vmem:[%s1 + $0x7b8] sm:$0xff]
      %v533 = vld [vmem:[%s1 + $0x7c0] sm:$0xff]
      %v534 = vld [vmem:[%s1 + $0x7c8] sm:$0xff]
      %v535 = vld [vmem:[%s1 + $0x7d0] sm:$0xff]
      %v536 = vld [vmem:[%s1 + $0x7d8] sm:$0xff]
      %v537 = vld [vmem:[%s1 + $0x7e0] sm:$0xff]
      %v538 = vld [vmem:[%s1 + $0x7e8] sm:$0xff]
      %v539 = vld [vmem:[%s1 + $0x7f0] sm:$0xff]
      %v540 = vld [vmem:[%s1 + $0x7f8] sm:$0xff]
      %v541 = vld [vmem:[%s1 + $0x800] sm:$0xff]
      %v542 = vld [vmem:[%s1 + $0x808] sm:$0xff]
      %v543 = vld [vmem:[%s1 + $0x810] sm:$0xff]
      %v544 = vld [vmem:[%s1 + $0x818] sm:$0xff]
      %v545 = vld [vmem:[%s1 + $0x820] sm:$0xff]
      %v546 = vld [vmem:[%s1 + $0x828] sm:$0xff]
      %v547 = vld [vmem:[%s1 + $0x830] sm:$0xff]
      %v548 = vld [vmem:[%s1 + $0x838] sm:$0xff]
      %v549 = vld [vmem:[%s1 + $0x840] sm:$0xff]
      %v550 = vld [vmem:[%s1 + $0x848] sm:$0xff]
      %v551 = vld [vmem:[%s1 + $0x850] sm:$0xff]
      %v552 = vld [vmem:[%s1 + $0x858] sm:$0xff]
      %v553 = vld [vmem:[%s1 + $0x860] sm:$0xff]
      %v554 = vld [vmem:[%s1 + $0x868] sm:$0xff]
      %v555 = vld [vmem:[%s1 + $0x870] sm:$0xff]
      %v556 = vld [vmem:[%s1 + $0x878] sm:$0xff]
      %v557 = vld [vmem:[%s1 + $0x880] sm:$0xff]
      %v558 = vld [vmem:[%s1 + $0x888] sm:$0xff]
      %v559 = vld [vmem:[%s1 + $0x890] sm:$0xff]
      %v560 = vld [vmem:[%s1 + $0x898] sm:$0xff]
      %v561 = vld [vmem:[%s1 + $0x8a0] sm:$0xff]
      %v562 = vld [vmem:[%s1 + $0x8a8] sm:$0xff]
      %v563 = vld [vmem:[%s1 + $0x8b0] sm:$0xff]
      %v564 = vld [vmem:[%s1 + $0x8b8] sm:$0xff]
      %v565 = vld [vmem:[%s1 + $0x8c0] sm:$0xff]
      %v566 = vld [vmem:[%s1 + $0x8c8] sm:$0xff]
      %v567 = vld [vmem:[%s1 + $0x8d0] sm:$0xff]
      %v568 = vld [vmem:[%s1 + $0x8d8] sm:$0xff]
      %v569 = vld [vmem:[%s1 + $0x8e0] sm:$0xff]
      %v570 = vld [vmem:[%s1 + $0x8e8] sm:$0xff]
      %v571 = vld [vmem:[%s1 + $0x8f0] sm:$0xff]
      %v572 = vld [vmem:[%s1 + $0x8f8] sm:$0xff]
      %v573 = vld [vmem:[%s1 + $0x900] sm:$0xff]
      %v574 = vld [vmem:[%s1 + $0x908] sm:$0xff]
      %v575 = vld [vmem:[%s1 + $0x910] sm:$0xff]
      %v576 = vld [vmem:[%s1 + $0x918] sm:$0xff]
      %v577 = vld [vmem:[%s1 + $0x920] sm:$0xff]
      %v578 = vld [vmem:[%s1 + $0x928] sm:$0xff]
      %v579 = vld [vmem:[%s1 + $0x930] sm:$0xff]
      %v580 = vld [vmem:[%s1 + $0x938] sm:$0xff]
      %v581 = vld [vmem:[%s1 + $0x940] sm:$0xff]
      %v582 = vld [vmem:[%s1 + $0x948] sm:$0xff]
      %v583 = vld [vmem:[%s1 + $0x950] sm:$0xff]
      %v584 = vld [vmem:[%s1 + $0x958] sm:$0xff]
      %v585 = vld [vmem:[%s1 + $0x960] sm:$0xff]
      %v586 = vld [vmem:[%s1 + $0x968] sm:$0xff]
      %v587 = vld [vmem:[%s1 + $0x970] sm:$0xff]
      %v588 = vld [vmem:[%s1 + $0x978] sm:$0xff]
      %v589 = vld [vmem:[%s1 + $0x980] sm:$0xff]
      %v590 = vld [vmem:[%s1 + $0x988] sm:$0xff]
      %v591 = vld [vmem:[%s1 + $0x990] sm:$0xff]
      %v592 = vld [vmem:[%s1 + $0x998] sm:$0xff]
      %v593 = vld [vmem:[%s1 + $0x9a0] sm:$0xff]
      %v594 = vld [vmem:[%s1 + $0x9a8] sm:$0xff]
      %v595 = vld [vmem:[%s1 + $0x9b0] sm:$0xff]
      %v596 = vld [vmem:[%s1 + $0x9b8] sm:$0xff]
      %v597 = vld [vmem:[%s1 + $0x9c0] sm:$0xff]
      %v598 = vld [vmem:[%s1 + $0x9c8] sm:$0xff]
      %v599 = vld [vmem:[%s1 + $0x9d0] sm:$0xff]
      %v600 = vld [vmem:[%s1 + $0x9d8] sm:$0xff]
      %v601 = vld [vmem:[%s1 + $0x9e0] sm:$0xff]
      %v602 = vld [vmem:[%s1 + $0x9e8] sm:$0xff]
      %v603 = vld [vmem:[%s1 + $0x9f0] sm:$0xff]
      %v604 = vld [vmem:[%s1 + $0x9f8] sm:$0xff]
      %v605 = vld [vmem:[%s1 + $0xa00] sm:$0xff]
      %v606 = vld [vmem:[%s1 + $0xa08] sm:$0xff]
      %v607 = vld [vmem:[%s1 + $0xa10] sm:$0xff]
      %v608 = vld [vmem:[%s1 + $0xa18] sm:$0xff]
      %v609 = vld [vmem:[%s1 + $0xa20] sm:$0xff]
      %v610 = vld [vmem:[%s1 + $0xa28] sm:$0xff]
      %v611 = vld [vmem:[%s1 + $0xa30] sm:$0xff]
      %v612 = vld [vmem:[%s1 + $0xa38] sm:$0xff]
      %v613 = vld [vmem:[%s1 + $0xa40] sm:$0xff]
      %v614 = vld [vmem:[%s1 + $0xa48] sm:$0xff]
      %v615 = vld [vmem:[%s1 + $0xa50] sm:$0xff]
      %v616 = vld [vmem:[%s1 + $0xa58] sm:$0xff]
      %v617 = vld [vmem:[%s1 + $0xa60] sm:$0xff]
      %v618 = vld [vmem:[%s1 + $0xa68] sm:$0xff]
      %v619 = vld [vmem:[%s1 + $0xa70] sm:$0xff]
      %v620 = vld [vmem:[%s1 + $0xa78] sm:$0xff]
      %v621 = vld [vmem:[%s1 + $0xa80] sm:$0xff]
      %v622 = vld [vmem:[%s1 + $0xa88] sm:$0xff]
      %v623 = vld [vmem:[%s1 + $0xa90] sm:$0xff]
      %v624 = vld [vmem:[%s1 + $0xa98] sm:$0xff]
      %v625 = vld [vmem:[%s1 + $0xaa0] sm:$0xff]
      %v626 = vld [vmem:[%s1 + $0xaa8] sm:$0xff]
      %v627 = vld [vmem:[%s1 + $0xab0] sm:$0xff]
      %v628 = vld [vmem:[%s1 + $0xab8] sm:$0xff]
      %v629 = vld [vmem:[%s1 + $0xac0] sm:$0xff]
      %v630 = vld [vmem:[%s1 + $0xac8] sm:$0xff]
      %v631 = vld [vmem:[%s1 + $0xad0] sm:$0xff]
      %v632 = vld [vmem:[%s1 + $0xad8] sm:$0xff]
      %v633 = vld [vmem:[%s1 + $0xae0] sm:$0xff]
      %v634 = vld [vmem:[%s1 + $0xae8] sm:$0xff]
      %v635 = vld [vmem:[%s1 + $0xaf0] sm:$0xff]
      %v636 = vld [vmem:[%s1 + $0xaf8] sm:$0xff]
      %v637 = vld [vmem:[%s1 + $0xb00] sm:$0xff]
      %v638 = vld [vmem:[%s1 + $0xb08] sm:$0xff]
      %v639 = vld [vmem:[%s1 + $0xb10] sm:$0xff]
      %v640 = vld [vmem:[%s1 + $0xb18] sm:$0xff]
      %v641 = vld [vmem:[%s1 + $0xb20] sm:$0xff]
      %v642 = vld [vmem:[%s1 + $0xb28] sm:$0xff]
      %v643 = vld [vmem:[%s1 + $0xb30] sm:$0xff]
      %v644 = vld [vmem:[%s1 + $0xb38] sm:$0xff]
      %v645 = vld [vmem:[%s1 + $0xb40] sm:$0xff]
      %v646 = vld [vmem:[%s1 + $0xb48] sm:$0xff]
      %v647 = vld [vmem:[%s1 + $0xb50] sm:$0xff]
      %v648 = vld [vmem:[%s1 + $0xb58] sm:$0xff]
      %v649 = vld [vmem:[%s1 + $0xb60] sm:$0xff]
      %v650 = vld [vmem:[%s1 + $0xb68] sm:$0xff]
      %v651 = vld [vmem:[%s1 + $0xb70] sm:$0xff]
      %v652 = vld [vmem:[%s1 + $0xb78] sm:$0xff]
      %v653 = vld [vmem:[%s1 + $0xb80] sm:$0xff]
      %v654 = vld [vmem:[%s1 + $0xb88] sm:$0xff]
      %v655 = vld [vmem:[%s1 + $0xb90] sm:$0xff]
      %v656 = vld [vmem:[%s1 + $0xb98] sm:$0xff]
      %v657 = vld [vmem:[%s1 + $0xba0] sm:$0xff]
      %v658 = vld [vmem:[%s1 + $0xba8] sm:$0xff]
      %v659 = vld [vmem:[%s1 + $0xbb0] sm:$0xff]
      %v660 = vld [vmem:[%s1 + $0xbb8] sm:$0xff]
      %v661 = vld [vmem:[%s1 + $0xbc0] sm:$0xff]
      %v662 = vld [vmem:[%s1 + $0xbc8] sm:$0xff]
      %v663 = vld [vmem:[%s1 + $0xbd0] sm:$0xff]
      %v664 = vld [vmem:[%s1 + $0xbd8] sm:$0xff]
      %v665 = vld [vmem:[%s1 + $0xbe0] sm:$0xff]
      %v666 = vld [vmem:[%s1 + $0xbe8] sm:$0xff]
      %v667 = vld [vmem:[%s1 + $0xbf0] sm:$0xff]
      %v668 = vld [vmem:[%s1 + $0xbf8] sm:$0xff]
      %v669 = vld [vmem:[%s1 + $0xc00] sm:$0xff]
      %v670 = vld [vmem:[%s1 + $0xc08] sm:$0xff]
      %v671 = vld [vmem:[%s1 + $0xc10] sm:$0xff]
      %v672 = vld [vmem:[%s1 + $0xc18] sm:$0xff]
      %v673 = vld [vmem:[%s1 + $0xc20] sm:$0xff]
      %v674 = vld [vmem:[%s1 + $0xc28] sm:$0xff]
      %v675 = vld [vmem:[%s1 + $0xc30] sm:$0xff]
      %v676 = vld [vmem:[%s1 + $0xc38] sm:$0xff]
      %v677 = vld [vmem:[%s1 + $0xc40] sm:$0xff]
      %v678 = vld [vmem:[%s1 + $0xc48] sm:$0xff]
      %v679 = vld [vmem:[%s1 + $0xc50] sm:$0xff]
      %v680 = vld [vmem:[%s1 + $0xc58] sm:$0xff]
      %v681 = vld [vmem:[%s1 + $0xc60] sm:$0xff]
      %v682 = vld [vmem:[%s1 + $0xc68] sm:$0xff]
      %v683 = vld [vmem:[%s1 + $0xc70] sm:$0xff]
      %v684 = vld [vmem:[%s1 + $0xc78] sm:$0xff]
      %v685 = vld [vmem:[%s1 + $0xc80] sm:$0xff]
      %v686 = vld [vmem:[%s1 + $0xc88] sm:$0xff]
      %v687 = vld [vmem:[%s1 + $0xc90] sm:$0xff]
      %v688 = vld [vmem:[%s1 + $0xc98] sm:$0xff]
      %v689 = vld [vmem:[%s1 + $0xca0] sm:$0xff]
      %v690 = vld [vmem:[%s1 + $0xca8] sm:$0xff]
      %v691 = vld [vmem:[%s1 + $0xcb0] sm:$0xff]
      %v692 = vld [vmem:[%s1 + $0xcb8] sm:$0xff]
      %v693 = vld [vmem:[%s1 + $0xcc0] sm:$0xff]
      %v694 = vld [vmem:[%s1 + $0xcc8] sm:$0xff]
      %v695 = vld [vmem:[%s1 + $0xcd0] sm:$0xff]
      %v696 = vld [vmem:[%s1 + $0xcd8] sm:$0xff]
      %v697 = vld [vmem:[%s1 + $0xce0] sm:$0xff]
      %v698 = vld [vmem:[%s1 + $0xce8] sm:$0xff]
      %v699 = vld [vmem:[%s1 + $0xcf0] sm:$0xff]
      %v700 = vld [vmem:[%s1 + $0xcf8] sm:$0xff]
      %v701 = vld [vmem:[%s1 + $0xd00] sm:$0xff]
      %v702 = vld [vmem:[%s1 + $0xd08] sm:$0xff]
      %v703 = vld [vmem:[%s1 + $0xd10] sm:$0xff]
      %v704 = vld [vmem:[%s1 + $0xd18] sm:$0xff]
      %v705 = vld [vmem:[%s1 + $0xd20] sm:$0xff]
      %v706 = vld [vmem:[%s1 + $0xd28] sm:$0xff]
      %v707 = vld [vmem:[%s1 + $0xd30] sm:$0xff]
      %v708 = vld [vmem:[%s1 + $0xd38] sm:$0xff]
      %v709 = vld [vmem:[%s1 + $0xd40] sm:$0xff]
      %v710 = vld [vmem:[%s1 + $0xd48] sm:$0xff]
      %v711 = vld [vmem:[%s1 + $0xd50] sm:$0xff]
      %v712 = vld [vmem:[%s1 + $0xd58] sm:$0xff]
      %v713 = vld [vmem:[%s1 + $0xd60] sm:$0xff]
      %v714 = vld [vmem:[%s1 + $0xd68] sm:$0xff]
      %v715 = vld [vmem:[%s1 + $0xd70] sm:$0xff]
      %v716 = vld [vmem:[%s1 + $0xd78] sm:$0xff]
      %v717 = vld [vmem:[%s1 + $0xd80] sm:$0xff]
      %v718 = vld [vmem:[%s1 + $0xd88] sm:$0xff]
      %v719 = vld [vmem:[%s1 + $0xd90] sm:$0xff]
      %v720 = vld [vmem:[%s1 + $0xd98] sm:$0xff]
      %v721 = vld [vmem:[%s1 + $0xda0] sm:$0xff]
      %v722 = vld [vmem:[%s1 + $0xda8] sm:$0xff]
      %v723 = vld [vmem:[%s1 + $0xdb0] sm:$0xff]
      %v724 = vld [vmem:[%s1 + $0xdb8] sm:$0xff]
      %v725 = vld [vmem:[%s1 + $0xdc0] sm:$0xff]
      %v726 = vld [vmem:[%s1 + $0xdc8] sm:$0xff]
      %v727 = vld [vmem:[%s1 + $0xdd0] sm:$0xff]
      %v728 = vld [vmem:[%s1 + $0xdd8] sm:$0xff]
      %v729 = vld [vmem:[%s1 + $0xde0] sm:$0xff]
      %v730 = vld [vmem:[%s1 + $0xde8] sm:$0xff]
      %v731 = vld [vmem:[%s1 + $0xdf0] sm:$0xff]
      %v732 = vld [vmem:[%s1 + $0xdf8] sm:$0xff]
      %v733 = vld [vmem:[%s1 + $0xe00] sm:$0xff]
      %v734 = vld [vmem:[%s1 + $0xe08] sm:$0xff]
      %v735 = vld [vmem:[%s1 + $0xe10] sm:$0xff]
      %v736 = vld [vmem:[%s1 + $0xe18] sm:$0xff]
      %v737 = vld [vmem:[%s1 + $0xe20] sm:$0xff]
      %v738 = vld [vmem:[%s1 + $0xe28] sm:$0xff]
      %v739 = vld [vmem:[%s1 + $0xe30] sm:$0xff]
      %v740 = vld [vmem:[%s1 + $0xe38] sm:$0xff]
      %v741 = vld [vmem:[%s1 + $0xe40] sm:$0xff]
      %v742 = vld [vmem:[%s1 + $0xe48] sm:$0xff]
      %v743 = vld [vmem:[%s1 + $0xe50] sm:$0xff]
      %v744 = vld [vmem:[%s1 + $0xe58] sm:$0xff]
      %v745 = vld [vmem:[%s1 + $0xe60] sm:$0xff]
      %v746 = vld [vmem:[%s1 + $0xe68] sm:$0xff]
      %v747 = vld [vmem:[%s1 + $0xe70] sm:$0xff]
      %v748 = vld [vmem:[%s1 + $0xe78] sm:$0xff]
      %v749 = vld [vmem:[%s1 + $0xe80] sm:$0xff]
      %v750 = vld [vmem:[%s1 + $0xe88] sm:$0xff]
      %v751 = vld [vmem:[%s1 + $0xe90] sm:$0xff]
      %v752 = vld [vmem:[%s1 + $0xe98] sm:$0xff]
      %v753 = vld [vmem:[%s1 + $0xea0] sm:$0xff]
      %v754 = vld [vmem:[%s1 + $0xea8] sm:$0xff]
      %v755 = vld [vmem:[%s1 + $0xeb0] sm:$0xff]
      %v756 = vld [vmem:[%s1 + $0xeb8] sm:$0xff]
      %v757 = vld [vmem:[%s1 + $0xec0] sm:$0xff]
      %v758 = vld [vmem:[%s1 + $0xec8] sm:$0xff]
      %v759 = vld [vmem:[%s1 + $0xed0] sm:$0xff]
      %v760 = vld [vmem:[%s1 + $0xed8] sm:$0xff]
      %v761 = vld [vmem:[%s1 + $0xee0] sm:$0xff]
      %v762 = vld [vmem:[%s1 + $0xee8] sm:$0xff]
      %v763 = vld [vmem:[%s1 + $0xef0] sm:$0xff]
      %v764 = vld [vmem:[%s1 + $0xef8] sm:$0xff]
      %v765 = vld [vmem:[%s1 + $0xf00] sm:$0xff]
      %v766 = vld [vmem:[%s1 + $0xf08] sm:$0xff]
      %v767 = vld [vmem:[%s1 + $0xf10] sm:$0xff]
      %v768 = vld [vmem:[%s1 + $0xf18] sm:$0xff]
      %v769 = vld [vmem:[%s1 + $0xf20] sm:$0xff]
      %v770 = vld [vmem:[%s1 + $0xf28] sm:$0xff]
      %v771 = vld [vmem:[%s1 + $0xf30] sm:$0xff]
      %v772 = vld [vmem:[%s1 + $0xf38] sm:$0xff]
      %v773 = vld [vmem:[%s1 + $0xf40] sm:$0xff]
      %v774 = vld [vmem:[%s1 + $0xf48] sm:$0xff]
      %v775 = vld [vmem:[%s1 + $0xf50] sm:$0xff]
      %v776 = vld [vmem:[%s1 + $0xf58] sm:$0xff]
      %v777 = vld [vmem:[%s1 + $0xf60] sm:$0xff]
      %v778 = vld [vmem:[%s1 + $0xf68] sm:$0xff]
      %v779 = vld [vmem:[%s1 + $0xf70] sm:$0xff]
      %v780 = vld [vmem:[%s1 + $0xf78] sm:$0xff]
      %v781 = vld [vmem:[%s1 + $0xf80] sm:$0xff]
      %v782 = vld [vmem:[%s1 + $0xf88] sm:$0xff]
      %v783 = vld [vmem:[%s1 + $0xf90] sm:$0xff]
      %v784 = vld [vmem:[%s1 + $0xf98] sm:$0xff]
      %v785 = vld [vmem:[%s1 + $0xfa0] sm:$0xff]
      %v786 = vld [vmem:[%s1 + $0xfa8] sm:$0xff]
      %v787 = vld [vmem:[%s1 + $0xfb0] sm:$0xff]
      %v788 = vld [vmem:[%s1 + $0xfb8] sm:$0xff]
      %v789 = vld [vmem:[%s1 + $0xfc0] sm:$0xff]
      %v790 = vld [vmem:[%s1 + $0xfc8] sm:$0xff]
      %v791 = vld [vmem:[%s1 + $0xfd0] sm:$0xff]
      %v792 = vld [vmem:[%s1 + $0xfd8] sm:$0xff]
      %v793 = vld [vmem:[%s1 + $0xfe0] sm:$0xff]
      %v794 = vld [vmem:[%s1 + $0xfe8] sm:$0xff]
      %v795 = vld [vmem:[%s1 + $0xff0] sm:$0xff]
      %v796 = vld [vmem:[%s1 + $0xff8] sm:$0xff]
      %v797 = vld [vmem:[%s1 + $0x1000] sm:$0xff]
      %v798 = vld [vmem:[%s1 + $0x1008] sm:$0xff]
      %v799 = vld [vmem:[%s1 + $0x1010] sm:$0xff]
      %v800 = vld [vmem:[%s1 + $0x1018] sm:$0xff]
      %v801 = vld [vmem:[%s1 + $0x1020] sm:$0xff]
      %v802 = vld [vmem:[%s1 + $0x1028] sm:$0xff]
      %v803 = vld [vmem:[%s1 + $0x1030] sm:$0xff]
      %v804 = vld [vmem:[%s1 + $0x1038] sm:$0xff]
      %v805 = vld [vmem:[%s1 + $0x1040] sm:$0xff]
      %v806 = vld [vmem:[%s1 + $0x1048] sm:$0xff]
      %v807 = vld [vmem:[%s1 + $0x1050] sm:$0xff]
      %v808 = vld [vmem:[%s1 + $0x1058] sm:$0xff]
      %v809 = vld [vmem:[%s1 + $0x1060] sm:$0xff]
      %v810 = vld [vmem:[%s1 + $0x1068] sm:$0xff]
      %v811 = vld [vmem:[%s1 + $0x1070] sm:$0xff]
      %v812 = vld [vmem:[%s1 + $0x1078] sm:$0xff]
      %v813 = vld [vmem:[%s1 + $0x1080] sm:$0xff]
      %v814 = vld [vmem:[%s1 + $0x1088] sm:$0xff]
      %v815 = vld [vmem:[%s1 + $0x1090] sm:$0xff]
      %v816 = vld [vmem:[%s1 + $0x1098] sm:$0xff]
      %v817 = vld [vmem:[%s1 + $0x10a0] sm:$0xff]
      %v818 = vld [vmem:[%s1 + $0x10a8] sm:$0xff]
      %v819 = vld [vmem:[%s1 + $0x10b0] sm:$0xff]
      %v820 = vld [vmem:[%s1 + $0x10b8] sm:$0xff]
      %v821 = vld [vmem:[%s1 + $0x10c0] sm:$0xff]
      %v822 = vld [vmem:[%s1 + $0x10c8] sm:$0xff]
      %v823 = vld [vmem:[%s1 + $0x10d0] sm:$0xff]
      %v824 = vld [vmem:[%s1 + $0x10d8] sm:$0xff]
      %v825 = vld [vmem:[%s1 + $0x10e0] sm:$0xff]
      %v826 = vld [vmem:[%s1 + $0x10e8] sm:$0xff]
      %v827 = vld [vmem:[%s1 + $0x10f0] sm:$0xff]
      %v828 = vld [vmem:[%s1 + $0x10f8] sm:$0xff]
      %v829 = vld [vmem:[%s1 + $0x1100] sm:$0xff]
      %v830 = vld [vmem:[%s1 + $0x1108] sm:$0xff]
      %v831 = vld [vmem:[%s1 + $0x1110] sm:$0xff]
      %v832 = vld [vmem:[%s1 + $0x1118] sm:$0xff]
      %v833 = vld [vmem:[%s1 + $0x1120] sm:$0xff]
      %v834 = vld [vmem:[%s1 + $0x1128] sm:$0xff]
      %v835 = vld [vmem:[%s1 + $0x1130] sm:$0xff]
      %v836 = vld [vmem:[%s1 + $0x1138] sm:$0xff]
      %v837 = vld [vmem:[%s1 + $0x1140] sm:$0xff]
      %v838 = vld [vmem:[%s1 + $0x1148] sm:$0xff]
      %v839 = vld [vmem:[%s1 + $0x1150] sm:$0xff]
      %v840 = vld [vmem:[%s1 + $0x1158] sm:$0xff]
      %v841 = vld [vmem:[%s1 + $0x1160] sm:$0xff]
      %v842 = vld [vmem:[%s1 + $0x1168] sm:$0xff]
      %v843 = vld [vmem:[%s1 + $0x1170] sm:$0xff]
      %v844 = vld [vmem:[%s1 + $0x1178] sm:$0xff]
      %v845 = vld [vmem:[%s1 + $0x1180] sm:$0xff]
      %v846 = vld [vmem:[%s1 + $0x1188] sm:$0xff]
      %v847 = vld [vmem:[%s1 + $0x1190] sm:$0xff]
      %v848 = vld [vmem:[%s1 + $0x1198] sm:$0xff]
      %v849 = vld [vmem:[%s1 + $0x11a0] sm:$0xff]
      %v850 = vld [vmem:[%s1 + $0x11a8] sm:$0xff]
      %v851 = vld [vmem:[%s1 + $0x11b0] sm:$0xff]
      %v852 = vld [vmem:[%s1 + $0x11b8] sm:$0xff]
      %v853 = vld [vmem:[%s1 + $0x11c0] sm:$0xff]
      %v854 = vld [vmem:[%s1 + $0x11c8] sm:$0xff]
      %v855 = vld [vmem:[%s1 + $0x11d0] sm:$0xff]
      %v856 = vld [vmem:[%s1 + $0x11d8] sm:$0xff]
      %v857 = vld [vmem:[%s1 + $0x11e0] sm:$0xff]
      %v858 = vld [vmem:[%s1 + $0x11e8] sm:$0xff]
      %v859 = vld [vmem:[%s1 + $0x11f0] sm:$0xff]
      %v860 = vld [vmem:[%s1 + $0x11f8] sm:$0xff]
      %v861 = vld [vmem:[%s2] sm:$0x3f]
      %v863 = vlaneseq
      %v864 = vshrl.u32 %v863, 7
      %v865 = vsub.s32 0, %v864
      %v866 = vrot.slane %v861, %v865
      %v867 = vlaneseq
      %v868 = vshrl.u32 %v867, 7
      %v869 = vsub.s32 1, %v868
      %v870 = vrot.slane %v861, %v869
      %v871 = vlaneseq
      %v872 = vshrl.u32 %v871, 7
      %v873 = vsub.s32 2, %v872
      %v874 = vrot.slane %v861, %v873
      %v875 = vlaneseq
      %v876 = vshrl.u32 %v875, 7
      %v877 = vsub.s32 3, %v876
      %v878 = vrot.slane %v861, %v877
      %v879 = vlaneseq
      %v880 = vshrl.u32 %v879, 7
      %v881 = vsub.s32 4, %v880
      %v882 = vrot.slane %v861, %v881
      %v883 = vlaneseq
      %v884 = vshrl.u32 %v883, 7
      %v885 = vsub.s32 5, %v884
      %v886 = vrot.slane %v861, %v885
      %v899 = vunpack.c.l.b16 %v279
      %v900 = vunpack.c.h.b16 %v279
      %v901 = vunpack.c.l.b16 %v280
      %v902 = vunpack.c.h.b16 %v280
      %v903 = vunpack.c.l.b16 %v281
      %v904 = vunpack.c.h.b16 %v281
      %v905 = vunpack.c.l.b16 %v282
      %v906 = vunpack.c.h.b16 %v282
      %v907 = vunpack.c.l.b16 %v283
      %v908 = vunpack.c.h.b16 %v283
      %v909 = vunpack.c.l.b16 %v284
      %v910 = vunpack.c.h.b16 %v284
      %v911 = vpack.c.b16 %v899, %v899
      %v912 = vpack.c.b16 %v900, %v900
      %v913 = vpack.c.b16 %v901, %v901
      %v914 = vpack.c.b16 %v902, %v902
      %v915 = vpack.c.b16 %v903, %v903
      %v916 = vpack.c.b16 %v904, %v904
      %v917 = vpack.c.b16 %v905, %v905
      %v918 = vpack.c.b16 %v906, %v906
      %v919 = vpack.c.b16 %v907, %v907
      %v920 = vpack.c.b16 %v908, %v908
      %v921 = vpack.c.b16 %v909, %v909
      %v922 = vpack.c.b16 %v910, %v910
      %v1511 = vunpack.c.l.b16 %v285
      %v1512 = vunpack.c.h.b16 %v285
      %v1513 = vunpack.c.l.b16 %v286
      %v1514 = vunpack.c.h.b16 %v286
      %v1515 = vunpack.c.l.b16 %v287
      %v1516 = vunpack.c.h.b16 %v287
      %v1517 = vunpack.c.l.b16 %v288
      %v1518 = vunpack.c.h.b16 %v288
      %v1519 = vunpack.c.l.b16 %v289
      %v1520 = vunpack.c.h.b16 %v289
      %v1521 = vunpack.c.l.b16 %v290
      %v1522 = vunpack.c.h.b16 %v290
      %v1523 = vunpack.c.l.b16 %v291
      %v1524 = vunpack.c.h.b16 %v291
      %v1525 = vunpack.c.l.b16 %v292
      %v1526 = vunpack.c.h.b16 %v292
      %v1527 = vunpack.c.l.b16 %v293
      %v1528 = vunpack.c.h.b16 %v293
      %v1529 = vunpack.c.l.b16 %v294
      %v1530 = vunpack.c.h.b16 %v294
      %v1531 = vunpack.c.l.b16 %v295
      %v1532 = vunpack.c.h.b16 %v295
      %v1533 = vunpack.c.l.b16 %v296
      %v1534 = vunpack.c.h.b16 %v296
      %v1535 = vunpack.c.l.b16 %v297
      %v1536 = vunpack.c.h.b16 %v297
      %v1537 = vunpack.c.l.b16 %v298
      %v1538 = vunpack.c.h.b16 %v298
      %v1539 = vunpack.c.l.b16 %v299
      %v1540 = vunpack.c.h.b16 %v299
      %v1541 = vunpack.c.l.b16 %v300
      %v1542 = vunpack.c.h.b16 %v300
      %v1543 = vunpack.c.l.b16 %v301
      %v1544 = vunpack.c.h.b16 %v301
      %v1545 = vunpack.c.l.b16 %v302
      %v1546 = vunpack.c.h.b16 %v302
      %v1547 = vunpack.c.l.b16 %v303
      %v1548 = vunpack.c.h.b16 %v303
      %v1549 = vunpack.c.l.b16 %v304
      %v1550 = vunpack.c.h.b16 %v304
      %v1551 = vunpack.c.l.b16 %v305
      %v1552 = vunpack.c.h.b16 %v305
      %v1553 = vunpack.c.l.b16 %v306
      %v1554 = vunpack.c.h.b16 %v306
      %v1555 = vunpack.c.l.b16 %v307
      %v1556 = vunpack.c.h.b16 %v307
      %v1557 = vunpack.c.l.b16 %v308
      %v1558 = vunpack.c.h.b16 %v308
      %v1559 = vunpack.c.l.b16 %v309
      %v1560 = vunpack.c.h.b16 %v309
      %v1561 = vunpack.c.l.b16 %v310
      %v1562 = vunpack.c.h.b16 %v310
      %v1563 = vunpack.c.l.b16 %v311
      %v1564 = vunpack.c.h.b16 %v311
      %v1565 = vunpack.c.l.b16 %v312
      %v1566 = vunpack.c.h.b16 %v312
      %v1567 = vunpack.c.l.b16 %v313
      %v1568 = vunpack.c.h.b16 %v313
      %v1569 = vunpack.c.l.b16 %v314
      %v1570 = vunpack.c.h.b16 %v314
      %v1571 = vunpack.c.l.b16 %v315
      %v1572 = vunpack.c.h.b16 %v315
      %v1573 = vunpack.c.l.b16 %v316
      %v1574 = vunpack.c.h.b16 %v316
      %v1575 = vunpack.c.l.b16 %v317
      %v1576 = vunpack.c.h.b16 %v317
      %v1577 = vunpack.c.l.b16 %v318
      %v1578 = vunpack.c.h.b16 %v318
      %v1579 = vunpack.c.l.b16 %v319
      %v1580 = vunpack.c.h.b16 %v319
      %v1581 = vunpack.c.l.b16 %v320
      %v1582 = vunpack.c.h.b16 %v320
      %v1583 = vunpack.c.l.b16 %v321
      %v1584 = vunpack.c.h.b16 %v321
      %v1585 = vunpack.c.l.b16 %v322
      %v1586 = vunpack.c.h.b16 %v322
      %v1587 = vunpack.c.l.b16 %v323
      %v1588 = vunpack.c.h.b16 %v323
      %v1589 = vunpack.c.l.b16 %v324
      %v1590 = vunpack.c.h.b16 %v324
      %v1591 = vunpack.c.l.b16 %v325
      %v1592 = vunpack.c.h.b16 %v325
      %v1593 = vunpack.c.l.b16 %v326
      %v1594 = vunpack.c.h.b16 %v326
      %v1595 = vunpack.c.l.b16 %v327
      %v1596 = vunpack.c.h.b16 %v327
      %v1597 = vunpack.c.l.b16 %v328
      %v1598 = vunpack.c.h.b16 %v328
      %v1599 = vunpack.c.l.b16 %v329
      %v1600 = vunpack.c.h.b16 %v329
      %v1601 = vunpack.c.l.b16 %v330
      %v1602 = vunpack.c.h.b16 %v330
      %v1603 = vunpack.c.l.b16 %v331
      %v1604 = vunpack.c.h.b16 %v331
      %v1605 = vunpack.c.l.b16 %v332
      %v1606 = vunpack.c.h.b16 %v332
      %v1607 = vunpack.c.l.b16 %v333
      %v1608 = vunpack.c.h.b16 %v333
      %v1609 = vunpack.c.l.b16 %v334
      %v1610 = vunpack.c.h.b16 %v334
      %v1611 = vunpack.c.l.b16 %v335
      %v1612 = vunpack.c.h.b16 %v335
      %v1613 = vunpack.c.l.b16 %v336
      %v1614 = vunpack.c.h.b16 %v336
      %v1615 = vunpack.c.l.b16 %v337
      %v1616 = vunpack.c.h.b16 %v337
      %v1617 = vunpack.c.l.b16 %v338
      %v1618 = vunpack.c.h.b16 %v338
      %v1619 = vunpack.c.l.b16 %v339
      %v1620 = vunpack.c.h.b16 %v339
      %v1621 = vunpack.c.l.b16 %v340
      %v1622 = vunpack.c.h.b16 %v340
      %v1623 = vunpack.c.l.b16 %v341
      %v1624 = vunpack.c.h.b16 %v341
      %v1625 = vunpack.c.l.b16 %v342
      %v1626 = vunpack.c.h.b16 %v342
      %v1627 = vunpack.c.l.b16 %v343
      %v1628 = vunpack.c.h.b16 %v343
      %v1629 = vunpack.c.l.b16 %v344
      %v1630 = vunpack.c.h.b16 %v344
      %v1631 = vunpack.c.l.b16 %v345
      %v1632 = vunpack.c.h.b16 %v345
      %v1633 = vunpack.c.l.b16 %v346
      %v1634 = vunpack.c.h.b16 %v346
      %v1635 = vunpack.c.l.b16 %v347
      %v1636 = vunpack.c.h.b16 %v347
      %v1637 = vunpack.c.l.b16 %v348
      %v1638 = vunpack.c.h.b16 %v348
      %v1639 = vunpack.c.l.b16 %v349
      %v1640 = vunpack.c.h.b16 %v349
      %v1641 = vunpack.c.l.b16 %v350
      %v1642 = vunpack.c.h.b16 %v350
      %v1643 = vunpack.c.l.b16 %v351
      %v1644 = vunpack.c.h.b16 %v351
      %v1645 = vunpack.c.l.b16 %v352
      %v1646 = vunpack.c.h.b16 %v352
      %v1647 = vunpack.c.l.b16 %v353
      %v1648 = vunpack.c.h.b16 %v353
      %v1649 = vunpack.c.l.b16 %v354
      %v1650 = vunpack.c.h.b16 %v354
      %v1651 = vunpack.c.l.b16 %v355
      %v1652 = vunpack.c.h.b16 %v355
      %v1653 = vunpack.c.l.b16 %v356
      %v1654 = vunpack.c.h.b16 %v356
      %v1655 = vunpack.c.l.b16 %v357
      %v1656 = vunpack.c.h.b16 %v357
      %v1657 = vunpack.c.l.b16 %v358
      %v1658 = vunpack.c.h.b16 %v358
      %v1659 = vunpack.c.l.b16 %v359
      %v1660 = vunpack.c.h.b16 %v359
      %v1661 = vunpack.c.l.b16 %v360
      %v1662 = vunpack.c.h.b16 %v360
      %v1663 = vunpack.c.l.b16 %v361
      %v1664 = vunpack.c.h.b16 %v361
      %v1665 = vunpack.c.l.b16 %v362
      %v1666 = vunpack.c.h.b16 %v362
      %v1667 = vunpack.c.l.b16 %v363
      %v1668 = vunpack.c.h.b16 %v363
      %v1669 = vunpack.c.l.b16 %v364
      %v1670 = vunpack.c.h.b16 %v364
      %v1671 = vunpack.c.l.b16 %v365
      %v1672 = vunpack.c.h.b16 %v365
      %v1673 = vunpack.c.l.b16 %v366
      %v1674 = vunpack.c.h.b16 %v366
      %v1675 = vunpack.c.l.b16 %v367
      %v1676 = vunpack.c.h.b16 %v367
      %v1677 = vunpack.c.l.b16 %v368
      %v1678 = vunpack.c.h.b16 %v368
      %v1679 = vunpack.c.l.b16 %v369
      %v1680 = vunpack.c.h.b16 %v369
      %v1681 = vunpack.c.l.b16 %v370
      %v1682 = vunpack.c.h.b16 %v370
      %v1683 = vunpack.c.l.b16 %v371
      %v1684 = vunpack.c.h.b16 %v371
      %v1685 = vunpack.c.l.b16 %v372
      %v1686 = vunpack.c.h.b16 %v372
      %v1687 = vunpack.c.l.b16 %v373
      %v1688 = vunpack.c.h.b16 %v373
      %v1689 = vunpack.c.l.b16 %v374
      %v1690 = vunpack.c.h.b16 %v374
      %v1691 = vunpack.c.l.b16 %v375
      %v1692 = vunpack.c.h.b16 %v375
      %v1693 = vunpack.c.l.b16 %v376
      %v1694 = vunpack.c.h.b16 %v376
      %v1695 = vunpack.c.l.b16 %v377
      %v1696 = vunpack.c.h.b16 %v377
      %v1697 = vunpack.c.l.b16 %v378
      %v1698 = vunpack.c.h.b16 %v378
      %v1699 = vunpack.c.l.b16 %v379
      %v1700 = vunpack.c.h.b16 %v379
      %v1701 = vunpack.c.l.b16 %v380
      %v1702 = vunpack.c.h.b16 %v380
      %v1703 = vunpack.c.l.b16 %v381
      %v1704 = vunpack.c.h.b16 %v381
      %v1705 = vunpack.c.l.b16 %v382
      %v1706 = vunpack.c.h.b16 %v382
      %v1707 = vunpack.c.l.b16 %v383
      %v1708 = vunpack.c.h.b16 %v383
      %v1709 = vunpack.c.l.b16 %v384
      %v1710 = vunpack.c.h.b16 %v384
      %v1711 = vunpack.c.l.b16 %v385
      %v1712 = vunpack.c.h.b16 %v385
      %v1713 = vunpack.c.l.b16 %v386
      %v1714 = vunpack.c.h.b16 %v386
      %v1715 = vunpack.c.l.b16 %v387
      %v1716 = vunpack.c.h.b16 %v387
      %v1717 = vunpack.c.l.b16 %v388
      %v1718 = vunpack.c.h.b16 %v388
      %v1719 = vunpack.c.l.b16 %v389
      %v1720 = vunpack.c.h.b16 %v389
      %v1721 = vunpack.c.l.b16 %v390
      %v1722 = vunpack.c.h.b16 %v390
      %v1723 = vunpack.c.l.b16 %v391
      %v1724 = vunpack.c.h.b16 %v391
      %v1725 = vunpack.c.l.b16 %v392
      %v1726 = vunpack.c.h.b16 %v392
      %v1727 = vunpack.c.l.b16 %v393
      %v1728 = vunpack.c.h.b16 %v393
      %v1729 = vunpack.c.l.b16 %v394
      %v1730 = vunpack.c.h.b16 %v394
      %v1731 = vunpack.c.l.b16 %v395
      %v1732 = vunpack.c.h.b16 %v395
      %v1733 = vunpack.c.l.b16 %v396
      %v1734 = vunpack.c.h.b16 %v396
      %v1735 = vunpack.c.l.b16 %v397
      %v1736 = vunpack.c.h.b16 %v397
      %v1737 = vunpack.c.l.b16 %v398
      %v1738 = vunpack.c.h.b16 %v398
      %v1739 = vunpack.c.l.b16 %v399
      %v1740 = vunpack.c.h.b16 %v399
      %v1741 = vunpack.c.l.b16 %v400
      %v1742 = vunpack.c.h.b16 %v400
      %v1743 = vunpack.c.l.b16 %v401
      %v1744 = vunpack.c.h.b16 %v401
      %v1745 = vunpack.c.l.b16 %v402
      %v1746 = vunpack.c.h.b16 %v402
      %v1747 = vunpack.c.l.b16 %v403
      %v1748 = vunpack.c.h.b16 %v403
      %v1749 = vunpack.c.l.b16 %v404
      %v1750 = vunpack.c.h.b16 %v404
      %v1751 = vunpack.c.l.b16 %v405
      %v1752 = vunpack.c.h.b16 %v405
      %v1753 = vunpack.c.l.b16 %v406
      %v1754 = vunpack.c.h.b16 %v406
      %v1755 = vunpack.c.l.b16 %v407
      %v1756 = vunpack.c.h.b16 %v407
      %v1757 = vunpack.c.l.b16 %v408
      %v1758 = vunpack.c.h.b16 %v408
      %v1759 = vunpack.c.l.b16 %v409
      %v1760 = vunpack.c.h.b16 %v409
      %v1761 = vunpack.c.l.b16 %v410
      %v1762 = vunpack.c.h.b16 %v410
      %v1763 = vunpack.c.l.b16 %v411
      %v1764 = vunpack.c.h.b16 %v411
      %v1765 = vunpack.c.l.b16 %v412
      %v1766 = vunpack.c.h.b16 %v412
      %v1767 = vunpack.c.l.b16 %v413
      %v1768 = vunpack.c.h.b16 %v413
      %v1769 = vunpack.c.l.b16 %v414
      %v1770 = vunpack.c.h.b16 %v414
      %v1771 = vunpack.c.l.b16 %v415
      %v1772 = vunpack.c.h.b16 %v415
      %v1773 = vunpack.c.l.b16 %v416
      %v1774 = vunpack.c.h.b16 %v416
      %v1775 = vunpack.c.l.b16 %v417
      %v1776 = vunpack.c.h.b16 %v417
      %v1777 = vunpack.c.l.b16 %v418
      %v1778 = vunpack.c.h.b16 %v418
      %v1779 = vunpack.c.l.b16 %v419
      %v1780 = vunpack.c.h.b16 %v419
      %v1781 = vunpack.c.l.b16 %v420
      %v1782 = vunpack.c.h.b16 %v420
      %v1783 = vunpack.c.l.b16 %v421
      %v1784 = vunpack.c.h.b16 %v421
      %v1785 = vunpack.c.l.b16 %v422
      %v1786 = vunpack.c.h.b16 %v422
      %v1787 = vunpack.c.l.b16 %v423
      %v1788 = vunpack.c.h.b16 %v423
      %v1789 = vunpack.c.l.b16 %v424
      %v1790 = vunpack.c.h.b16 %v424
      %v1791 = vunpack.c.l.b16 %v425
      %v1792 = vunpack.c.h.b16 %v425
      %v1793 = vunpack.c.l.b16 %v426
      %v1794 = vunpack.c.h.b16 %v426
      %v1795 = vunpack.c.l.b16 %v427
      %v1796 = vunpack.c.h.b16 %v427
      %v1797 = vunpack.c.l.b16 %v428
      %v1798 = vunpack.c.h.b16 %v428
      %v1799 = vunpack.c.l.b16 %v429
      %v1800 = vunpack.c.h.b16 %v429
      %v1801 = vunpack.c.l.b16 %v430
      %v1802 = vunpack.c.h.b16 %v430
      %v1803 = vunpack.c.l.b16 %v431
      %v1804 = vunpack.c.h.b16 %v431
      %v1805 = vunpack.c.l.b16 %v432
      %v1806 = vunpack.c.h.b16 %v432
      %v1807 = vunpack.c.l.b16 %v433
      %v1808 = vunpack.c.h.b16 %v433
      %v1809 = vunpack.c.l.b16 %v434
      %v1810 = vunpack.c.h.b16 %v434
      %v1811 = vunpack.c.l.b16 %v435
      %v1812 = vunpack.c.h.b16 %v435
      %v1813 = vunpack.c.l.b16 %v436
      %v1814 = vunpack.c.h.b16 %v436
      %v1815 = vunpack.c.l.b16 %v437
      %v1816 = vunpack.c.h.b16 %v437
      %v1817 = vunpack.c.l.b16 %v438
      %v1818 = vunpack.c.h.b16 %v438
      %v1819 = vunpack.c.l.b16 %v439
      %v1820 = vunpack.c.h.b16 %v439
      %v1821 = vunpack.c.l.b16 %v440
      %v1822 = vunpack.c.h.b16 %v440
      %v1823 = vunpack.c.l.b16 %v441
      %v1824 = vunpack.c.h.b16 %v441
      %v1825 = vunpack.c.l.b16 %v442
      %v1826 = vunpack.c.h.b16 %v442
      %v1827 = vunpack.c.l.b16 %v443
      %v1828 = vunpack.c.h.b16 %v443
      %v1829 = vunpack.c.l.b16 %v444
      %v1830 = vunpack.c.h.b16 %v444
      %v1831 = vunpack.c.l.b16 %v445
      %v1832 = vunpack.c.h.b16 %v445
      %v1833 = vunpack.c.l.b16 %v446
      %v1834 = vunpack.c.h.b16 %v446
      %v1835 = vunpack.c.l.b16 %v447
      %v1836 = vunpack.c.h.b16 %v447
      %v1837 = vunpack.c.l.b16 %v448
      %v1838 = vunpack.c.h.b16 %v448
      %v1839 = vunpack.c.l.b16 %v449
      %v1840 = vunpack.c.h.b16 %v449
      %v1841 = vunpack.c.l.b16 %v450
      %v1842 = vunpack.c.h.b16 %v450
      %v1843 = vunpack.c.l.b16 %v451
      %v1844 = vunpack.c.h.b16 %v451
      %v1845 = vunpack.c.l.b16 %v452
      %v1846 = vunpack.c.h.b16 %v452
      %v1847 = vunpack.c.l.b16 %v453
      %v1848 = vunpack.c.h.b16 %v453
      %v1849 = vunpack.c.l.b16 %v454
      %v1850 = vunpack.c.h.b16 %v454
      %v1851 = vunpack.c.l.b16 %v455
      %v1852 = vunpack.c.h.b16 %v455
      %v1853 = vunpack.c.l.b16 %v456
      %v1854 = vunpack.c.h.b16 %v456
      %v1855 = vunpack.c.l.b16 %v457
      %v1856 = vunpack.c.h.b16 %v457
      %v1857 = vunpack.c.l.b16 %v458
      %v1858 = vunpack.c.h.b16 %v458
      %v1859 = vunpack.c.l.b16 %v459
      %v1860 = vunpack.c.h.b16 %v459
      %v1861 = vunpack.c.l.b16 %v460
      %v1862 = vunpack.c.h.b16 %v460
      %v1863 = vunpack.c.l.b16 %v461
      %v1864 = vunpack.c.h.b16 %v461
      %v1865 = vunpack.c.l.b16 %v462
      %v1866 = vunpack.c.h.b16 %v462
      %v1867 = vunpack.c.l.b16 %v463
      %v1868 = vunpack.c.h.b16 %v463
      %v1869 = vunpack.c.l.b16 %v464
      %v1870 = vunpack.c.h.b16 %v464
      %v1871 = vunpack.c.l.b16 %v465
      %v1872 = vunpack.c.h.b16 %v465
      %v1873 = vunpack.c.l.b16 %v466
      %v1874 = vunpack.c.h.b16 %v466
      %v1875 = vunpack.c.l.b16 %v467
      %v1876 = vunpack.c.h.b16 %v467
      %v1877 = vunpack.c.l.b16 %v468
      %v1878 = vunpack.c.h.b16 %v468
      %v1879 = vunpack.c.l.b16 %v469
      %v1880 = vunpack.c.h.b16 %v469
      %v1881 = vunpack.c.l.b16 %v470
      %v1882 = vunpack.c.h.b16 %v470
      %v1883 = vunpack.c.l.b16 %v471
      %v1884 = vunpack.c.h.b16 %v471
      %v1885 = vunpack.c.l.b16 %v472
      %v1886 = vunpack.c.h.b16 %v472
      %v1887 = vunpack.c.l.b16 %v473
      %v1888 = vunpack.c.h.b16 %v473
      %v1889 = vunpack.c.l.b16 %v474
      %v1890 = vunpack.c.h.b16 %v474
      %v1891 = vunpack.c.l.b16 %v475
      %v1892 = vunpack.c.h.b16 %v475
      %v1893 = vunpack.c.l.b16 %v476
      %v1894 = vunpack.c.h.b16 %v476
      %v1895 = vunpack.c.l.b16 %v477
      %v1896 = vunpack.c.h.b16 %v477
      %v1897 = vunpack.c.l.b16 %v478
      %v1898 = vunpack.c.h.b16 %v478
      %v1899 = vunpack.c.l.b16 %v479
      %v1900 = vunpack.c.h.b16 %v479
      %v1901 = vunpack.c.l.b16 %v480
      %v1902 = vunpack.c.h.b16 %v480
      %v1903 = vunpack.c.l.b16 %v481
      %v1904 = vunpack.c.h.b16 %v481
      %v1905 = vunpack.c.l.b16 %v482
      %v1906 = vunpack.c.h.b16 %v482
      %v1907 = vunpack.c.l.b16 %v483
      %v1908 = vunpack.c.h.b16 %v483
      %v1909 = vunpack.c.l.b16 %v484
      %v1910 = vunpack.c.h.b16 %v484
      %v1911 = vunpack.c.l.b16 %v485
      %v1912 = vunpack.c.h.b16 %v485
      %v1913 = vunpack.c.l.b16 %v486
      %v1914 = vunpack.c.h.b16 %v486
      %v1915 = vunpack.c.l.b16 %v487
      %v1916 = vunpack.c.h.b16 %v487
      %v1917 = vunpack.c.l.b16 %v488
      %v1918 = vunpack.c.h.b16 %v488
      %v1919 = vunpack.c.l.b16 %v489
      %v1920 = vunpack.c.h.b16 %v489
      %v1921 = vunpack.c.l.b16 %v490
      %v1922 = vunpack.c.h.b16 %v490
      %v1923 = vunpack.c.l.b16 %v491
      %v1924 = vunpack.c.h.b16 %v491
      %v1925 = vunpack.c.l.b16 %v492
      %v1926 = vunpack.c.h.b16 %v492
      %v1927 = vunpack.c.l.b16 %v493
      %v1928 = vunpack.c.h.b16 %v493
      %v1929 = vunpack.c.l.b16 %v494
      %v1930 = vunpack.c.h.b16 %v494
      %v1931 = vunpack.c.l.b16 %v495
      %v1932 = vunpack.c.h.b16 %v495
      %v1933 = vunpack.c.l.b16 %v496
      %v1934 = vunpack.c.h.b16 %v496
      %v1935 = vunpack.c.l.b16 %v497
      %v1936 = vunpack.c.h.b16 %v497
      %v1937 = vunpack.c.l.b16 %v498
      %v1938 = vunpack.c.h.b16 %v498
      %v1939 = vunpack.c.l.b16 %v499
      %v1940 = vunpack.c.h.b16 %v499
      %v1941 = vunpack.c.l.b16 %v500
      %v1942 = vunpack.c.h.b16 %v500
      %v1943 = vunpack.c.l.b16 %v501
      %v1944 = vunpack.c.h.b16 %v501
      %v1945 = vunpack.c.l.b16 %v502
      %v1946 = vunpack.c.h.b16 %v502
      %v1947 = vunpack.c.l.b16 %v503
      %v1948 = vunpack.c.h.b16 %v503
      %v1949 = vunpack.c.l.b16 %v504
      %v1950 = vunpack.c.h.b16 %v504
      %v1951 = vunpack.c.l.b16 %v505
      %v1952 = vunpack.c.h.b16 %v505
      %v1953 = vunpack.c.l.b16 %v506
      %v1954 = vunpack.c.h.b16 %v506
      %v1955 = vunpack.c.l.b16 %v507
      %v1956 = vunpack.c.h.b16 %v507
      %v1957 = vunpack.c.l.b16 %v508
      %v1958 = vunpack.c.h.b16 %v508
      %v1959 = vunpack.c.l.b16 %v509
      %v1960 = vunpack.c.h.b16 %v509
      %v1961 = vunpack.c.l.b16 %v510
      %v1962 = vunpack.c.h.b16 %v510
      %v1963 = vunpack.c.l.b16 %v511
      %v1964 = vunpack.c.h.b16 %v511
      %v1965 = vunpack.c.l.b16 %v512
      %v1966 = vunpack.c.h.b16 %v512
      %v1967 = vunpack.c.l.b16 %v513
      %v1968 = vunpack.c.h.b16 %v513
      %v1969 = vunpack.c.l.b16 %v514
      %v1970 = vunpack.c.h.b16 %v514
      %v1971 = vunpack.c.l.b16 %v515
      %v1972 = vunpack.c.h.b16 %v515
      %v1973 = vunpack.c.l.b16 %v516
      %v1974 = vunpack.c.h.b16 %v516
      %v1975 = vunpack.c.l.b16 %v517
      %v1976 = vunpack.c.h.b16 %v517
      %v1977 = vunpack.c.l.b16 %v518
      %v1978 = vunpack.c.h.b16 %v518
      %v1979 = vunpack.c.l.b16 %v519
      %v1980 = vunpack.c.h.b16 %v519
      %v1981 = vunpack.c.l.b16 %v520
      %v1982 = vunpack.c.h.b16 %v520
      %v1983 = vunpack.c.l.b16 %v521
      %v1984 = vunpack.c.h.b16 %v521
      %v1985 = vunpack.c.l.b16 %v522
      %v1986 = vunpack.c.h.b16 %v522
      %v1987 = vunpack.c.l.b16 %v523
      %v1988 = vunpack.c.h.b16 %v523
      %v1989 = vunpack.c.l.b16 %v524
      %v1990 = vunpack.c.h.b16 %v524
      %v1991 = vunpack.c.l.b16 %v525
      %v1992 = vunpack.c.h.b16 %v525
      %v1993 = vunpack.c.l.b16 %v526
      %v1994 = vunpack.c.h.b16 %v526
      %v1995 = vunpack.c.l.b16 %v527
      %v1996 = vunpack.c.h.b16 %v527
      %v1997 = vunpack.c.l.b16 %v528
      %v1998 = vunpack.c.h.b16 %v528
      %v1999 = vunpack.c.l.b16 %v529
      %v2000 = vunpack.c.h.b16 %v529
      %v2001 = vunpack.c.l.b16 %v530
      %v2002 = vunpack.c.h.b16 %v530
      %v2003 = vunpack.c.l.b16 %v531
      %v2004 = vunpack.c.h.b16 %v531
      %v2005 = vunpack.c.l.b16 %v532
      %v2006 = vunpack.c.h.b16 %v532
      %v2007 = vunpack.c.l.b16 %v533
      %v2008 = vunpack.c.h.b16 %v533
      %v2009 = vunpack.c.l.b16 %v534
      %v2010 = vunpack.c.h.b16 %v534
      %v2011 = vunpack.c.l.b16 %v535
      %v2012 = vunpack.c.h.b16 %v535
      %v2013 = vunpack.c.l.b16 %v536
      %v2014 = vunpack.c.h.b16 %v536
      %v2015 = vunpack.c.l.b16 %v537
      %v2016 = vunpack.c.h.b16 %v537
      %v2017 = vunpack.c.l.b16 %v538
      %v2018 = vunpack.c.h.b16 %v538
      %v2019 = vunpack.c.l.b16 %v539
      %v2020 = vunpack.c.h.b16 %v539
      %v2021 = vunpack.c.l.b16 %v540
      %v2022 = vunpack.c.h.b16 %v540
      %v2023 = vunpack.c.l.b16 %v541
      %v2024 = vunpack.c.h.b16 %v541
      %v2025 = vunpack.c.l.b16 %v542
      %v2026 = vunpack.c.h.b16 %v542
      %v2027 = vunpack.c.l.b16 %v543
      %v2028 = vunpack.c.h.b16 %v543
      %v2029 = vunpack.c.l.b16 %v544
      %v2030 = vunpack.c.h.b16 %v544
      %v2031 = vunpack.c.l.b16 %v545
      %v2032 = vunpack.c.h.b16 %v545
      %v2033 = vunpack.c.l.b16 %v546
      %v2034 = vunpack.c.h.b16 %v546
      %v2035 = vunpack.c.l.b16 %v547
      %v2036 = vunpack.c.h.b16 %v547
      %v2037 = vunpack.c.l.b16 %v548
      %v2038 = vunpack.c.h.b16 %v548
      %v2039 = vunpack.c.l.b16 %v549
      %v2040 = vunpack.c.h.b16 %v549
      %v2041 = vunpack.c.l.b16 %v550
      %v2042 = vunpack.c.h.b16 %v550
      %v2043 = vunpack.c.l.b16 %v551
      %v2044 = vunpack.c.h.b16 %v551
      %v2045 = vunpack.c.l.b16 %v552
      %v2046 = vunpack.c.h.b16 %v552
      %v2047 = vunpack.c.l.b16 %v553
      %v2048 = vunpack.c.h.b16 %v553
      %v2049 = vunpack.c.l.b16 %v554
      %v2050 = vunpack.c.h.b16 %v554
      %v2051 = vunpack.c.l.b16 %v555
      %v2052 = vunpack.c.h.b16 %v555
      %v2053 = vunpack.c.l.b16 %v556
      %v2054 = vunpack.c.h.b16 %v556
      %v2055 = vunpack.c.l.b16 %v557
      %v2056 = vunpack.c.h.b16 %v557
      %v2057 = vunpack.c.l.b16 %v558
      %v2058 = vunpack.c.h.b16 %v558
      %v2059 = vunpack.c.l.b16 %v559
      %v2060 = vunpack.c.h.b16 %v559
      %v2061 = vunpack.c.l.b16 %v560
      %v2062 = vunpack.c.h.b16 %v560
      %v2063 = vunpack.c.l.b16 %v561
      %v2064 = vunpack.c.h.b16 %v561
      %v2065 = vunpack.c.l.b16 %v562
      %v2066 = vunpack.c.h.b16 %v562
      %v2067 = vunpack.c.l.b16 %v563
      %v2068 = vunpack.c.h.b16 %v563
      %v2069 = vunpack.c.l.b16 %v564
      %v2070 = vunpack.c.h.b16 %v564
      %v2071 = vunpack.c.l.b16 %v565
      %v2072 = vunpack.c.h.b16 %v565
      %v2073 = vunpack.c.l.b16 %v566
      %v2074 = vunpack.c.h.b16 %v566
      %v2075 = vunpack.c.l.b16 %v567
      %v2076 = vunpack.c.h.b16 %v567
      %v2077 = vunpack.c.l.b16 %v568
      %v2078 = vunpack.c.h.b16 %v568
      %v2079 = vunpack.c.l.b16 %v569
      %v2080 = vunpack.c.h.b16 %v569
      %v2081 = vunpack.c.l.b16 %v570
      %v2082 = vunpack.c.h.b16 %v570
      %v2083 = vunpack.c.l.b16 %v571
      %v2084 = vunpack.c.h.b16 %v571
      %v2085 = vunpack.c.l.b16 %v572
      %v2086 = vunpack.c.h.b16 %v572
      %v2087 = vunpack.c.l.b16 %v573
      %v2088 = vunpack.c.h.b16 %v573
      %v2089 = vunpack.c.l.b16 %v574
      %v2090 = vunpack.c.h.b16 %v574
      %v2091 = vunpack.c.l.b16 %v575
      %v2092 = vunpack.c.h.b16 %v575
      %v2093 = vunpack.c.l.b16 %v576
      %v2094 = vunpack.c.h.b16 %v576
      %v2095 = vunpack.c.l.b16 %v577
      %v2096 = vunpack.c.h.b16 %v577
      %v2097 = vunpack.c.l.b16 %v578
      %v2098 = vunpack.c.h.b16 %v578
      %v2099 = vunpack.c.l.b16 %v579
      %v2100 = vunpack.c.h.b16 %v579
      %v2101 = vunpack.c.l.b16 %v580
      %v2102 = vunpack.c.h.b16 %v580
      %v2103 = vunpack.c.l.b16 %v581
      %v2104 = vunpack.c.h.b16 %v581
      %v2105 = vunpack.c.l.b16 %v582
      %v2106 = vunpack.c.h.b16 %v582
      %v2107 = vunpack.c.l.b16 %v583
      %v2108 = vunpack.c.h.b16 %v583
      %v2109 = vunpack.c.l.b16 %v584
      %v2110 = vunpack.c.h.b16 %v584
      %v2111 = vunpack.c.l.b16 %v585
      %v2112 = vunpack.c.h.b16 %v585
      %v2113 = vunpack.c.l.b16 %v586
      %v2114 = vunpack.c.h.b16 %v586
      %v2115 = vunpack.c.l.b16 %v587
      %v2116 = vunpack.c.h.b16 %v587
      %v2117 = vunpack.c.l.b16 %v588
      %v2118 = vunpack.c.h.b16 %v588
      %v2119 = vunpack.c.l.b16 %v589
      %v2120 = vunpack.c.h.b16 %v589
      %v2121 = vunpack.c.l.b16 %v590
      %v2122 = vunpack.c.h.b16 %v590
      %v2123 = vunpack.c.l.b16 %v591
      %v2124 = vunpack.c.h.b16 %v591
      %v2125 = vunpack.c.l.b16 %v592
      %v2126 = vunpack.c.h.b16 %v592
      %v2127 = vunpack.c.l.b16 %v593
      %v2128 = vunpack.c.h.b16 %v593
      %v2129 = vunpack.c.l.b16 %v594
      %v2130 = vunpack.c.h.b16 %v594
      %v2131 = vunpack.c.l.b16 %v595
      %v2132 = vunpack.c.h.b16 %v595
      %v2133 = vunpack.c.l.b16 %v596
      %v2134 = vunpack.c.h.b16 %v596
      %v2135 = vunpack.c.l.b16 %v597
      %v2136 = vunpack.c.h.b16 %v597
      %v2137 = vunpack.c.l.b16 %v598
      %v2138 = vunpack.c.h.b16 %v598
      %v2139 = vunpack.c.l.b16 %v599
      %v2140 = vunpack.c.h.b16 %v599
      %v2141 = vunpack.c.l.b16 %v600
      %v2142 = vunpack.c.h.b16 %v600
      %v2143 = vunpack.c.l.b16 %v601
      %v2144 = vunpack.c.h.b16 %v601
      %v2145 = vunpack.c.l.b16 %v602
      %v2146 = vunpack.c.h.b16 %v602
      %v2147 = vunpack.c.l.b16 %v603
      %v2148 = vunpack.c.h.b16 %v603
      %v2149 = vunpack.c.l.b16 %v604
      %v2150 = vunpack.c.h.b16 %v604
      %v2151 = vunpack.c.l.b16 %v605
      %v2152 = vunpack.c.h.b16 %v605
      %v2153 = vunpack.c.l.b16 %v606
      %v2154 = vunpack.c.h.b16 %v606
      %v2155 = vunpack.c.l.b16 %v607
      %v2156 = vunpack.c.h.b16 %v607
      %v2157 = vunpack.c.l.b16 %v608
      %v2158 = vunpack.c.h.b16 %v608
      %v2159 = vunpack.c.l.b16 %v609
      %v2160 = vunpack.c.h.b16 %v609
      %v2161 = vunpack.c.l.b16 %v610
      %v2162 = vunpack.c.h.b16 %v610
      %v2163 = vunpack.c.l.b16 %v611
      %v2164 = vunpack.c.h.b16 %v611
      %v2165 = vunpack.c.l.b16 %v612
      %v2166 = vunpack.c.h.b16 %v612
      %v2167 = vunpack.c.l.b16 %v613
      %v2168 = vunpack.c.h.b16 %v613
      %v2169 = vunpack.c.l.b16 %v614
      %v2170 = vunpack.c.h.b16 %v614
      %v2171 = vunpack.c.l.b16 %v615
      %v2172 = vunpack.c.h.b16 %v615
      %v2173 = vunpack.c.l.b16 %v616
      %v2174 = vunpack.c.h.b16 %v616
      %v2175 = vunpack.c.l.b16 %v617
      %v2176 = vunpack.c.h.b16 %v617
      %v2177 = vunpack.c.l.b16 %v618
      %v2178 = vunpack.c.h.b16 %v618
      %v2179 = vunpack.c.l.b16 %v619
      %v2180 = vunpack.c.h.b16 %v619
      %v2181 = vunpack.c.l.b16 %v620
      %v2182 = vunpack.c.h.b16 %v620
      %v2183 = vunpack.c.l.b16 %v621
      %v2184 = vunpack.c.h.b16 %v621
      %v2185 = vunpack.c.l.b16 %v622
      %v2186 = vunpack.c.h.b16 %v622
      %v2187 = vunpack.c.l.b16 %v623
      %v2188 = vunpack.c.h.b16 %v623
      %v2189 = vunpack.c.l.b16 %v624
      %v2190 = vunpack.c.h.b16 %v624
      %v2191 = vunpack.c.l.b16 %v625
      %v2192 = vunpack.c.h.b16 %v625
      %v2193 = vunpack.c.l.b16 %v626
      %v2194 = vunpack.c.h.b16 %v626
      %v2195 = vunpack.c.l.b16 %v627
      %v2196 = vunpack.c.h.b16 %v627
      %v2197 = vunpack.c.l.b16 %v628
      %v2198 = vunpack.c.h.b16 %v628
      %v2199 = vunpack.c.l.b16 %v629
      %v2200 = vunpack.c.h.b16 %v629
      %v2201 = vunpack.c.l.b16 %v630
      %v2202 = vunpack.c.h.b16 %v630
      %v2203 = vunpack.c.l.b16 %v631
      %v2204 = vunpack.c.h.b16 %v631
      %v2205 = vunpack.c.l.b16 %v632
      %v2206 = vunpack.c.h.b16 %v632
      %v2207 = vunpack.c.l.b16 %v633
      %v2208 = vunpack.c.h.b16 %v633
      %v2209 = vunpack.c.l.b16 %v634
      %v2210 = vunpack.c.h.b16 %v634
      %v2211 = vunpack.c.l.b16 %v635
      %v2212 = vunpack.c.h.b16 %v635
      %v2213 = vunpack.c.l.b16 %v636
      %v2214 = vunpack.c.h.b16 %v636
      %v2215 = vunpack.c.l.b16 %v637
      %v2216 = vunpack.c.h.b16 %v637
      %v2217 = vunpack.c.l.b16 %v638
      %v2218 = vunpack.c.h.b16 %v638
      %v2219 = vunpack.c.l.b16 %v639
      %v2220 = vunpack.c.h.b16 %v639
      %v2221 = vunpack.c.l.b16 %v640
      %v2222 = vunpack.c.h.b16 %v640
      %v2223 = vunpack.c.l.b16 %v641
      %v2224 = vunpack.c.h.b16 %v641
      %v2225 = vunpack.c.l.b16 %v642
      %v2226 = vunpack.c.h.b16 %v642
      %v2227 = vunpack.c.l.b16 %v643
      %v2228 = vunpack.c.h.b16 %v643
      %v2229 = vunpack.c.l.b16 %v644
      %v2230 = vunpack.c.h.b16 %v644
      %v2231 = vunpack.c.l.b16 %v645
      %v2232 = vunpack.c.h.b16 %v645
      %v2233 = vunpack.c.l.b16 %v646
      %v2234 = vunpack.c.h.b16 %v646
      %v2235 = vunpack.c.l.b16 %v647
      %v2236 = vunpack.c.h.b16 %v647
      %v2237 = vunpack.c.l.b16 %v648
      %v2238 = vunpack.c.h.b16 %v648
      %v2239 = vunpack.c.l.b16 %v649
      %v2240 = vunpack.c.h.b16 %v649
      %v2241 = vunpack.c.l.b16 %v650
      %v2242 = vunpack.c.h.b16 %v650
      %v2243 = vunpack.c.l.b16 %v651
      %v2244 = vunpack.c.h.b16 %v651
      %v2245 = vunpack.c.l.b16 %v652
      %v2246 = vunpack.c.h.b16 %v652
      %v2247 = vunpack.c.l.b16 %v653
      %v2248 = vunpack.c.h.b16 %v653
      %v2249 = vunpack.c.l.b16 %v654
      %v2250 = vunpack.c.h.b16 %v654
      %v2251 = vunpack.c.l.b16 %v655
      %v2252 = vunpack.c.h.b16 %v655
      %v2253 = vunpack.c.l.b16 %v656
      %v2254 = vunpack.c.h.b16 %v656
      %v2255 = vunpack.c.l.b16 %v657
      %v2256 = vunpack.c.h.b16 %v657
      %v2257 = vunpack.c.l.b16 %v658
      %v2258 = vunpack.c.h.b16 %v658
      %v2259 = vunpack.c.l.b16 %v659
      %v2260 = vunpack.c.h.b16 %v659
      %v2261 = vunpack.c.l.b16 %v660
      %v2262 = vunpack.c.h.b16 %v660
      %v2263 = vunpack.c.l.b16 %v661
      %v2264 = vunpack.c.h.b16 %v661
      %v2265 = vunpack.c.l.b16 %v662
      %v2266 = vunpack.c.h.b16 %v662
      %v2267 = vunpack.c.l.b16 %v663
      %v2268 = vunpack.c.h.b16 %v663
      %v2269 = vunpack.c.l.b16 %v664
      %v2270 = vunpack.c.h.b16 %v664
      %v2271 = vunpack.c.l.b16 %v665
      %v2272 = vunpack.c.h.b16 %v665
      %v2273 = vunpack.c.l.b16 %v666
      %v2274 = vunpack.c.h.b16 %v666
      %v2275 = vunpack.c.l.b16 %v667
      %v2276 = vunpack.c.h.b16 %v667
      %v2277 = vunpack.c.l.b16 %v668
      %v2278 = vunpack.c.h.b16 %v668
      %v2279 = vunpack.c.l.b16 %v669
      %v2280 = vunpack.c.h.b16 %v669
      %v2281 = vunpack.c.l.b16 %v670
      %v2282 = vunpack.c.h.b16 %v670
      %v2283 = vunpack.c.l.b16 %v671
      %v2284 = vunpack.c.h.b16 %v671
      %v2285 = vunpack.c.l.b16 %v672
      %v2286 = vunpack.c.h.b16 %v672
      %v2287 = vunpack.c.l.b16 %v673
      %v2288 = vunpack.c.h.b16 %v673
      %v2289 = vunpack.c.l.b16 %v674
      %v2290 = vunpack.c.h.b16 %v674
      %v2291 = vunpack.c.l.b16 %v675
      %v2292 = vunpack.c.h.b16 %v675
      %v2293 = vunpack.c.l.b16 %v676
      %v2294 = vunpack.c.h.b16 %v676
      %v2295 = vunpack.c.l.b16 %v677
      %v2296 = vunpack.c.h.b16 %v677
      %v2297 = vunpack.c.l.b16 %v678
      %v2298 = vunpack.c.h.b16 %v678
      %v2299 = vunpack.c.l.b16 %v679
      %v2300 = vunpack.c.h.b16 %v679
      %v2301 = vunpack.c.l.b16 %v680
      %v2302 = vunpack.c.h.b16 %v680
      %v2303 = vunpack.c.l.b16 %v681
      %v2304 = vunpack.c.h.b16 %v681
      %v2305 = vunpack.c.l.b16 %v682
      %v2306 = vunpack.c.h.b16 %v682
      %v2307 = vunpack.c.l.b16 %v683
      %v2308 = vunpack.c.h.b16 %v683
      %v2309 = vunpack.c.l.b16 %v684
      %v2310 = vunpack.c.h.b16 %v684
      %v2311 = vunpack.c.l.b16 %v685
      %v2312 = vunpack.c.h.b16 %v685
      %v2313 = vunpack.c.l.b16 %v686
      %v2314 = vunpack.c.h.b16 %v686
      %v2315 = vunpack.c.l.b16 %v687
      %v2316 = vunpack.c.h.b16 %v687
      %v2317 = vunpack.c.l.b16 %v688
      %v2318 = vunpack.c.h.b16 %v688
      %v2319 = vunpack.c.l.b16 %v689
      %v2320 = vunpack.c.h.b16 %v689
      %v2321 = vunpack.c.l.b16 %v690
      %v2322 = vunpack.c.h.b16 %v690
      %v2323 = vunpack.c.l.b16 %v691
      %v2324 = vunpack.c.h.b16 %v691
      %v2325 = vunpack.c.l.b16 %v692
      %v2326 = vunpack.c.h.b16 %v692
      %v2327 = vunpack.c.l.b16 %v693
      %v2328 = vunpack.c.h.b16 %v693
      %v2329 = vunpack.c.l.b16 %v694
      %v2330 = vunpack.c.h.b16 %v694
      %v2331 = vunpack.c.l.b16 %v695
      %v2332 = vunpack.c.h.b16 %v695
      %v2333 = vunpack.c.l.b16 %v696
      %v2334 = vunpack.c.h.b16 %v696
      %v2335 = vunpack.c.l.b16 %v697
      %v2336 = vunpack.c.h.b16 %v697
      %v2337 = vunpack.c.l.b16 %v698
      %v2338 = vunpack.c.h.b16 %v698
      %v2339 = vunpack.c.l.b16 %v699
      %v2340 = vunpack.c.h.b16 %v699
      %v2341 = vunpack.c.l.b16 %v700
      %v2342 = vunpack.c.h.b16 %v700
      %v2343 = vunpack.c.l.b16 %v701
      %v2344 = vunpack.c.h.b16 %v701
      %v2345 = vunpack.c.l.b16 %v702
      %v2346 = vunpack.c.h.b16 %v702
      %v2347 = vunpack.c.l.b16 %v703
      %v2348 = vunpack.c.h.b16 %v703
      %v2349 = vunpack.c.l.b16 %v704
      %v2350 = vunpack.c.h.b16 %v704
      %v2351 = vunpack.c.l.b16 %v705
      %v2352 = vunpack.c.h.b16 %v705
      %v2353 = vunpack.c.l.b16 %v706
      %v2354 = vunpack.c.h.b16 %v706
      %v2355 = vunpack.c.l.b16 %v707
      %v2356 = vunpack.c.h.b16 %v707
      %v2357 = vunpack.c.l.b16 %v708
      %v2358 = vunpack.c.h.b16 %v708
      %v2359 = vunpack.c.l.b16 %v709
      %v2360 = vunpack.c.h.b16 %v709
      %v2361 = vunpack.c.l.b16 %v710
      %v2362 = vunpack.c.h.b16 %v710
      %v2363 = vunpack.c.l.b16 %v711
      %v2364 = vunpack.c.h.b16 %v711
      %v2365 = vunpack.c.l.b16 %v712
      %v2366 = vunpack.c.h.b16 %v712
      %v2367 = vunpack.c.l.b16 %v713
      %v2368 = vunpack.c.h.b16 %v713
      %v2369 = vunpack.c.l.b16 %v714
      %v2370 = vunpack.c.h.b16 %v714
      %v2371 = vunpack.c.l.b16 %v715
      %v2372 = vunpack.c.h.b16 %v715
      %v2373 = vunpack.c.l.b16 %v716
      %v2374 = vunpack.c.h.b16 %v716
      %v2375 = vunpack.c.l.b16 %v717
      %v2376 = vunpack.c.h.b16 %v717
      %v2377 = vunpack.c.l.b16 %v718
      %v2378 = vunpack.c.h.b16 %v718
      %v2379 = vunpack.c.l.b16 %v719
      %v2380 = vunpack.c.h.b16 %v719
      %v2381 = vunpack.c.l.b16 %v720
      %v2382 = vunpack.c.h.b16 %v720
      %v2383 = vunpack.c.l.b16 %v721
      %v2384 = vunpack.c.h.b16 %v721
      %v2385 = vunpack.c.l.b16 %v722
      %v2386 = vunpack.c.h.b16 %v722
      %v2387 = vunpack.c.l.b16 %v723
      %v2388 = vunpack.c.h.b16 %v723
      %v2389 = vunpack.c.l.b16 %v724
      %v2390 = vunpack.c.h.b16 %v724
      %v2391 = vunpack.c.l.b16 %v725
      %v2392 = vunpack.c.h.b16 %v725
      %v2393 = vunpack.c.l.b16 %v726
      %v2394 = vunpack.c.h.b16 %v726
      %v2395 = vunpack.c.l.b16 %v727
      %v2396 = vunpack.c.h.b16 %v727
      %v2397 = vunpack.c.l.b16 %v728
      %v2398 = vunpack.c.h.b16 %v728
      %v2399 = vunpack.c.l.b16 %v729
      %v2400 = vunpack.c.h.b16 %v729
      %v2401 = vunpack.c.l.b16 %v730
      %v2402 = vunpack.c.h.b16 %v730
      %v2403 = vunpack.c.l.b16 %v731
      %v2404 = vunpack.c.h.b16 %v731
      %v2405 = vunpack.c.l.b16 %v732
      %v2406 = vunpack.c.h.b16 %v732
      %v2407 = vunpack.c.l.b16 %v733
      %v2408 = vunpack.c.h.b16 %v733
      %v2409 = vunpack.c.l.b16 %v734
      %v2410 = vunpack.c.h.b16 %v734
      %v2411 = vunpack.c.l.b16 %v735
      %v2412 = vunpack.c.h.b16 %v735
      %v2413 = vunpack.c.l.b16 %v736
      %v2414 = vunpack.c.h.b16 %v736
      %v2415 = vunpack.c.l.b16 %v737
      %v2416 = vunpack.c.h.b16 %v737
      %v2417 = vunpack.c.l.b16 %v738
      %v2418 = vunpack.c.h.b16 %v738
      %v2419 = vunpack.c.l.b16 %v739
      %v2420 = vunpack.c.h.b16 %v739
      %v2421 = vunpack.c.l.b16 %v740
      %v2422 = vunpack.c.h.b16 %v740
      %v2423 = vunpack.c.l.b16 %v741
      %v2424 = vunpack.c.h.b16 %v741
      %v2425 = vunpack.c.l.b16 %v742
      %v2426 = vunpack.c.h.b16 %v742
      %v2427 = vunpack.c.l.b16 %v743
      %v2428 = vunpack.c.h.b16 %v743
      %v2429 = vunpack.c.l.b16 %v744
      %v2430 = vunpack.c.h.b16 %v744
      %v2431 = vunpack.c.l.b16 %v745
      %v2432 = vunpack.c.h.b16 %v745
      %v2433 = vunpack.c.l.b16 %v746
      %v2434 = vunpack.c.h.b16 %v746
      %v2435 = vunpack.c.l.b16 %v747
      %v2436 = vunpack.c.h.b16 %v747
      %v2437 = vunpack.c.l.b16 %v748
      %v2438 = vunpack.c.h.b16 %v748
      %v2439 = vunpack.c.l.b16 %v749
      %v2440 = vunpack.c.h.b16 %v749
      %v2441 = vunpack.c.l.b16 %v750
      %v2442 = vunpack.c.h.b16 %v750
      %v2443 = vunpack.c.l.b16 %v751
      %v2444 = vunpack.c.h.b16 %v751
      %v2445 = vunpack.c.l.b16 %v752
      %v2446 = vunpack.c.h.b16 %v752
      %v2447 = vunpack.c.l.b16 %v753
      %v2448 = vunpack.c.h.b16 %v753
      %v2449 = vunpack.c.l.b16 %v754
      %v2450 = vunpack.c.h.b16 %v754
      %v2451 = vunpack.c.l.b16 %v755
      %v2452 = vunpack.c.h.b16 %v755
      %v2453 = vunpack.c.l.b16 %v756
      %v2454 = vunpack.c.h.b16 %v756
      %v2455 = vunpack.c.l.b16 %v757
      %v2456 = vunpack.c.h.b16 %v757
      %v2457 = vunpack.c.l.b16 %v758
      %v2458 = vunpack.c.h.b16 %v758
      %v2459 = vunpack.c.l.b16 %v759
      %v2460 = vunpack.c.h.b16 %v759
      %v2461 = vunpack.c.l.b16 %v760
      %v2462 = vunpack.c.h.b16 %v760
      %v2463 = vunpack.c.l.b16 %v761
      %v2464 = vunpack.c.h.b16 %v761
      %v2465 = vunpack.c.l.b16 %v762
      %v2466 = vunpack.c.h.b16 %v762
      %v2467 = vunpack.c.l.b16 %v763
      %v2468 = vunpack.c.h.b16 %v763
      %v2469 = vunpack.c.l.b16 %v764
      %v2470 = vunpack.c.h.b16 %v764
      %v2471 = vunpack.c.l.b16 %v765
      %v2472 = vunpack.c.h.b16 %v765
      %v2473 = vunpack.c.l.b16 %v766
      %v2474 = vunpack.c.h.b16 %v766
      %v2475 = vunpack.c.l.b16 %v767
      %v2476 = vunpack.c.h.b16 %v767
      %v2477 = vunpack.c.l.b16 %v768
      %v2478 = vunpack.c.h.b16 %v768
      %v2479 = vunpack.c.l.b16 %v769
      %v2480 = vunpack.c.h.b16 %v769
      %v2481 = vunpack.c.l.b16 %v770
      %v2482 = vunpack.c.h.b16 %v770
      %v2483 = vunpack.c.l.b16 %v771
      %v2484 = vunpack.c.h.b16 %v771
      %v2485 = vunpack.c.l.b16 %v772
      %v2486 = vunpack.c.h.b16 %v772
      %v2487 = vunpack.c.l.b16 %v773
      %v2488 = vunpack.c.h.b16 %v773
      %v2489 = vunpack.c.l.b16 %v774
      %v2490 = vunpack.c.h.b16 %v774
      %v2491 = vunpack.c.l.b16 %v775
      %v2492 = vunpack.c.h.b16 %v775
      %v2493 = vunpack.c.l.b16 %v776
      %v2494 = vunpack.c.h.b16 %v776
      %v2495 = vunpack.c.l.b16 %v777
      %v2496 = vunpack.c.h.b16 %v777
      %v2497 = vunpack.c.l.b16 %v778
      %v2498 = vunpack.c.h.b16 %v778
      %v2499 = vunpack.c.l.b16 %v779
      %v2500 = vunpack.c.h.b16 %v779
      %v2501 = vunpack.c.l.b16 %v780
      %v2502 = vunpack.c.h.b16 %v780
      %v2503 = vunpack.c.l.b16 %v781
      %v2504 = vunpack.c.h.b16 %v781
      %v2505 = vunpack.c.l.b16 %v782
      %v2506 = vunpack.c.h.b16 %v782
      %v2507 = vunpack.c.l.b16 %v783
      %v2508 = vunpack.c.h.b16 %v783
      %v2509 = vunpack.c.l.b16 %v784
      %v2510 = vunpack.c.h.b16 %v784
      %v2511 = vunpack.c.l.b16 %v785
      %v2512 = vunpack.c.h.b16 %v785
      %v2513 = vunpack.c.l.b16 %v786
      %v2514 = vunpack.c.h.b16 %v786
      %v2515 = vunpack.c.l.b16 %v787
      %v2516 = vunpack.c.h.b16 %v787
      %v2517 = vunpack.c.l.b16 %v788
      %v2518 = vunpack.c.h.b16 %v788
      %v2519 = vunpack.c.l.b16 %v789
      %v2520 = vunpack.c.h.b16 %v789
      %v2521 = vunpack.c.l.b16 %v790
      %v2522 = vunpack.c.h.b16 %v790
      %v2523 = vunpack.c.l.b16 %v791
      %v2524 = vunpack.c.h.b16 %v791
      %v2525 = vunpack.c.l.b16 %v792
      %v2526 = vunpack.c.h.b16 %v792
      %v2527 = vunpack.c.l.b16 %v793
      %v2528 = vunpack.c.h.b16 %v793
      %v2529 = vunpack.c.l.b16 %v794
      %v2530 = vunpack.c.h.b16 %v794
      %v2531 = vunpack.c.l.b16 %v795
      %v2532 = vunpack.c.h.b16 %v795
      %v2533 = vunpack.c.l.b16 %v796
      %v2534 = vunpack.c.h.b16 %v796
      %v2535 = vunpack.c.l.b16 %v797
      %v2536 = vunpack.c.h.b16 %v797
      %v2537 = vunpack.c.l.b16 %v798
      %v2538 = vunpack.c.h.b16 %v798
      %v2539 = vunpack.c.l.b16 %v799
      %v2540 = vunpack.c.h.b16 %v799
      %v2541 = vunpack.c.l.b16 %v800
      %v2542 = vunpack.c.h.b16 %v800
      %v2543 = vunpack.c.l.b16 %v801
      %v2544 = vunpack.c.h.b16 %v801
      %v2545 = vunpack.c.l.b16 %v802
      %v2546 = vunpack.c.h.b16 %v802
      %v2547 = vunpack.c.l.b16 %v803
      %v2548 = vunpack.c.h.b16 %v803
      %v2549 = vunpack.c.l.b16 %v804
      %v2550 = vunpack.c.h.b16 %v804
      %v2551 = vunpack.c.l.b16 %v805
      %v2552 = vunpack.c.h.b16 %v805
      %v2553 = vunpack.c.l.b16 %v806
      %v2554 = vunpack.c.h.b16 %v806
      %v2555 = vunpack.c.l.b16 %v807
      %v2556 = vunpack.c.h.b16 %v807
      %v2557 = vunpack.c.l.b16 %v808
      %v2558 = vunpack.c.h.b16 %v808
      %v2559 = vunpack.c.l.b16 %v809
      %v2560 = vunpack.c.h.b16 %v809
      %v2561 = vunpack.c.l.b16 %v810
      %v2562 = vunpack.c.h.b16 %v810
      %v2563 = vunpack.c.l.b16 %v811
      %v2564 = vunpack.c.h.b16 %v811
      %v2565 = vunpack.c.l.b16 %v812
      %v2566 = vunpack.c.h.b16 %v812
      %v2567 = vunpack.c.l.b16 %v813
      %v2568 = vunpack.c.h.b16 %v813
      %v2569 = vunpack.c.l.b16 %v814
      %v2570 = vunpack.c.h.b16 %v814
      %v2571 = vunpack.c.l.b16 %v815
      %v2572 = vunpack.c.h.b16 %v815
      %v2573 = vunpack.c.l.b16 %v816
      %v2574 = vunpack.c.h.b16 %v816
      %v2575 = vunpack.c.l.b16 %v817
      %v2576 = vunpack.c.h.b16 %v817
      %v2577 = vunpack.c.l.b16 %v818
      %v2578 = vunpack.c.h.b16 %v818
      %v2579 = vunpack.c.l.b16 %v819
      %v2580 = vunpack.c.h.b16 %v819
      %v2581 = vunpack.c.l.b16 %v820
      %v2582 = vunpack.c.h.b16 %v820
      %v2583 = vunpack.c.l.b16 %v821
      %v2584 = vunpack.c.h.b16 %v821
      %v2585 = vunpack.c.l.b16 %v822
      %v2586 = vunpack.c.h.b16 %v822
      %v2587 = vunpack.c.l.b16 %v823
      %v2588 = vunpack.c.h.b16 %v823
      %v2589 = vunpack.c.l.b16 %v824
      %v2590 = vunpack.c.h.b16 %v824
      %v2591 = vunpack.c.l.b16 %v825
      %v2592 = vunpack.c.h.b16 %v825
      %v2593 = vunpack.c.l.b16 %v826
      %v2594 = vunpack.c.h.b16 %v826
      %v2595 = vunpack.c.l.b16 %v827
      %v2596 = vunpack.c.h.b16 %v827
      %v2597 = vunpack.c.l.b16 %v828
      %v2598 = vunpack.c.h.b16 %v828
      %v2599 = vunpack.c.l.b16 %v829
      %v2600 = vunpack.c.h.b16 %v829
      %v2601 = vunpack.c.l.b16 %v830
      %v2602 = vunpack.c.h.b16 %v830
      %v2603 = vunpack.c.l.b16 %v831
      %v2604 = vunpack.c.h.b16 %v831
      %v2605 = vunpack.c.l.b16 %v832
      %v2606 = vunpack.c.h.b16 %v832
      %v2607 = vunpack.c.l.b16 %v833
      %v2608 = vunpack.c.h.b16 %v833
      %v2609 = vunpack.c.l.b16 %v834
      %v2610 = vunpack.c.h.b16 %v834
      %v2611 = vunpack.c.l.b16 %v835
      %v2612 = vunpack.c.h.b16 %v835
      %v2613 = vunpack.c.l.b16 %v836
      %v2614 = vunpack.c.h.b16 %v836
      %v2615 = vunpack.c.l.b16 %v837
      %v2616 = vunpack.c.h.b16 %v837
      %v2617 = vunpack.c.l.b16 %v838
      %v2618 = vunpack.c.h.b16 %v838
      %v2619 = vunpack.c.l.b16 %v839
      %v2620 = vunpack.c.h.b16 %v839
      %v2621 = vunpack.c.l.b16 %v840
      %v2622 = vunpack.c.h.b16 %v840
      %v2623 = vunpack.c.l.b16 %v841
      %v2624 = vunpack.c.h.b16 %v841
      %v2625 = vunpack.c.l.b16 %v842
      %v2626 = vunpack.c.h.b16 %v842
      %v2627 = vunpack.c.l.b16 %v843
      %v2628 = vunpack.c.h.b16 %v843
      %v2629 = vunpack.c.l.b16 %v844
      %v2630 = vunpack.c.h.b16 %v844
      %v2631 = vunpack.c.l.b16 %v845
      %v2632 = vunpack.c.h.b16 %v845
      %v2633 = vunpack.c.l.b16 %v846
      %v2634 = vunpack.c.h.b16 %v846
      %v2635 = vunpack.c.l.b16 %v847
      %v2636 = vunpack.c.h.b16 %v847
      %v2637 = vunpack.c.l.b16 %v848
      %v2638 = vunpack.c.h.b16 %v848
      %v2639 = vunpack.c.l.b16 %v849
      %v2640 = vunpack.c.h.b16 %v849
      %v2641 = vunpack.c.l.b16 %v850
      %v2642 = vunpack.c.h.b16 %v850
      %v2643 = vunpack.c.l.b16 %v851
      %v2644 = vunpack.c.h.b16 %v851
      %v2645 = vunpack.c.l.b16 %v852
      %v2646 = vunpack.c.h.b16 %v852
      %v2647 = vunpack.c.l.b16 %v853
      %v2648 = vunpack.c.h.b16 %v853
      %v2649 = vunpack.c.l.b16 %v854
      %v2650 = vunpack.c.h.b16 %v854
      %v2651 = vunpack.c.l.b16 %v855
      %v2652 = vunpack.c.h.b16 %v855
      %v2653 = vunpack.c.l.b16 %v856
      %v2654 = vunpack.c.h.b16 %v856
      %v2655 = vunpack.c.l.b16 %v857
      %v2656 = vunpack.c.h.b16 %v857
      %v2657 = vunpack.c.l.b16 %v858
      %v2658 = vunpack.c.h.b16 %v858
      %v2659 = vunpack.c.l.b16 %v859
      %v2660 = vunpack.c.h.b16 %v859
      %v2661 = vunpack.c.l.b16 %v860
      %v2662 = vunpack.c.h.b16 %v860
      %v2663 = vpack.c.b16 %v1517, %v1511
      %v2664 = vpack.c.b16 %v1518, %v1512
      %v2665 = vpack.c.b16 %v1519, %v1513
      %v2666 = vpack.c.b16 %v1520, %v1514
      %v2667 = vpack.c.b16 %v1521, %v1515
      %v2668 = vpack.c.b16 %v1522, %v1516
      %v2669 = vpack.c.b16 %v1529, %v1523
      %v2670 = vpack.c.b16 %v1530, %v1524
      %v2671 = vpack.c.b16 %v1531, %v1525
      %v2672 = vpack.c.b16 %v1532, %v1526
      %v2673 = vpack.c.b16 %v1533, %v1527
      %v2674 = vpack.c.b16 %v1534, %v1528
      %v2675 = vpack.c.b16 %v1541, %v1535
      %v2676 = vpack.c.b16 %v1542, %v1536
      %v2677 = vpack.c.b16 %v1543, %v1537
      %v2678 = vpack.c.b16 %v1544, %v1538
      %v2679 = vpack.c.b16 %v1545, %v1539
      %v2680 = vpack.c.b16 %v1546, %v1540
      %v2681 = vpack.c.b16 %v1553, %v1547
      %v2682 = vpack.c.b16 %v1554, %v1548
      %v2683 = vpack.c.b16 %v1555, %v1549
      %v2684 = vpack.c.b16 %v1556, %v1550
      %v2685 = vpack.c.b16 %v1557, %v1551
      %v2686 = vpack.c.b16 %v1558, %v1552
      %v2687 = vpack.c.b16 %v1565, %v1559
      %v2688 = vpack.c.b16 %v1566, %v1560
      %v2689 = vpack.c.b16 %v1567, %v1561
      %v2690 = vpack.c.b16 %v1568, %v1562
      %v2691 = vpack.c.b16 %v1569, %v1563
      %v2692 = vpack.c.b16 %v1570, %v1564
      %v2693 = vpack.c.b16 %v1577, %v1571
      %v2694 = vpack.c.b16 %v1578, %v1572
      %v2695 = vpack.c.b16 %v1579, %v1573
      %v2696 = vpack.c.b16 %v1580, %v1574
      %v2697 = vpack.c.b16 %v1581, %v1575
      %v2698 = vpack.c.b16 %v1582, %v1576
      %v2699 = vpack.c.b16 %v1589, %v1583
      %v2700 = vpack.c.b16 %v1590, %v1584
      %v2701 = vpack.c.b16 %v1591, %v1585
      %v2702 = vpack.c.b16 %v1592, %v1586
      %v2703 = vpack.c.b16 %v1593, %v1587
      %v2704 = vpack.c.b16 %v1594, %v1588
      %v2705 = vpack.c.b16 %v1601, %v1595
      %v2706 = vpack.c.b16 %v1602, %v1596
      %v2707 = vpack.c.b16 %v1603, %v1597
      %v2708 = vpack.c.b16 %v1604, %v1598
      %v2709 = vpack.c.b16 %v1605, %v1599
      %v2710 = vpack.c.b16 %v1606, %v1600
      %v2711 = vpack.c.b16 %v1613, %v1607
      %v2712 = vpack.c.b16 %v1614, %v1608
      %v2713 = vpack.c.b16 %v1615, %v1609
      %v2714 = vpack.c.b16 %v1616, %v1610
      %v2715 = vpack.c.b16 %v1617, %v1611
      %v2716 = vpack.c.b16 %v1618, %v1612
      %v2717 = vpack.c.b16 %v1625, %v1619
      %v2718 = vpack.c.b16 %v1626, %v1620
      %v2719 = vpack.c.b16 %v1627, %v1621
      %v2720 = vpack.c.b16 %v1628, %v1622
      %v2721 = vpack.c.b16 %v1629, %v1623
      %v2722 = vpack.c.b16 %v1630, %v1624
      %v2723 = vpack.c.b16 %v1637, %v1631
      %v2724 = vpack.c.b16 %v1638, %v1632
      %v2725 = vpack.c.b16 %v1639, %v1633
      %v2726 = vpack.c.b16 %v1640, %v1634
      %v2727 = vpack.c.b16 %v1641, %v1635
      %v2728 = vpack.c.b16 %v1642, %v1636
      %v2729 = vpack.c.b16 %v1649, %v1643
      %v2730 = vpack.c.b16 %v1650, %v1644
      %v2731 = vpack.c.b16 %v1651, %v1645
      %v2732 = vpack.c.b16 %v1652, %v1646
      %v2733 = vpack.c.b16 %v1653, %v1647
      %v2734 = vpack.c.b16 %v1654, %v1648
      %v2735 = vpack.c.b16 %v1661, %v1655
      %v2736 = vpack.c.b16 %v1662, %v1656
      %v2737 = vpack.c.b16 %v1663, %v1657
      %v2738 = vpack.c.b16 %v1664, %v1658
      %v2739 = vpack.c.b16 %v1665, %v1659
      %v2740 = vpack.c.b16 %v1666, %v1660
      %v2741 = vpack.c.b16 %v1673, %v1667
      %v2742 = vpack.c.b16 %v1674, %v1668
      %v2743 = vpack.c.b16 %v1675, %v1669
      %v2744 = vpack.c.b16 %v1676, %v1670
      %v2745 = vpack.c.b16 %v1677, %v1671
      %v2746 = vpack.c.b16 %v1678, %v1672
      %v2747 = vpack.c.b16 %v1685, %v1679
      %v2748 = vpack.c.b16 %v1686, %v1680
      %v2749 = vpack.c.b16 %v1687, %v1681
      %v2750 = vpack.c.b16 %v1688, %v1682
      %v2751 = vpack.c.b16 %v1689, %v1683
      %v2752 = vpack.c.b16 %v1690, %v1684
      %v2753 = vpack.c.b16 %v1697, %v1691
      %v2754 = vpack.c.b16 %v1698, %v1692
      %v2755 = vpack.c.b16 %v1699, %v1693
      %v2756 = vpack.c.b16 %v1700, %v1694
      %v2757 = vpack.c.b16 %v1701, %v1695
      %v2758 = vpack.c.b16 %v1702, %v1696
      %v2759 = vpack.c.b16 %v1709, %v1703
      %v2760 = vpack.c.b16 %v1710, %v1704
      %v2761 = vpack.c.b16 %v1711, %v1705
      %v2762 = vpack.c.b16 %v1712, %v1706
      %v2763 = vpack.c.b16 %v1713, %v1707
      %v2764 = vpack.c.b16 %v1714, %v1708
      %v2765 = vpack.c.b16 %v1721, %v1715
      %v2766 = vpack.c.b16 %v1722, %v1716
      %v2767 = vpack.c.b16 %v1723, %v1717
      %v2768 = vpack.c.b16 %v1724, %v1718
      %v2769 = vpack.c.b16 %v1725, %v1719
      %v2770 = vpack.c.b16 %v1726, %v1720
      %v2771 = vpack.c.b16 %v1733, %v1727
      %v2772 = vpack.c.b16 %v1734, %v1728
      %v2773 = vpack.c.b16 %v1735, %v1729
      %v2774 = vpack.c.b16 %v1736, %v1730
      %v2775 = vpack.c.b16 %v1737, %v1731
      %v2776 = vpack.c.b16 %v1738, %v1732
      %v2777 = vpack.c.b16 %v1745, %v1739
      %v2778 = vpack.c.b16 %v1746, %v1740
      %v2779 = vpack.c.b16 %v1747, %v1741
      %v2780 = vpack.c.b16 %v1748, %v1742
      %v2781 = vpack.c.b16 %v1749, %v1743
      %v2782 = vpack.c.b16 %v1750, %v1744
      %v2783 = vpack.c.b16 %v1757, %v1751
      %v2784 = vpack.c.b16 %v1758, %v1752
      %v2785 = vpack.c.b16 %v1759, %v1753
      %v2786 = vpack.c.b16 %v1760, %v1754
      %v2787 = vpack.c.b16 %v1761, %v1755
      %v2788 = vpack.c.b16 %v1762, %v1756
      %v2789 = vpack.c.b16 %v1769, %v1763
      %v2790 = vpack.c.b16 %v1770, %v1764
      %v2791 = vpack.c.b16 %v1771, %v1765
      %v2792 = vpack.c.b16 %v1772, %v1766
      %v2793 = vpack.c.b16 %v1773, %v1767
      %v2794 = vpack.c.b16 %v1774, %v1768
      %v2795 = vpack.c.b16 %v1781, %v1775
      %v2796 = vpack.c.b16 %v1782, %v1776
      %v2797 = vpack.c.b16 %v1783, %v1777
      %v2798 = vpack.c.b16 %v1784, %v1778
      %v2799 = vpack.c.b16 %v1785, %v1779
      %v2800 = vpack.c.b16 %v1786, %v1780
      %v2801 = vpack.c.b16 %v1793, %v1787
      %v2802 = vpack.c.b16 %v1794, %v1788
      %v2803 = vpack.c.b16 %v1795, %v1789
      %v2804 = vpack.c.b16 %v1796, %v1790
      %v2805 = vpack.c.b16 %v1797, %v1791
      %v2806 = vpack.c.b16 %v1798, %v1792
      %v2807 = vpack.c.b16 %v1805, %v1799
      %v2808 = vpack.c.b16 %v1806, %v1800
      %v2809 = vpack.c.b16 %v1807, %v1801
      %v2810 = vpack.c.b16 %v1808, %v1802
      %v2811 = vpack.c.b16 %v1809, %v1803
      %v2812 = vpack.c.b16 %v1810, %v1804
      %v2813 = vpack.c.b16 %v1817, %v1811
      %v2814 = vpack.c.b16 %v1818, %v1812
      %v2815 = vpack.c.b16 %v1819, %v1813
      %v2816 = vpack.c.b16 %v1820, %v1814
      %v2817 = vpack.c.b16 %v1821, %v1815
      %v2818 = vpack.c.b16 %v1822, %v1816
      %v2819 = vpack.c.b16 %v1829, %v1823
      %v2820 = vpack.c.b16 %v1830, %v1824
      %v2821 = vpack.c.b16 %v1831, %v1825
      %v2822 = vpack.c.b16 %v1832, %v1826
      %v2823 = vpack.c.b16 %v1833, %v1827
      %v2824 = vpack.c.b16 %v1834, %v1828
      %v2825 = vpack.c.b16 %v1841, %v1835
      %v2826 = vpack.c.b16 %v1842, %v1836
      %v2827 = vpack.c.b16 %v1843, %v1837
      %v2828 = vpack.c.b16 %v1844, %v1838
      %v2829 = vpack.c.b16 %v1845, %v1839
      %v2830 = vpack.c.b16 %v1846, %v1840
      %v2831 = vpack.c.b16 %v1853, %v1847
      %v2832 = vpack.c.b16 %v1854, %v1848
      %v2833 = vpack.c.b16 %v1855, %v1849
      %v2834 = vpack.c.b16 %v1856, %v1850
      %v2835 = vpack.c.b16 %v1857, %v1851
      %v2836 = vpack.c.b16 %v1858, %v1852
      %v2837 = vpack.c.b16 %v1865, %v1859
      %v2838 = vpack.c.b16 %v1866, %v1860
      %v2839 = vpack.c.b16 %v1867, %v1861
      %v2840 = vpack.c.b16 %v1868, %v1862
      %v2841 = vpack.c.b16 %v1869, %v1863
      %v2842 = vpack.c.b16 %v1870, %v1864
      %v2843 = vpack.c.b16 %v1877, %v1871
      %v2844 = vpack.c.b16 %v1878, %v1872
      %v2845 = vpack.c.b16 %v1879, %v1873
      %v2846 = vpack.c.b16 %v1880, %v1874
      %v2847 = vpack.c.b16 %v1881, %v1875
      %v2848 = vpack.c.b16 %v1882, %v1876
      %v2849 = vpack.c.b16 %v1889, %v1883
      %v2850 = vpack.c.b16 %v1890, %v1884
      %v2851 = vpack.c.b16 %v1891, %v1885
      %v2852 = vpack.c.b16 %v1892, %v1886
      %v2853 = vpack.c.b16 %v1893, %v1887
      %v2854 = vpack.c.b16 %v1894, %v1888
      %v2855 = vpack.c.b16 %v1901, %v1895
      %v2856 = vpack.c.b16 %v1902, %v1896
      %v2857 = vpack.c.b16 %v1903, %v1897
      %v2858 = vpack.c.b16 %v1904, %v1898
      %v2859 = vpack.c.b16 %v1905, %v1899
      %v2860 = vpack.c.b16 %v1906, %v1900
      %v2861 = vpack.c.b16 %v1913, %v1907
      %v2862 = vpack.c.b16 %v1914, %v1908
      %v2863 = vpack.c.b16 %v1915, %v1909
      %v2864 = vpack.c.b16 %v1916, %v1910
      %v2865 = vpack.c.b16 %v1917, %v1911
      %v2866 = vpack.c.b16 %v1918, %v1912
      %v2867 = vpack.c.b16 %v1925, %v1919
      %v2868 = vpack.c.b16 %v1926, %v1920
      %v2869 = vpack.c.b16 %v1927, %v1921
      %v2870 = vpack.c.b16 %v1928, %v1922
      %v2871 = vpack.c.b16 %v1929, %v1923
      %v2872 = vpack.c.b16 %v1930, %v1924
      %v2873 = vpack.c.b16 %v1937, %v1931
      %v2874 = vpack.c.b16 %v1938, %v1932
      %v2875 = vpack.c.b16 %v1939, %v1933
      %v2876 = vpack.c.b16 %v1940, %v1934
      %v2877 = vpack.c.b16 %v1941, %v1935
      %v2878 = vpack.c.b16 %v1942, %v1936
      %v2879 = vpack.c.b16 %v1949, %v1943
      %v2880 = vpack.c.b16 %v1950, %v1944
      %v2881 = vpack.c.b16 %v1951, %v1945
      %v2882 = vpack.c.b16 %v1952, %v1946
      %v2883 = vpack.c.b16 %v1953, %v1947
      %v2884 = vpack.c.b16 %v1954, %v1948
      %v2885 = vpack.c.b16 %v1961, %v1955
      %v2886 = vpack.c.b16 %v1962, %v1956
      %v2887 = vpack.c.b16 %v1963, %v1957
      %v2888 = vpack.c.b16 %v1964, %v1958
      %v2889 = vpack.c.b16 %v1965, %v1959
      %v2890 = vpack.c.b16 %v1966, %v1960
      %v2891 = vpack.c.b16 %v1973, %v1967
      %v2892 = vpack.c.b16 %v1974, %v1968
      %v2893 = vpack.c.b16 %v1975, %v1969
      %v2894 = vpack.c.b16 %v1976, %v1970
      %v2895 = vpack.c.b16 %v1977, %v1971
      %v2896 = vpack.c.b16 %v1978, %v1972
      %v2897 = vpack.c.b16 %v1985, %v1979
      %v2898 = vpack.c.b16 %v1986, %v1980
      %v2899 = vpack.c.b16 %v1987, %v1981
      %v2900 = vpack.c.b16 %v1988, %v1982
      %v2901 = vpack.c.b16 %v1989, %v1983
      %v2902 = vpack.c.b16 %v1990, %v1984
      %v2903 = vpack.c.b16 %v1997, %v1991
      %v2904 = vpack.c.b16 %v1998, %v1992
      %v2905 = vpack.c.b16 %v1999, %v1993
      %v2906 = vpack.c.b16 %v2000, %v1994
      %v2907 = vpack.c.b16 %v2001, %v1995
      %v2908 = vpack.c.b16 %v2002, %v1996
      %v2909 = vpack.c.b16 %v2009, %v2003
      %v2910 = vpack.c.b16 %v2010, %v2004
      %v2911 = vpack.c.b16 %v2011, %v2005
      %v2912 = vpack.c.b16 %v2012, %v2006
      %v2913 = vpack.c.b16 %v2013, %v2007
      %v2914 = vpack.c.b16 %v2014, %v2008
      %v2915 = vpack.c.b16 %v2021, %v2015
      %v2916 = vpack.c.b16 %v2022, %v2016
      %v2917 = vpack.c.b16 %v2023, %v2017
      %v2918 = vpack.c.b16 %v2024, %v2018
      %v2919 = vpack.c.b16 %v2025, %v2019
      %v2920 = vpack.c.b16 %v2026, %v2020
      %v2921 = vpack.c.b16 %v2033, %v2027
      %v2922 = vpack.c.b16 %v2034, %v2028
      %v2923 = vpack.c.b16 %v2035, %v2029
      %v2924 = vpack.c.b16 %v2036, %v2030
      %v2925 = vpack.c.b16 %v2037, %v2031
      %v2926 = vpack.c.b16 %v2038, %v2032
      %v2927 = vpack.c.b16 %v2045, %v2039
      %v2928 = vpack.c.b16 %v2046, %v2040
      %v2929 = vpack.c.b16 %v2047, %v2041
      %v2930 = vpack.c.b16 %v2048, %v2042
      %v2931 = vpack.c.b16 %v2049, %v2043
      %v2932 = vpack.c.b16 %v2050, %v2044
      %v2933 = vpack.c.b16 %v2057, %v2051
      %v2934 = vpack.c.b16 %v2058, %v2052
      %v2935 = vpack.c.b16 %v2059, %v2053
      %v2936 = vpack.c.b16 %v2060, %v2054
      %v2937 = vpack.c.b16 %v2061, %v2055
      %v2938 = vpack.c.b16 %v2062, %v2056
      %v2939 = vpack.c.b16 %v2069, %v2063
      %v2940 = vpack.c.b16 %v2070, %v2064
      %v2941 = vpack.c.b16 %v2071, %v2065
      %v2942 = vpack.c.b16 %v2072, %v2066
      %v2943 = vpack.c.b16 %v2073, %v2067
      %v2944 = vpack.c.b16 %v2074, %v2068
      %v2945 = vpack.c.b16 %v2081, %v2075
      %v2946 = vpack.c.b16 %v2082, %v2076
      %v2947 = vpack.c.b16 %v2083, %v2077
      %v2948 = vpack.c.b16 %v2084, %v2078
      %v2949 = vpack.c.b16 %v2085, %v2079
      %v2950 = vpack.c.b16 %v2086, %v2080
      %v2951 = vpack.c.b16 %v2093, %v2087
      %v2952 = vpack.c.b16 %v2094, %v2088
      %v2953 = vpack.c.b16 %v2095, %v2089
      %v2954 = vpack.c.b16 %v2096, %v2090
      %v2955 = vpack.c.b16 %v2097, %v2091
      %v2956 = vpack.c.b16 %v2098, %v2092
      %v2957 = vpack.c.b16 %v2105, %v2099
      %v2958 = vpack.c.b16 %v2106, %v2100
      %v2959 = vpack.c.b16 %v2107, %v2101
      %v2960 = vpack.c.b16 %v2108, %v2102
      %v2961 = vpack.c.b16 %v2109, %v2103
      %v2962 = vpack.c.b16 %v2110, %v2104
      %v2963 = vpack.c.b16 %v2117, %v2111
      %v2964 = vpack.c.b16 %v2118, %v2112
      %v2965 = vpack.c.b16 %v2119, %v2113
      %v2966 = vpack.c.b16 %v2120, %v2114
      %v2967 = vpack.c.b16 %v2121, %v2115
      %v2968 = vpack.c.b16 %v2122, %v2116
      %v2969 = vpack.c.b16 %v2129, %v2123
      %v2970 = vpack.c.b16 %v2130, %v2124
      %v2971 = vpack.c.b16 %v2131, %v2125
      %v2972 = vpack.c.b16 %v2132, %v2126
      %v2973 = vpack.c.b16 %v2133, %v2127
      %v2974 = vpack.c.b16 %v2134, %v2128
      %v2975 = vpack.c.b16 %v2141, %v2135
      %v2976 = vpack.c.b16 %v2142, %v2136
      %v2977 = vpack.c.b16 %v2143, %v2137
      %v2978 = vpack.c.b16 %v2144, %v2138
      %v2979 = vpack.c.b16 %v2145, %v2139
      %v2980 = vpack.c.b16 %v2146, %v2140
      %v2981 = vpack.c.b16 %v2153, %v2147
      %v2982 = vpack.c.b16 %v2154, %v2148
      %v2983 = vpack.c.b16 %v2155, %v2149
      %v2984 = vpack.c.b16 %v2156, %v2150
      %v2985 = vpack.c.b16 %v2157, %v2151
      %v2986 = vpack.c.b16 %v2158, %v2152
      %v2987 = vpack.c.b16 %v2165, %v2159
      %v2988 = vpack.c.b16 %v2166, %v2160
      %v2989 = vpack.c.b16 %v2167, %v2161
      %v2990 = vpack.c.b16 %v2168, %v2162
      %v2991 = vpack.c.b16 %v2169, %v2163
      %v2992 = vpack.c.b16 %v2170, %v2164
      %v2993 = vpack.c.b16 %v2177, %v2171
      %v2994 = vpack.c.b16 %v2178, %v2172
      %v2995 = vpack.c.b16 %v2179, %v2173
      %v2996 = vpack.c.b16 %v2180, %v2174
      %v2997 = vpack.c.b16 %v2181, %v2175
      %v2998 = vpack.c.b16 %v2182, %v2176
      %v2999 = vpack.c.b16 %v2189, %v2183
      %v3000 = vpack.c.b16 %v2190, %v2184
      %v3001 = vpack.c.b16 %v2191, %v2185
      %v3002 = vpack.c.b16 %v2192, %v2186
      %v3003 = vpack.c.b16 %v2193, %v2187
      %v3004 = vpack.c.b16 %v2194, %v2188
      %v3005 = vpack.c.b16 %v2201, %v2195
      %v3006 = vpack.c.b16 %v2202, %v2196
      %v3007 = vpack.c.b16 %v2203, %v2197
      %v3008 = vpack.c.b16 %v2204, %v2198
      %v3009 = vpack.c.b16 %v2205, %v2199
      %v3010 = vpack.c.b16 %v2206, %v2200
      %v3011 = vpack.c.b16 %v2213, %v2207
      %v3012 = vpack.c.b16 %v2214, %v2208
      %v3013 = vpack.c.b16 %v2215, %v2209
      %v3014 = vpack.c.b16 %v2216, %v2210
      %v3015 = vpack.c.b16 %v2217, %v2211
      %v3016 = vpack.c.b16 %v2218, %v2212
      %v3017 = vpack.c.b16 %v2225, %v2219
      %v3018 = vpack.c.b16 %v2226, %v2220
      %v3019 = vpack.c.b16 %v2227, %v2221
      %v3020 = vpack.c.b16 %v2228, %v2222
      %v3021 = vpack.c.b16 %v2229, %v2223
      %v3022 = vpack.c.b16 %v2230, %v2224
      %v3023 = vpack.c.b16 %v2237, %v2231
      %v3024 = vpack.c.b16 %v2238, %v2232
      %v3025 = vpack.c.b16 %v2239, %v2233
      %v3026 = vpack.c.b16 %v2240, %v2234
      %v3027 = vpack.c.b16 %v2241, %v2235
      %v3028 = vpack.c.b16 %v2242, %v2236
      %v3029 = vpack.c.b16 %v2249, %v2243
      %v3030 = vpack.c.b16 %v2250, %v2244
      %v3031 = vpack.c.b16 %v2251, %v2245
      %v3032 = vpack.c.b16 %v2252, %v2246
      %v3033 = vpack.c.b16 %v2253, %v2247
      %v3034 = vpack.c.b16 %v2254, %v2248
      %v3035 = vpack.c.b16 %v2261, %v2255
      %v3036 = vpack.c.b16 %v2262, %v2256
      %v3037 = vpack.c.b16 %v2263, %v2257
      %v3038 = vpack.c.b16 %v2264, %v2258
      %v3039 = vpack.c.b16 %v2265, %v2259
      %v3040 = vpack.c.b16 %v2266, %v2260
      %v3041 = vpack.c.b16 %v2273, %v2267
      %v3042 = vpack.c.b16 %v2274, %v2268
      %v3043 = vpack.c.b16 %v2275, %v2269
      %v3044 = vpack.c.b16 %v2276, %v2270
      %v3045 = vpack.c.b16 %v2277, %v2271
      %v3046 = vpack.c.b16 %v2278, %v2272
      %v3047 = vpack.c.b16 %v2285, %v2279
      %v3048 = vpack.c.b16 %v2286, %v2280
      %v3049 = vpack.c.b16 %v2287, %v2281
      %v3050 = vpack.c.b16 %v2288, %v2282
      %v3051 = vpack.c.b16 %v2289, %v2283
      %v3052 = vpack.c.b16 %v2290, %v2284
      %v3053 = vpack.c.b16 %v2297, %v2291
      %v3054 = vpack.c.b16 %v2298, %v2292
      %v3055 = vpack.c.b16 %v2299, %v2293
      %v3056 = vpack.c.b16 %v2300, %v2294
      %v3057 = vpack.c.b16 %v2301, %v2295
      %v3058 = vpack.c.b16 %v2302, %v2296
      %v3059 = vpack.c.b16 %v2309, %v2303
      %v3060 = vpack.c.b16 %v2310, %v2304
      %v3061 = vpack.c.b16 %v2311, %v2305
      %v3062 = vpack.c.b16 %v2312, %v2306
      %v3063 = vpack.c.b16 %v2313, %v2307
      %v3064 = vpack.c.b16 %v2314, %v2308
      %v3065 = vpack.c.b16 %v2321, %v2315
      %v3066 = vpack.c.b16 %v2322, %v2316
      %v3067 = vpack.c.b16 %v2323, %v2317
      %v3068 = vpack.c.b16 %v2324, %v2318
      %v3069 = vpack.c.b16 %v2325, %v2319
      %v3070 = vpack.c.b16 %v2326, %v2320
      %v3071 = vpack.c.b16 %v2333, %v2327
      %v3072 = vpack.c.b16 %v2334, %v2328
      %v3073 = vpack.c.b16 %v2335, %v2329
      %v3074 = vpack.c.b16 %v2336, %v2330
      %v3075 = vpack.c.b16 %v2337, %v2331
      %v3076 = vpack.c.b16 %v2338, %v2332
      %v3077 = vpack.c.b16 %v2345, %v2339
      %v3078 = vpack.c.b16 %v2346, %v2340
      %v3079 = vpack.c.b16 %v2347, %v2341
      %v3080 = vpack.c.b16 %v2348, %v2342
      %v3081 = vpack.c.b16 %v2349, %v2343
      %v3082 = vpack.c.b16 %v2350, %v2344
      %v3083 = vpack.c.b16 %v2357, %v2351
      %v3084 = vpack.c.b16 %v2358, %v2352
      %v3085 = vpack.c.b16 %v2359, %v2353
      %v3086 = vpack.c.b16 %v2360, %v2354
      %v3087 = vpack.c.b16 %v2361, %v2355
      %v3088 = vpack.c.b16 %v2362, %v2356
      %v3089 = vpack.c.b16 %v2369, %v2363
      %v3090 = vpack.c.b16 %v2370, %v2364
      %v3091 = vpack.c.b16 %v2371, %v2365
      %v3092 = vpack.c.b16 %v2372, %v2366
      %v3093 = vpack.c.b16 %v2373, %v2367
      %v3094 = vpack.c.b16 %v2374, %v2368
      %v3095 = vpack.c.b16 %v2381, %v2375
      %v3096 = vpack.c.b16 %v2382, %v2376
      %v3097 = vpack.c.b16 %v2383, %v2377
      %v3098 = vpack.c.b16 %v2384, %v2378
      %v3099 = vpack.c.b16 %v2385, %v2379
      %v3100 = vpack.c.b16 %v2386, %v2380
      %v3101 = vpack.c.b16 %v2393, %v2387
      %v3102 = vpack.c.b16 %v2394, %v2388
      %v3103 = vpack.c.b16 %v2395, %v2389
      %v3104 = vpack.c.b16 %v2396, %v2390
      %v3105 = vpack.c.b16 %v2397, %v2391
      %v3106 = vpack.c.b16 %v2398, %v2392
      %v3107 = vpack.c.b16 %v2405, %v2399
      %v3108 = vpack.c.b16 %v2406, %v2400
      %v3109 = vpack.c.b16 %v2407, %v2401
      %v3110 = vpack.c.b16 %v2408, %v2402
      %v3111 = vpack.c.b16 %v2409, %v2403
      %v3112 = vpack.c.b16 %v2410, %v2404
      %v3113 = vpack.c.b16 %v2417, %v2411
      %v3114 = vpack.c.b16 %v2418, %v2412
      %v3115 = vpack.c.b16 %v2419, %v2413
      %v3116 = vpack.c.b16 %v2420, %v2414
      %v3117 = vpack.c.b16 %v2421, %v2415
      %v3118 = vpack.c.b16 %v2422, %v2416
      %v3119 = vpack.c.b16 %v2429, %v2423
      %v3120 = vpack.c.b16 %v2430, %v2424
      %v3121 = vpack.c.b16 %v2431, %v2425
      %v3122 = vpack.c.b16 %v2432, %v2426
      %v3123 = vpack.c.b16 %v2433, %v2427
      %v3124 = vpack.c.b16 %v2434, %v2428
      %v3125 = vpack.c.b16 %v2441, %v2435
      %v3126 = vpack.c.b16 %v2442, %v2436
      %v3127 = vpack.c.b16 %v2443, %v2437
      %v3128 = vpack.c.b16 %v2444, %v2438
      %v3129 = vpack.c.b16 %v2445, %v2439
      %v3130 = vpack.c.b16 %v2446, %v2440
      %v3131 = vpack.c.b16 %v2453, %v2447
      %v3132 = vpack.c.b16 %v2454, %v2448
      %v3133 = vpack.c.b16 %v2455, %v2449
      %v3134 = vpack.c.b16 %v2456, %v2450
      %v3135 = vpack.c.b16 %v2457, %v2451
      %v3136 = vpack.c.b16 %v2458, %v2452
      %v3137 = vpack.c.b16 %v2465, %v2459
      %v3138 = vpack.c.b16 %v2466, %v2460
      %v3139 = vpack.c.b16 %v2467, %v2461
      %v3140 = vpack.c.b16 %v2468, %v2462
      %v3141 = vpack.c.b16 %v2469, %v2463
      %v3142 = vpack.c.b16 %v2470, %v2464
      %v3143 = vpack.c.b16 %v2477, %v2471
      %v3144 = vpack.c.b16 %v2478, %v2472
      %v3145 = vpack.c.b16 %v2479, %v2473
      %v3146 = vpack.c.b16 %v2480, %v2474
      %v3147 = vpack.c.b16 %v2481, %v2475
      %v3148 = vpack.c.b16 %v2482, %v2476
      %v3149 = vpack.c.b16 %v2489, %v2483
      %v3150 = vpack.c.b16 %v2490, %v2484
      %v3151 = vpack.c.b16 %v2491, %v2485
      %v3152 = vpack.c.b16 %v2492, %v2486
      %v3153 = vpack.c.b16 %v2493, %v2487
      %v3154 = vpack.c.b16 %v2494, %v2488
      %v3155 = vpack.c.b16 %v2501, %v2495
      %v3156 = vpack.c.b16 %v2502, %v2496
      %v3157 = vpack.c.b16 %v2503, %v2497
      %v3158 = vpack.c.b16 %v2504, %v2498
      %v3159 = vpack.c.b16 %v2505, %v2499
      %v3160 = vpack.c.b16 %v2506, %v2500
      %v3161 = vpack.c.b16 %v2513, %v2507
      %v3162 = vpack.c.b16 %v2514, %v2508
      %v3163 = vpack.c.b16 %v2515, %v2509
      %v3164 = vpack.c.b16 %v2516, %v2510
      %v3165 = vpack.c.b16 %v2517, %v2511
      %v3166 = vpack.c.b16 %v2518, %v2512
      %v3167 = vpack.c.b16 %v2525, %v2519
      %v3168 = vpack.c.b16 %v2526, %v2520
      %v3169 = vpack.c.b16 %v2527, %v2521
      %v3170 = vpack.c.b16 %v2528, %v2522
      %v3171 = vpack.c.b16 %v2529, %v2523
      %v3172 = vpack.c.b16 %v2530, %v2524
      %v3173 = vpack.c.b16 %v2537, %v2531
      %v3174 = vpack.c.b16 %v2538, %v2532
      %v3175 = vpack.c.b16 %v2539, %v2533
      %v3176 = vpack.c.b16 %v2540, %v2534
      %v3177 = vpack.c.b16 %v2541, %v2535
      %v3178 = vpack.c.b16 %v2542, %v2536
      %v3179 = vpack.c.b16 %v2549, %v2543
      %v3180 = vpack.c.b16 %v2550, %v2544
      %v3181 = vpack.c.b16 %v2551, %v2545
      %v3182 = vpack.c.b16 %v2552, %v2546
      %v3183 = vpack.c.b16 %v2553, %v2547
      %v3184 = vpack.c.b16 %v2554, %v2548
      %v3185 = vpack.c.b16 %v2561, %v2555
      %v3186 = vpack.c.b16 %v2562, %v2556
      %v3187 = vpack.c.b16 %v2563, %v2557
      %v3188 = vpack.c.b16 %v2564, %v2558
      %v3189 = vpack.c.b16 %v2565, %v2559
      %v3190 = vpack.c.b16 %v2566, %v2560
      %v3191 = vpack.c.b16 %v2573, %v2567
      %v3192 = vpack.c.b16 %v2574, %v2568
      %v3193 = vpack.c.b16 %v2575, %v2569
      %v3194 = vpack.c.b16 %v2576, %v2570
      %v3195 = vpack.c.b16 %v2577, %v2571
      %v3196 = vpack.c.b16 %v2578, %v2572
      %v3197 = vpack.c.b16 %v2585, %v2579
      %v3198 = vpack.c.b16 %v2586, %v2580
      %v3199 = vpack.c.b16 %v2587, %v2581
      %v3200 = vpack.c.b16 %v2588, %v2582
      %v3201 = vpack.c.b16 %v2589, %v2583
      %v3202 = vpack.c.b16 %v2590, %v2584
      %v3203 = vpack.c.b16 %v2597, %v2591
      %v3204 = vpack.c.b16 %v2598, %v2592
      %v3205 = vpack.c.b16 %v2599, %v2593
      %v3206 = vpack.c.b16 %v2600, %v2594
      %v3207 = vpack.c.b16 %v2601, %v2595
      %v3208 = vpack.c.b16 %v2602, %v2596
      %v3209 = vpack.c.b16 %v2609, %v2603
      %v3210 = vpack.c.b16 %v2610, %v2604
      %v3211 = vpack.c.b16 %v2611, %v2605
      %v3212 = vpack.c.b16 %v2612, %v2606
      %v3213 = vpack.c.b16 %v2613, %v2607
      %v3214 = vpack.c.b16 %v2614, %v2608
      %v3215 = vpack.c.b16 %v2621, %v2615
      %v3216 = vpack.c.b16 %v2622, %v2616
      %v3217 = vpack.c.b16 %v2623, %v2617
      %v3218 = vpack.c.b16 %v2624, %v2618
      %v3219 = vpack.c.b16 %v2625, %v2619
      %v3220 = vpack.c.b16 %v2626, %v2620
      %v3221 = vpack.c.b16 %v2633, %v2627
      %v3222 = vpack.c.b16 %v2634, %v2628
      %v3223 = vpack.c.b16 %v2635, %v2629
      %v3224 = vpack.c.b16 %v2636, %v2630
      %v3225 = vpack.c.b16 %v2637, %v2631
      %v3226 = vpack.c.b16 %v2638, %v2632
      %v3227 = vpack.c.b16 %v2645, %v2639
      %v3228 = vpack.c.b16 %v2646, %v2640
      %v3229 = vpack.c.b16 %v2647, %v2641
      %v3230 = vpack.c.b16 %v2648, %v2642
      %v3231 = vpack.c.b16 %v2649, %v2643
      %v3232 = vpack.c.b16 %v2650, %v2644
      %v3233 = vpack.c.b16 %v2657, %v2651
      %v3234 = vpack.c.b16 %v2658, %v2652
      %v3235 = vpack.c.b16 %v2659, %v2653
      %v3236 = vpack.c.b16 %v2660, %v2654
      %v3237 = vpack.c.b16 %v2661, %v2655
      %v3238 = vpack.c.b16 %v2662, %v2656
      %3815 = vmatprep.subr.bf16.mxu0 %v2664
      %3816 = vmatpush1.bf16.msra.mxu0 %v2663
      %3817 = vmatprep.subr.bf16.mxu0 %v2670
      %3818 = vmatpush1.bf16.msra.mxu0 %v2669
      %3819 = vmatprep.subr.bf16.mxu0 %v2676
      %3820 = vmatpush1.bf16.msra.mxu0 %v2675
      %3821 = vmatprep.subr.bf16.mxu0 %v2682
      %3822 = vmatpush1.bf16.msra.mxu0 %v2681
      %3823 = vmatprep.subr.bf16.mxu0 %v2688
      %3824 = vmatpush1.bf16.msra.mxu0 %v2687
      %3825 = vmatprep.subr.bf16.mxu0 %v2694
      %3826 = vmatpush1.bf16.msra.mxu0 %v2693
      %3827 = vmatprep.subr.bf16.mxu0 %v2700
      %3828 = vmatpush1.bf16.msra.mxu0 %v2699
      %3829 = vmatprep.subr.bf16.mxu0 %v2706
      %3830 = vmatpush1.bf16.msra.mxu0 %v2705
      %3831 = vmatprep.subr.bf16.mxu0 %v2712
      %3832 = vmatpush1.bf16.msra.mxu0 %v2711
      %3833 = vmatprep.subr.bf16.mxu0 %v2718
      %3834 = vmatpush1.bf16.msra.mxu0 %v2717
      %3835 = vmatprep.subr.bf16.mxu0 %v2724
      %3836 = vmatpush1.bf16.msra.mxu0 %v2723
      %3837 = vmatprep.subr.bf16.mxu0 %v2730
      %3838 = vmatpush1.bf16.msra.mxu0 %v2729
      %3839 = vmatprep.subr.bf16.mxu0 %v2736
      %3840 = vmatpush1.bf16.msra.mxu0 %v2735
      %3841 = vmatprep.subr.bf16.mxu0 %v2742
      %3842 = vmatpush1.bf16.msra.mxu0 %v2741
      %3843 = vmatprep.subr.bf16.mxu0 %v2748
      %3844 = vmatpush1.bf16.msra.mxu0 %v2747
      %3845 = vmatprep.subr.bf16.mxu0 %v2754
      %3846 = vmatpush1.bf16.msra.mxu0 %v2753
      %3847 = vmatprep.mubr.bf16.mxu0 %v912
      %3848 = vmatmul.mubr.bf16.gmra.mrb[0].mxu0 %v911
      %v3849 = vpop.f32.mrb[0].mxu0
      %v3850 = vadd.f32 %v866, %v3849
      %v3851 = vpop.f32.mrb[0].mxu0
      %v3852 = vadd.f32 %v870, %v3851
      %v3853 = vpop.f32.mrb[0].mxu0
      %v3854 = vpop.f32.mrb[0].mxu0
      %3855 = vdwg.mxu0
      %3856 = vmatprep.subr.bf16.mxu0 %v2760
      %3857 = vmatpush1.bf16.msra.mxu0 %v2759
      %3858 = vmatprep.subr.bf16.mxu0 %v2766
      %3859 = vmatpush1.bf16.msra.mxu0 %v2765
      %3860 = vmatprep.subr.bf16.mxu0 %v2772
      %3861 = vmatpush1.bf16.msra.mxu0 %v2771
      %3862 = vmatprep.subr.bf16.mxu0 %v2778
      %3863 = vmatpush1.bf16.msra.mxu0 %v2777
      %3864 = vmatprep.subr.bf16.mxu0 %v2784
      %3865 = vmatpush1.bf16.msra.mxu0 %v2783
      %3866 = vmatprep.subr.bf16.mxu0 %v2790
      %3867 = vmatpush1.bf16.msra.mxu0 %v2789
      %3868 = vmatprep.subr.bf16.mxu0 %v2796
      %3869 = vmatpush1.bf16.msra.mxu0 %v2795
      %3870 = vmatprep.subr.bf16.mxu0 %v2802
      %3871 = vmatpush1.bf16.msra.mxu0 %v2801
      %3872 = vmatprep.subr.bf16.mxu0 %v2808
      %3873 = vmatpush1.bf16.msra.mxu0 %v2807
      %3874 = vmatprep.subr.bf16.mxu0 %v2814
      %3875 = vmatpush1.bf16.msra.mxu0 %v2813
      %3876 = vmatprep.subr.bf16.mxu0 %v2820
      %3877 = vmatpush1.bf16.msra.mxu0 %v2819
      %3878 = vmatprep.subr.bf16.mxu0 %v2826
      %3879 = vmatpush1.bf16.msra.mxu0 %v2825
      %3880 = vmatprep.subr.bf16.mxu0 %v2832
      %3881 = vmatpush1.bf16.msra.mxu0 %v2831
      %3882 = vmatprep.subr.bf16.mxu0 %v2838
      %3883 = vmatpush1.bf16.msra.mxu0 %v2837
      %3884 = vmatprep.subr.bf16.mxu0 %v2844
      %3885 = vmatpush1.bf16.msra.mxu0 %v2843
      %3886 = vmatprep.subr.bf16.mxu0 %v2850
      %3887 = vmatpush1.bf16.msra.mxu0 %v2849
      %3888 = vmatprep.mubr.bf16.mxu0 %v914
      %3889 = vmatmul.mubr.bf16.gmra.mrb[0].mxu0 %v913
      %v3890 = vpop.f32.mrb[0].mxu0
      %v3891 = vadd.f32 %v3850, %v3890
      %v3892 = vpop.f32.mrb[0].mxu0
      %v3893 = vadd.f32 %v3852, %v3892
      %v3894 = vpop.f32.mrb[0].mxu0
      %v3895 = vpop.f32.mrb[0].mxu0
      %3896 = vdwg.mxu0
      %3897 = vmatprep.subr.bf16.mxu0 %v2856
      %3898 = vmatpush1.bf16.msra.mxu0 %v2855
      %3899 = vmatprep.subr.bf16.mxu0 %v2862
      %3900 = vmatpush1.bf16.msra.mxu0 %v2861
      %3901 = vmatprep.subr.bf16.mxu0 %v2868
      %3902 = vmatpush1.bf16.msra.mxu0 %v2867
      %3903 = vmatprep.subr.bf16.mxu0 %v2874
      %3904 = vmatpush1.bf16.msra.mxu0 %v2873
      %3905 = vmatprep.subr.bf16.mxu0 %v2880
      %3906 = vmatpush1.bf16.msra.mxu0 %v2879
      %3907 = vmatprep.subr.bf16.mxu0 %v2886
      %3908 = vmatpush1.bf16.msra.mxu0 %v2885
      %3909 = vmatprep.subr.bf16.mxu0 %v2892
      %3910 = vmatpush1.bf16.msra.mxu0 %v2891
      %3911 = vmatprep.subr.bf16.mxu0 %v2898
      %3912 = vmatpush1.bf16.msra.mxu0 %v2897
      %3913 = vmatprep.subr.bf16.mxu0 %v2904
      %3914 = vmatpush1.bf16.msra.mxu0 %v2903
      %3915 = vmatprep.subr.bf16.mxu0 %v2910
      %3916 = vmatpush1.bf16.msra.mxu0 %v2909
      %3917 = vmatprep.subr.bf16.mxu0 %v2916
      %3918 = vmatpush1.bf16.msra.mxu0 %v2915
      %3919 = vmatprep.subr.bf16.mxu0 %v2922
      %3920 = vmatpush1.bf16.msra.mxu0 %v2921
      %3921 = vmatprep.subr.bf16.mxu0 %v2928
      %3922 = vmatpush1.bf16.msra.mxu0 %v2927
      %3923 = vmatprep.subr.bf16.mxu0 %v2934
      %3924 = vmatpush1.bf16.msra.mxu0 %v2933
      %3925 = vmatprep.subr.bf16.mxu0 %v2940
      %3926 = vmatpush1.bf16.msra.mxu0 %v2939
      %3927 = vmatprep.subr.bf16.mxu0 %v2946
      %3928 = vmatpush1.bf16.msra.mxu0 %v2945
      %3929 = vmatprep.mubr.bf16.mxu0 %v916
      %3930 = vmatmul.mubr.bf16.gmra.mrb[0].mxu0 %v915
      %v3931 = vpop.f32.mrb[0].mxu0
      %v3932 = vadd.f32 %v3891, %v3931
      %v3933 = vpop.f32.mrb[0].mxu0
      %v3934 = vadd.f32 %v3893, %v3933
      %v3935 = vpop.f32.mrb[0].mxu0
      %v3936 = vpop.f32.mrb[0].mxu0
      %3937 = vdwg.mxu0
      %3938 = vmatprep.subr.bf16.mxu0 %v2952
      %3939 = vmatpush1.bf16.msra.mxu0 %v2951
      %3940 = vmatprep.subr.bf16.mxu0 %v2958
      %3941 = vmatpush1.bf16.msra.mxu0 %v2957
      %3942 = vmatprep.subr.bf16.mxu0 %v2964
      %3943 = vmatpush1.bf16.msra.mxu0 %v2963
      %3944 = vmatprep.subr.bf16.mxu0 %v2970
      %3945 = vmatpush1.bf16.msra.mxu0 %v2969
      %3946 = vmatprep.subr.bf16.mxu0 %v2976
      %3947 = vmatpush1.bf16.msra.mxu0 %v2975
      %3948 = vmatprep.subr.bf16.mxu0 %v2982
      %3949 = vmatpush1.bf16.msra.mxu0 %v2981
      %3950 = vmatprep.subr.bf16.mxu0 %v2988
      %3951 = vmatpush1.bf16.msra.mxu0 %v2987
      %3952 = vmatprep.subr.bf16.mxu0 %v2994
      %3953 = vmatpush1.bf16.msra.mxu0 %v2993
      %3954 = vmatprep.subr.bf16.mxu0 %v3000
      %3955 = vmatpush1.bf16.msra.mxu0 %v2999
      %3956 = vmatprep.subr.bf16.mxu0 %v3006
      %3957 = vmatpush1.bf16.msra.mxu0 %v3005
      %3958 = vmatprep.subr.bf16.mxu0 %v3012
      %3959 = vmatpush1.bf16.msra.mxu0 %v3011
      %3960 = vmatprep.subr.bf16.mxu0 %v3018
      %3961 = vmatpush1.bf16.msra.mxu0 %v3017
      %3962 = vmatprep.subr.bf16.mxu0 %v3024
      %3963 = vmatpush1.bf16.msra.mxu0 %v3023
      %3964 = vmatprep.subr.bf16.mxu0 %v3030
      %3965 = vmatpush1.bf16.msra.mxu0 %v3029
      %3966 = vmatprep.subr.bf16.mxu0 %v3036
      %3967 = vmatpush1.bf16.msra.mxu0 %v3035
      %3968 = vmatprep.subr.bf16.mxu0 %v3042
      %3969 = vmatpush1.bf16.msra.mxu0 %v3041
      %3970 = vmatprep.mubr.bf16.mxu0 %v918
      %3971 = vmatmul.mubr.bf16.gmra.mrb[0].mxu0 %v917
      %v3972 = vpop.f32.mrb[0].mxu0
      %v3973 = vadd.f32 %v3932, %v3972
      %v3974 = vpop.f32.mrb[0].mxu0
      %v3975 = vadd.f32 %v3934, %v3974
      %v3976 = vpop.f32.mrb[0].mxu0
      %v3977 = vpop.f32.mrb[0].mxu0
      %3978 = vdwg.mxu0
      %3979 = vmatprep.subr.bf16.mxu0 %v3048
      %3980 = vmatpush1.bf16.msra.mxu0 %v3047
      %3981 = vmatprep.subr.bf16.mxu0 %v3054
      %3982 = vmatpush1.bf16.msra.mxu0 %v3053
      %3983 = vmatprep.subr.bf16.mxu0 %v3060
      %3984 = vmatpush1.bf16.msra.mxu0 %v3059
      %3985 = vmatprep.subr.bf16.mxu0 %v3066
      %3986 = vmatpush1.bf16.msra.mxu0 %v3065
      %3987 = vmatprep.subr.bf16.mxu0 %v3072
      %3988 = vmatpush1.bf16.msra.mxu0 %v3071
      %3989 = vmatprep.subr.bf16.mxu0 %v3078
      %3990 = vmatpush1.bf16.msra.mxu0 %v3077
      %3991 = vmatprep.subr.bf16.mxu0 %v3084
      %3992 = vmatpush1.bf16.msra.mxu0 %v3083
      %3993 = vmatprep.subr.bf16.mxu0 %v3090
      %3994 = vmatpush1.bf16.msra.mxu0 %v3089
      %3995 = vmatprep.subr.bf16.mxu0 %v3096
      %3996 = vmatpush1.bf16.msra.mxu0 %v3095
      %3997 = vmatprep.subr.bf16.mxu0 %v3102
      %3998 = vmatpush1.bf16.msra.mxu0 %v3101
      %3999 = vmatprep.subr.bf16.mxu0 %v3108
      %4000 = vmatpush1.bf16.msra.mxu0 %v3107
      %4001 = vmatprep.subr.bf16.mxu0 %v3114
      %4002 = vmatpush1.bf16.msra.mxu0 %v3113
      %4003 = vmatprep.subr.bf16.mxu0 %v3120
      %4004 = vmatpush1.bf16.msra.mxu0 %v3119
      %4005 = vmatprep.subr.bf16.mxu0 %v3126
      %4006 = vmatpush1.bf16.msra.mxu0 %v3125
      %4007 = vmatprep.subr.bf16.mxu0 %v3132
      %4008 = vmatpush1.bf16.msra.mxu0 %v3131
      %4009 = vmatprep.subr.bf16.mxu0 %v3138
      %4010 = vmatpush1.bf16.msra.mxu0 %v3137
      %4011 = vmatprep.mubr.bf16.mxu0 %v920
      %4012 = vmatmul.mubr.bf16.gmra.mrb[0].mxu0 %v919
      %v4013 = vpop.f32.mrb[0].mxu0
      %v4014 = vadd.f32 %v3973, %v4013
      %v4015 = vpop.f32.mrb[0].mxu0
      %v4016 = vadd.f32 %v3975, %v4015
      %v4017 = vpop.f32.mrb[0].mxu0
      %v4018 = vpop.f32.mrb[0].mxu0
      %4019 = vdwg.mxu0
      %4020 = vmatprep.subr.bf16.mxu0 %v3144
      %4021 = vmatpush1.bf16.msra.mxu0 %v3143
      %4022 = vmatprep.subr.bf16.mxu0 %v3150
      %4023 = vmatpush1.bf16.msra.mxu0 %v3149
      %4024 = vmatprep.subr.bf16.mxu0 %v3156
      %4025 = vmatpush1.bf16.msra.mxu0 %v3155
      %4026 = vmatprep.subr.bf16.mxu0 %v3162
      %4027 = vmatpush1.bf16.msra.mxu0 %v3161
      %4028 = vmatprep.subr.bf16.mxu0 %v3168
      %4029 = vmatpush1.bf16.msra.mxu0 %v3167
      %4030 = vmatprep.subr.bf16.mxu0 %v3174
      %4031 = vmatpush1.bf16.msra.mxu0 %v3173
      %4032 = vmatprep.subr.bf16.mxu0 %v3180
      %4033 = vmatpush1.bf16.msra.mxu0 %v3179
      %4034 = vmatprep.subr.bf16.mxu0 %v3186
      %4035 = vmatpush1.bf16.msra.mxu0 %v3185
      %4036 = vmatprep.subr.bf16.mxu0 %v3192
      %4037 = vmatpush1.bf16.msra.mxu0 %v3191
      %4038 = vmatprep.subr.bf16.mxu0 %v3198
      %4039 = vmatpush1.bf16.msra.mxu0 %v3197
      %4040 = vmatprep.subr.bf16.mxu0 %v3204
      %4041 = vmatpush1.bf16.msra.mxu0 %v3203
      %4042 = vmatprep.subr.bf16.mxu0 %v3210
      %4043 = vmatpush1.bf16.msra.mxu0 %v3209
      %4044 = vmatprep.subr.bf16.mxu0 %v3216
      %4045 = vmatpush1.bf16.msra.mxu0 %v3215
      %4046 = vmatprep.subr.bf16.mxu0 %v3222
      %4047 = vmatpush1.bf16.msra.mxu0 %v3221
      %4048 = vmatprep.subr.bf16.mxu0 %v3228
      %4049 = vmatpush1.bf16.msra.mxu0 %v3227
      %4050 = vmatprep.subr.bf16.mxu0 %v3234
      %4051 = vmatpush1.bf16.msra.mxu0 %v3233
      %4052 = vmatprep.mubr.bf16.mxu0 %v922
      %4053 = vmatmul.mubr.bf16.gmra.mrb[0].mxu0 %v921
      %v4054 = vpop.f32.mrb[0].mxu0
      %v4055 = vadd.f32 %v4014, %v4054
      %v4056 = vpop.f32.mrb[0].mxu0
      %v4057 = vadd.f32 %v4016, %v4056
      %v4058 = vpop.f32.mrb[0].mxu0
      %v4059 = vpop.f32.mrb[0].mxu0
      %4060 = vdwg.mxu0
      %4061 = vmatprep.subr.bf16.mxu0 %v2666
      %4062 = vmatpush1.bf16.msra.mxu0 %v2665
      %4063 = vmatprep.subr.bf16.mxu0 %v2672
      %4064 = vmatpush1.bf16.msra.mxu0 %v2671
      %4065 = vmatprep.subr.bf16.mxu0 %v2678
      %4066 = vmatpush1.bf16.msra.mxu0 %v2677
      %4067 = vmatprep.subr.bf16.mxu0 %v2684
      %4068 = vmatpush1.bf16.msra.mxu0 %v2683
      %4069 = vmatprep.subr.bf16.mxu0 %v2690
      %4070 = vmatpush1.bf16.msra.mxu0 %v2689
      %4071 = vmatprep.subr.bf16.mxu0 %v2696
      %4072 = vmatpush1.bf16.msra.mxu0 %v2695
      %4073 = vmatprep.subr.bf16.mxu0 %v2702
      %4074 = vmatpush1.bf16.msra.mxu0 %v2701
      %4075 = vmatprep.subr.bf16.mxu0 %v2708
      %4076 = vmatpush1.bf16.msra.mxu0 %v2707
      %4077 = vmatprep.subr.bf16.mxu0 %v2714
      %4078 = vmatpush1.bf16.msra.mxu0 %v2713
      %4079 = vmatprep.subr.bf16.mxu0 %v2720
      %4080 = vmatpush1.bf16.msra.mxu0 %v2719
      %4081 = vmatprep.subr.bf16.mxu0 %v2726
      %4082 = vmatpush1.bf16.msra.mxu0 %v2725
      %4083 = vmatprep.subr.bf16.mxu0 %v2732
      %4084 = vmatpush1.bf16.msra.mxu0 %v2731
      %4085 = vmatprep.subr.bf16.mxu0 %v2738
      %4086 = vmatpush1.bf16.msra.mxu0 %v2737
      %4087 = vmatprep.subr.bf16.mxu0 %v2744
      %4088 = vmatpush1.bf16.msra.mxu0 %v2743
      %4089 = vmatprep.subr.bf16.mxu0 %v2750
      %4090 = vmatpush1.bf16.msra.mxu0 %v2749
      %4091 = vmatprep.subr.bf16.mxu0 %v2756
      %4092 = vmatpush1.bf16.msra.mxu0 %v2755
      %4093 = vmatprep.mubr.bf16.mxu0 %v912
      %4094 = vmatmul.mubr.bf16.gmra.mrb[0].mxu0 %v911
      %v4095 = vpop.f32.mrb[0].mxu0
      %v4096 = vadd.f32 %v874, %v4095
      %v4097 = vpop.f32.mrb[0].mxu0
      %v4098 = vadd.f32 %v878, %v4097
      %v4099 = vpop.f32.mrb[0].mxu0
      %v4100 = vpop.f32.mrb[0].mxu0
      %4101 = vdwg.mxu0
      %4102 = vmatprep.subr.bf16.mxu0 %v2762
      %4103 = vmatpush1.bf16.msra.mxu0 %v2761
      %4104 = vmatprep.subr.bf16.mxu0 %v2768
      %4105 = vmatpush1.bf16.msra.mxu0 %v2767
      %4106 = vmatprep.subr.bf16.mxu0 %v2774
      %4107 = vmatpush1.bf16.msra.mxu0 %v2773
      %4108 = vmatprep.subr.bf16.mxu0 %v2780
      %4109 = vmatpush1.bf16.msra.mxu0 %v2779
      %4110 = vmatprep.subr.bf16.mxu0 %v2786
      %4111 = vmatpush1.bf16.msra.mxu0 %v2785
      %4112 = vmatprep.subr.bf16.mxu0 %v2792
      %4113 = vmatpush1.bf16.msra.mxu0 %v2791
      %4114 = vmatprep.subr.bf16.mxu0 %v2798
      %4115 = vmatpush1.bf16.msra.mxu0 %v2797
      %4116 = vmatprep.subr.bf16.mxu0 %v2804
      %4117 = vmatpush1.bf16.msra.mxu0 %v2803
      %4118 = vmatprep.subr.bf16.mxu0 %v2810
      %4119 = vmatpush1.bf16.msra.mxu0 %v2809
      %4120 = vmatprep.subr.bf16.mxu0 %v2816
      %4121 = vmatpush1.bf16.msra.mxu0 %v2815
      %4122 = vmatprep.subr.bf16.mxu0 %v2822
      %4123 = vmatpush1.bf16.msra.mxu0 %v2821
      %4124 = vmatprep.subr.bf16.mxu0 %v2828
      %4125 = vmatpush1.bf16.msra.mxu0 %v2827
      %4126 = vmatprep.subr.bf16.mxu0 %v2834
      %4127 = vmatpush1.bf16.msra.mxu0 %v2833
      %4128 = vmatprep.subr.bf16.mxu0 %v2840
      %4129 = vmatpush1.bf16.msra.mxu0 %v2839
      %4130 = vmatprep.subr.bf16.mxu0 %v2846
      %4131 = vmatpush1.bf16.msra.mxu0 %v2845
      %4132 = vmatprep.subr.bf16.mxu0 %v2852
      %4133 = vmatpush1.bf16.msra.mxu0 %v2851
      %4134 = vmatprep.mubr.bf16.mxu0 %v914
      %4135 = vmatmul.mubr.bf16.gmra.mrb[0].mxu0 %v913
      %v4136 = vpop.f32.mrb[0].mxu0
      %v4137 = vadd.f32 %v4096, %v4136
      %v4138 = vpop.f32.mrb[0].mxu0
      %v4139 = vadd.f32 %v4098, %v4138
      %v4140 = vpop.f32.mrb[0].mxu0
      %v4141 = vpop.f32.mrb[0].mxu0
      %4142 = vdwg.mxu0
      %4143 = vmatprep.subr.bf16.mxu0 %v2858
      %4144 = vmatpush1.bf16.msra.mxu0 %v2857
      %4145 = vmatprep.subr.bf16.mxu0 %v2864
      %4146 = vmatpush1.bf16.msra.mxu0 %v2863
      %4147 = vmatprep.subr.bf16.mxu0 %v2870
      %4148 = vmatpush1.bf16.msra.mxu0 %v2869
      %4149 = vmatprep.subr.bf16.mxu0 %v2876
      %4150 = vmatpush1.bf16.msra.mxu0 %v2875
      %4151 = vmatprep.subr.bf16.mxu0 %v2882
      %4152 = vmatpush1.bf16.msra.mxu0 %v2881
      %4153 = vmatprep.subr.bf16.mxu0 %v2888
      %4154 = vmatpush1.bf16.msra.mxu0 %v2887
      %4155 = vmatprep.subr.bf16.mxu0 %v2894
      %4156 = vmatpush1.bf16.msra.mxu0 %v2893
      %4157 = vmatprep.subr.bf16.mxu0 %v2900
      %4158 = vmatpush1.bf16.msra.mxu0 %v2899
      %4159 = vmatprep.subr.bf16.mxu0 %v2906
      %4160 = vmatpush1.bf16.msra.mxu0 %v2905
      %4161 = vmatprep.subr.bf16.mxu0 %v2912
      %4162 = vmatpush1.bf16.msra.mxu0 %v2911
      %4163 = vmatprep.subr.bf16.mxu0 %v2918
      %4164 = vmatpush1.bf16.msra.mxu0 %v2917
      %4165 = vmatprep.subr.bf16.mxu0 %v2924
      %4166 = vmatpush1.bf16.msra.mxu0 %v2923
      %4167 = vmatprep.subr.bf16.mxu0 %v2930
      %4168 = vmatpush1.bf16.msra.mxu0 %v2929
      %4169 = vmatprep.subr.bf16.mxu0 %v2936
      %4170 = vmatpush1.bf16.msra.mxu0 %v2935
      %4171 = vmatprep.subr.bf16.mxu0 %v2942
      %4172 = vmatpush1.bf16.msra.mxu0 %v2941
      %4173 = vmatprep.subr.bf16.mxu0 %v2948
      %4174 = vmatpush1.bf16.msra.mxu0 %v2947
      %4175 = vmatprep.mubr.bf16.mxu0 %v916
      %4176 = vmatmul.mubr.bf16.gmra.mrb[0].mxu0 %v915
      %v4177 = vpop.f32.mrb[0].mxu0
      %v4178 = vadd.f32 %v4137, %v4177
      %v4179 = vpop.f32.mrb[0].mxu0
      %v4180 = vadd.f32 %v4139, %v4179
      %v4181 = vpop.f32.mrb[0].mxu0
      %v4182 = vpop.f32.mrb[0].mxu0
      %4183 = vdwg.mxu0
      %4184 = vmatprep.subr.bf16.mxu0 %v2954
      %4185 = vmatpush1.bf16.msra.mxu0 %v2953
      %4186 = vmatprep.subr.bf16.mxu0 %v2960
      %4187 = vmatpush1.bf16.msra.mxu0 %v2959
      %4188 = vmatprep.subr.bf16.mxu0 %v2966
      %4189 = vmatpush1.bf16.msra.mxu0 %v2965
      %4190 = vmatprep.subr.bf16.mxu0 %v2972
      %4191 = vmatpush1.bf16.msra.mxu0 %v2971
      %4192 = vmatprep.subr.bf16.mxu0 %v2978
      %4193 = vmatpush1.bf16.msra.mxu0 %v2977
      %4194 = vmatprep.subr.bf16.mxu0 %v2984
      %4195 = vmatpush1.bf16.msra.mxu0 %v2983
      %4196 = vmatprep.subr.bf16.mxu0 %v2990
      %4197 = vmatpush1.bf16.msra.mxu0 %v2989
      %4198 = vmatprep.subr.bf16.mxu0 %v2996
      %4199 = vmatpush1.bf16.msra.mxu0 %v2995
      %4200 = vmatprep.subr.bf16.mxu0 %v3002
      %4201 = vmatpush1.bf16.msra.mxu0 %v3001
      %4202 = vmatprep.subr.bf16.mxu0 %v3008
      %4203 = vmatpush1.bf16.msra.mxu0 %v3007
      %4204 = vmatprep.subr.bf16.mxu0 %v3014
      %4205 = vmatpush1.bf16.msra.mxu0 %v3013
      %4206 = vmatprep.subr.bf16.mxu0 %v3020
      %4207 = vmatpush1.bf16.msra.mxu0 %v3019
      %4208 = vmatprep.subr.bf16.mxu0 %v3026
      %4209 = vmatpush1.bf16.msra.mxu0 %v3025
      %4210 = vmatprep.subr.bf16.mxu0 %v3032
      %4211 = vmatpush1.bf16.msra.mxu0 %v3031
      %4212 = vmatprep.subr.bf16.mxu0 %v3038
      %4213 = vmatpush1.bf16.msra.mxu0 %v3037
      %4214 = vmatprep.subr.bf16.mxu0 %v3044
      %4215 = vmatpush1.bf16.msra.mxu0 %v3043
      %4216 = vmatprep.mubr.bf16.mxu0 %v918
      %4217 = vmatmul.mubr.bf16.gmra.mrb[0].mxu0 %v917
      %v4218 = vpop.f32.mrb[0].mxu0
      %v4219 = vadd.f32 %v4178, %v4218
      %v4220 = vpop.f32.mrb[0].mxu0
      %v4221 = vadd.f32 %v4180, %v4220
      %v4222 = vpop.f32.mrb[0].mxu0
      %v4223 = vpop.f32.mrb[0].mxu0
      %4224 = vdwg.mxu0
      %4225 = vmatprep.subr.bf16.mxu0 %v3050
      %4226 = vmatpush1.bf16.msra.mxu0 %v3049
      %4227 = vmatprep.subr.bf16.mxu0 %v3056
      %4228 = vmatpush1.bf16.msra.mxu0 %v3055
      %4229 = vmatprep.subr.bf16.mxu0 %v3062
      %4230 = vmatpush1.bf16.msra.mxu0 %v3061
      %4231 = vmatprep.subr.bf16.mxu0 %v3068
      %4232 = vmatpush1.bf16.msra.mxu0 %v3067
      %4233 = vmatprep.subr.bf16.mxu0 %v3074
      %4234 = vmatpush1.bf16.msra.mxu0 %v3073
      %4235 = vmatprep.subr.bf16.mxu0 %v3080
      %4236 = vmatpush1.bf16.msra.mxu0 %v3079
      %4237 = vmatprep.subr.bf16.mxu0 %v3086
      %4238 = vmatpush1.bf16.msra.mxu0 %v3085
      %4239 = vmatprep.subr.bf16.mxu0 %v3092
      %4240 = vmatpush1.bf16.msra.mxu0 %v3091
      %4241 = vmatprep.subr.bf16.mxu0 %v3098
      %4242 = vmatpush1.bf16.msra.mxu0 %v3097
      %4243 = vmatprep.subr.bf16.mxu0 %v3104
      %4244 = vmatpush1.bf16.msra.mxu0 %v3103
      %4245 = vmatprep.subr.bf16.mxu0 %v3110
      %4246 = vmatpush1.bf16.msra.mxu0 %v3109
      %4247 = vmatprep.subr.bf16.mxu0 %v3116
      %4248 = vmatpush1.bf16.msra.mxu0 %v3115
      %4249 = vmatprep.subr.bf16.mxu0 %v3122
      %4250 = vmatpush1.bf16.msra.mxu0 %v3121
      %4251 = vmatprep.subr.bf16.mxu0 %v3128
      %4252 = vmatpush1.bf16.msra.mxu0 %v3127
      %4253 = vmatprep.subr.bf16.mxu0 %v3134
      %4254 = vmatpush1.bf16.msra.mxu0 %v3133
      %4255 = vmatprep.subr.bf16.mxu0 %v3140
      %4256 = vmatpush1.bf16.msra.mxu0 %v3139
      %4257 = vmatprep.mubr.bf16.mxu0 %v920
      %4258 = vmatmul.mubr.bf16.gmra.mrb[0].mxu0 %v919
      %v4259 = vpop.f32.mrb[0].mxu0
      %v4260 = vadd.f32 %v4219, %v4259
      %v4261 = vpop.f32.mrb[0].mxu0
      %v4262 = vadd.f32 %v4221, %v4261
      %v4263 = vpop.f32.mrb[0].mxu0
      %v4264 = vpop.f32.mrb[0].mxu0
      %4265 = vdwg.mxu0
      %4266 = vmatprep.subr.bf16.mxu0 %v3146
      %4267 = vmatpush1.bf16.msra.mxu0 %v3145
      %4268 = vmatprep.subr.bf16.mxu0 %v3152
      %4269 = vmatpush1.bf16.msra.mxu0 %v3151
      %4270 = vmatprep.subr.bf16.mxu0 %v3158
      %4271 = vmatpush1.bf16.msra.mxu0 %v3157
      %4272 = vmatprep.subr.bf16.mxu0 %v3164
      %4273 = vmatpush1.bf16.msra.mxu0 %v3163
      %4274 = vmatprep.subr.bf16.mxu0 %v3170
      %4275 = vmatpush1.bf16.msra.mxu0 %v3169
      %4276 = vmatprep.subr.bf16.mxu0 %v3176
      %4277 = vmatpush1.bf16.msra.mxu0 %v3175
      %4278 = vmatprep.subr.bf16.mxu0 %v3182
      %4279 = vmatpush1.bf16.msra.mxu0 %v3181
      %4280 = vmatprep.subr.bf16.mxu0 %v3188
      %4281 = vmatpush1.bf16.msra.mxu0 %v3187
      %4282 = vmatprep.subr.bf16.mxu0 %v3194
      %4283 = vmatpush1.bf16.msra.mxu0 %v3193
      %4284 = vmatprep.subr.bf16.mxu0 %v3200
      %4285 = vmatpush1.bf16.msra.mxu0 %v3199
      %4286 = vmatprep.subr.bf16.mxu0 %v3206
      %4287 = vmatpush1.bf16.msra.mxu0 %v3205
      %4288 = vmatprep.subr.bf16.mxu0 %v3212
      %4289 = vmatpush1.bf16.msra.mxu0 %v3211
      %4290 = vmatprep.subr.bf16.mxu0 %v3218
      %4291 = vmatpush1.bf16.msra.mxu0 %v3217
      %4292 = vmatprep.subr.bf16.mxu0 %v3224
      %4293 = vmatpush1.bf16.msra.mxu0 %v3223
      %4294 = vmatprep.subr.bf16.mxu0 %v3230
      %4295 = vmatpush1.bf16.msra.mxu0 %v3229
      %4296 = vmatprep.subr.bf16.mxu0 %v3236
      %4297 = vmatpush1.bf16.msra.mxu0 %v3235
      %4298 = vmatprep.mubr.bf16.mxu0 %v922
      %4299 = vmatmul.mubr.bf16.gmra.mrb[0].mxu0 %v921
      %v4300 = vpop.f32.mrb[0].mxu0
      %v4301 = vadd.f32 %v4260, %v4300
      %v4302 = vpop.f32.mrb[0].mxu0
      %v4303 = vadd.f32 %v4262, %v4302
      %v4304 = vpop.f32.mrb[0].mxu0
      %v4305 = vpop.f32.mrb[0].mxu0
      %4306 = vdwg.mxu0
      %4307 = vmatprep.subr.bf16.mxu0 %v2668
      %4308 = vmatpush1.bf16.msra.mxu0 %v2667
      %4309 = vmatprep.subr.bf16.mxu0 %v2674
      %4310 = vmatpush1.bf16.msra.mxu0 %v2673
      %4311 = vmatprep.subr.bf16.mxu0 %v2680
      %4312 = vmatpush1.bf16.msra.mxu0 %v2679
      %4313 = vmatprep.subr.bf16.mxu0 %v2686
      %4314 = vmatpush1.bf16.msra.mxu0 %v2685
      %4315 = vmatprep.subr.bf16.mxu0 %v2692
      %4316 = vmatpush1.bf16.msra.mxu0 %v2691
      %4317 = vmatprep.subr.bf16.mxu0 %v2698
      %4318 = vmatpush1.bf16.msra.mxu0 %v2697
      %4319 = vmatprep.subr.bf16.mxu0 %v2704
      %4320 = vmatpush1.bf16.msra.mxu0 %v2703
      %4321 = vmatprep.subr.bf16.mxu0 %v2710
      %4322 = vmatpush1.bf16.msra.mxu0 %v2709
      %4323 = vmatprep.subr.bf16.mxu0 %v2716
      %4324 = vmatpush1.bf16.msra.mxu0 %v2715
      %4325 = vmatprep.subr.bf16.mxu0 %v2722
      %4326 = vmatpush1.bf16.msra.mxu0 %v2721
      %4327 = vmatprep.subr.bf16.mxu0 %v2728
      %4328 = vmatpush1.bf16.msra.mxu0 %v2727
      %4329 = vmatprep.subr.bf16.mxu0 %v2734
      %4330 = vmatpush1.bf16.msra.mxu0 %v2733
      %4331 = vmatprep.subr.bf16.mxu0 %v2740
      %4332 = vmatpush1.bf16.msra.mxu0 %v2739
      %4333 = vmatprep.subr.bf16.mxu0 %v2746
      %4334 = vmatpush1.bf16.msra.mxu0 %v2745
      %4335 = vmatprep.subr.bf16.mxu0 %v2752
      %4336 = vmatpush1.bf16.msra.mxu0 %v2751
      %4337 = vmatprep.subr.bf16.mxu0 %v2758
      %4338 = vmatpush1.bf16.msra.mxu0 %v2757
      %4339 = vmatprep.mubr.bf16.mxu0 %v912
      %4340 = vmatmul.mubr.bf16.gmra.mrb[0].mxu0 %v911
      %v4341 = vpop.f32.mrb[0].mxu0
      %v4342 = vadd.f32 %v882, %v4341
      %v4343 = vpop.f32.mrb[0].mxu0
      %v4344 = vadd.f32 %v886, %v4343
      %v4345 = vpop.f32.mrb[0].mxu0
      %v4346 = vpop.f32.mrb[0].mxu0
      %4347 = vdwg.mxu0
      %4348 = vmatprep.subr.bf16.mxu0 %v2764
      %4349 = vmatpush1.bf16.msra.mxu0 %v2763
      %4350 = vmatprep.subr.bf16.mxu0 %v2770
      %4351 = vmatpush1.bf16.msra.mxu0 %v2769
      %4352 = vmatprep.subr.bf16.mxu0 %v2776
      %4353 = vmatpush1.bf16.msra.mxu0 %v2775
      %4354 = vmatprep.subr.bf16.mxu0 %v2782
      %4355 = vmatpush1.bf16.msra.mxu0 %v2781
      %4356 = vmatprep.subr.bf16.mxu0 %v2788
      %4357 = vmatpush1.bf16.msra.mxu0 %v2787
      %4358 = vmatprep.subr.bf16.mxu0 %v2794
      %4359 = vmatpush1.bf16.msra.mxu0 %v2793
      %4360 = vmatprep.subr.bf16.mxu0 %v2800
      %4361 = vmatpush1.bf16.msra.mxu0 %v2799
      %4362 = vmatprep.subr.bf16.mxu0 %v2806
      %4363 = vmatpush1.bf16.msra.mxu0 %v2805
      %4364 = vmatprep.subr.bf16.mxu0 %v2812
      %4365 = vmatpush1.bf16.msra.mxu0 %v2811
      %4366 = vmatprep.subr.bf16.mxu0 %v2818
      %4367 = vmatpush1.bf16.msra.mxu0 %v2817
      %4368 = vmatprep.subr.bf16.mxu0 %v2824
      %4369 = vmatpush1.bf16.msra.mxu0 %v2823
      %4370 = vmatprep.subr.bf16.mxu0 %v2830
      %4371 = vmatpush1.bf16.msra.mxu0 %v2829
      %4372 = vmatprep.subr.bf16.mxu0 %v2836
      %4373 = vmatpush1.bf16.msra.mxu0 %v2835
      %4374 = vmatprep.subr.bf16.mxu0 %v2842
      %4375 = vmatpush1.bf16.msra.mxu0 %v2841
      %4376 = vmatprep.subr.bf16.mxu0 %v2848
      %4377 = vmatpush1.bf16.msra.mxu0 %v2847
      %4378 = vmatprep.subr.bf16.mxu0 %v2854
      %4379 = vmatpush1.bf16.msra.mxu0 %v2853
      %4380 = vmatprep.mubr.bf16.mxu0 %v914
      %4381 = vmatmul.mubr.bf16.gmra.mrb[0].mxu0 %v913
      %v4382 = vpop.f32.mrb[0].mxu0
      %v4383 = vadd.f32 %v4342, %v4382
      %v4384 = vpop.f32.mrb[0].mxu0
      %v4385 = vadd.f32 %v4344, %v4384
      %v4386 = vpop.f32.mrb[0].mxu0
      %v4387 = vpop.f32.mrb[0].mxu0
      %4388 = vdwg.mxu0
      %4389 = vmatprep.subr.bf16.mxu0 %v2860
      %4390 = vmatpush1.bf16.msra.mxu0 %v2859
      %4391 = vmatprep.subr.bf16.mxu0 %v2866
      %4392 = vmatpush1.bf16.msra.mxu0 %v2865
      %4393 = vmatprep.subr.bf16.mxu0 %v2872
      %4394 = vmatpush1.bf16.msra.mxu0 %v2871
      %4395 = vmatprep.subr.bf16.mxu0 %v2878
      %4396 = vmatpush1.bf16.msra.mxu0 %v2877
      %4397 = vmatprep.subr.bf16.mxu0 %v2884
      %4398 = vmatpush1.bf16.msra.mxu0 %v2883
      %4399 = vmatprep.subr.bf16.mxu0 %v2890
      %4400 = vmatpush1.bf16.msra.mxu0 %v2889
      %4401 = vmatprep.subr.bf16.mxu0 %v2896
      %4402 = vmatpush1.bf16.msra.mxu0 %v2895
      %4403 = vmatprep.subr.bf16.mxu0 %v2902
      %4404 = vmatpush1.bf16.msra.mxu0 %v2901
      %4405 = vmatprep.subr.bf16.mxu0 %v2908
      %4406 = vmatpush1.bf16.msra.mxu0 %v2907
      %4407 = vmatprep.subr.bf16.mxu0 %v2914
      %4408 = vmatpush1.bf16.msra.mxu0 %v2913
      %4409 = vmatprep.subr.bf16.mxu0 %v2920
      %4410 = vmatpush1.bf16.msra.mxu0 %v2919
      %4411 = vmatprep.subr.bf16.mxu0 %v2926
      %4412 = vmatpush1.bf16.msra.mxu0 %v2925
      %4413 = vmatprep.subr.bf16.mxu0 %v2932
      %4414 = vmatpush1.bf16.msra.mxu0 %v2931
      %4415 = vmatprep.subr.bf16.mxu0 %v2938
      %4416 = vmatpush1.bf16.msra.mxu0 %v2937
      %4417 = vmatprep.subr.bf16.mxu0 %v2944
      %4418 = vmatpush1.bf16.msra.mxu0 %v2943
      %4419 = vmatprep.subr.bf16.mxu0 %v2950
      %4420 = vmatpush1.bf16.msra.mxu0 %v2949
      %4421 = vmatprep.mubr.bf16.mxu0 %v916
      %4422 = vmatmul.mubr.bf16.gmra.mrb[0].mxu0 %v915
      %v4423 = vpop.f32.mrb[0].mxu0
      %v4424 = vadd.f32 %v4383, %v4423
      %v4425 = vpop.f32.mrb[0].mxu0
      %v4426 = vadd.f32 %v4385, %v4425
      %v4427 = vpop.f32.mrb[0].mxu0
      %v4428 = vpop.f32.mrb[0].mxu0
      %4429 = vdwg.mxu0
      %4430 = vmatprep.subr.bf16.mxu0 %v2956
      %4431 = vmatpush1.bf16.msra.mxu0 %v2955
      %4432 = vmatprep.subr.bf16.mxu0 %v2962
      %4433 = vmatpush1.bf16.msra.mxu0 %v2961
      %4434 = vmatprep.subr.bf16.mxu0 %v2968
      %4435 = vmatpush1.bf16.msra.mxu0 %v2967
      %4436 = vmatprep.subr.bf16.mxu0 %v2974
      %4437 = vmatpush1.bf16.msra.mxu0 %v2973
      %4438 = vmatprep.subr.bf16.mxu0 %v2980
      %4439 = vmatpush1.bf16.msra.mxu0 %v2979
      %4440 = vmatprep.subr.bf16.mxu0 %v2986
      %4441 = vmatpush1.bf16.msra.mxu0 %v2985
      %4442 = vmatprep.subr.bf16.mxu0 %v2992
      %4443 = vmatpush1.bf16.msra.mxu0 %v2991
      %4444 = vmatprep.subr.bf16.mxu0 %v2998
      %4445 = vmatpush1.bf16.msra.mxu0 %v2997
      %4446 = vmatprep.subr.bf16.mxu0 %v3004
      %4447 = vmatpush1.bf16.msra.mxu0 %v3003
      %4448 = vmatprep.subr.bf16.mxu0 %v3010
      %4449 = vmatpush1.bf16.msra.mxu0 %v3009
      %4450 = vmatprep.subr.bf16.mxu0 %v3016
      %4451 = vmatpush1.bf16.msra.mxu0 %v3015
      %4452 = vmatprep.subr.bf16.mxu0 %v3022
      %4453 = vmatpush1.bf16.msra.mxu0 %v3021
      %4454 = vmatprep.subr.bf16.mxu0 %v3028
      %4455 = vmatpush1.bf16.msra.mxu0 %v3027
      %4456 = vmatprep.subr.bf16.mxu0 %v3034
      %4457 = vmatpush1.bf16.msra.mxu0 %v3033
      %4458 = vmatprep.subr.bf16.mxu0 %v3040
      %4459 = vmatpush1.bf16.msra.mxu0 %v3039
      %4460 = vmatprep.subr.bf16.mxu0 %v3046
      %4461 = vmatpush1.bf16.msra.mxu0 %v3045
      %4462 = vmatprep.mubr.bf16.mxu0 %v918
      %4463 = vmatmul.mubr.bf16.gmra.mrb[0].mxu0 %v917
      %v4464 = vpop.f32.mrb[0].mxu0
      %v4465 = vadd.f32 %v4424, %v4464
      %v4466 = vpop.f32.mrb[0].mxu0
      %v4467 = vadd.f32 %v4426, %v4466
      %v4468 = vpop.f32.mrb[0].mxu0
      %v4469 = vpop.f32.mrb[0].mxu0
      %4470 = vdwg.mxu0
      %4471 = vmatprep.subr.bf16.mxu0 %v3052
      %4472 = vmatpush1.bf16.msra.mxu0 %v3051
      %4473 = vmatprep.subr.bf16.mxu0 %v3058
      %4474 = vmatpush1.bf16.msra.mxu0 %v3057
      %4475 = vmatprep.subr.bf16.mxu0 %v3064
      %4476 = vmatpush1.bf16.msra.mxu0 %v3063
      %4477 = vmatprep.subr.bf16.mxu0 %v3070
      %4478 = vmatpush1.bf16.msra.mxu0 %v3069
      %4479 = vmatprep.subr.bf16.mxu0 %v3076
      %4480 = vmatpush1.bf16.msra.mxu0 %v3075
      %4481 = vmatprep.subr.bf16.mxu0 %v3082
      %4482 = vmatpush1.bf16.msra.mxu0 %v3081
      %4483 = vmatprep.subr.bf16.mxu0 %v3088
      %4484 = vmatpush1.bf16.msra.mxu0 %v3087
      %4485 = vmatprep.subr.bf16.mxu0 %v3094
      %4486 = vmatpush1.bf16.msra.mxu0 %v3093
      %4487 = vmatprep.subr.bf16.mxu0 %v3100
      %4488 = vmatpush1.bf16.msra.mxu0 %v3099
      %4489 = vmatprep.subr.bf16.mxu0 %v3106
      %4490 = vmatpush1.bf16.msra.mxu0 %v3105
      %4491 = vmatprep.subr.bf16.mxu0 %v3112
      %4492 = vmatpush1.bf16.msra.mxu0 %v3111
      %4493 = vmatprep.subr.bf16.mxu0 %v3118
      %4494 = vmatpush1.bf16.msra.mxu0 %v3117
      %4495 = vmatprep.subr.bf16.mxu0 %v3124
      %4496 = vmatpush1.bf16.msra.mxu0 %v3123
      %4497 = vmatprep.subr.bf16.mxu0 %v3130
      %4498 = vmatpush1.bf16.msra.mxu0 %v3129
      %4499 = vmatprep.subr.bf16.mxu0 %v3136
      %4500 = vmatpush1.bf16.msra.mxu0 %v3135
      %4501 = vmatprep.subr.bf16.mxu0 %v3142
      %4502 = vmatpush1.bf16.msra.mxu0 %v3141
      %4503 = vmatprep.mubr.bf16.mxu0 %v920
      %4504 = vmatmul.mubr.bf16.gmra.mrb[0].mxu0 %v919
      %v4505 = vpop.f32.mrb[0].mxu0
      %v4506 = vadd.f32 %v4465, %v4505
      %v4507 = vpop.f32.mrb[0].mxu0
      %v4508 = vadd.f32 %v4467, %v4507
      %v4509 = vpop.f32.mrb[0].mxu0
      %v4510 = vpop.f32.mrb[0].mxu0
      %4511 = vdwg.mxu0
      %4512 = vmatprep.subr.bf16.mxu0 %v3148
      %4513 = vmatpush1.bf16.msra.mxu0 %v3147
      %4514 = vmatprep.subr.bf16.mxu0 %v3154
      %4515 = vmatpush1.bf16.msra.mxu0 %v3153
      %4516 = vmatprep.subr.bf16.mxu0 %v3160
      %4517 = vmatpush1.bf16.msra.mxu0 %v3159
      %4518 = vmatprep.subr.bf16.mxu0 %v3166
      %4519 = vmatpush1.bf16.msra.mxu0 %v3165
      %4520 = vmatprep.subr.bf16.mxu0 %v3172
      %4521 = vmatpush1.bf16.msra.mxu0 %v3171
      %4522 = vmatprep.subr.bf16.mxu0 %v3178
      %4523 = vmatpush1.bf16.msra.mxu0 %v3177
      %4524 = vmatprep.subr.bf16.mxu0 %v3184
      %4525 = vmatpush1.bf16.msra.mxu0 %v3183
      %4526 = vmatprep.subr.bf16.mxu0 %v3190
      %4527 = vmatpush1.bf16.msra.mxu0 %v3189
      %4528 = vmatprep.subr.bf16.mxu0 %v3196
      %4529 = vmatpush1.bf16.msra.mxu0 %v3195
      %4530 = vmatprep.subr.bf16.mxu0 %v3202
      %4531 = vmatpush1.bf16.msra.mxu0 %v3201
      %4532 = vmatprep.subr.bf16.mxu0 %v3208
      %4533 = vmatpush1.bf16.msra.mxu0 %v3207
      %4534 = vmatprep.subr.bf16.mxu0 %v3214
      %4535 = vmatpush1.bf16.msra.mxu0 %v3213
      %4536 = vmatprep.subr.bf16.mxu0 %v3220
      %4537 = vmatpush1.bf16.msra.mxu0 %v3219
      %4538 = vmatprep.subr.bf16.mxu0 %v3226
      %4539 = vmatpush1.bf16.msra.mxu0 %v3225
      %4540 = vmatprep.subr.bf16.mxu0 %v3232
      %4541 = vmatpush1.bf16.msra.mxu0 %v3231
      %4542 = vmatprep.subr.bf16.mxu0 %v3238
      %4543 = vmatpush1.bf16.msra.mxu0 %v3237
      %4544 = vmatprep.mubr.bf16.mxu0 %v922
      %4545 = vmatmul.mubr.bf16.gmra.mrb[0].mxu0 %v921
      %v4546 = vpop.f32.mrb[0].mxu0
      %v4547 = vadd.f32 %v4506, %v4546
      %v4548 = vpop.f32.mrb[0].mxu0
      %v4549 = vadd.f32 %v4508, %v4548
      %v4550 = vpop.f32.mrb[0].mxu0
      %v4551 = vpop.f32.mrb[0].mxu0
      %4552 = vdwg.mxu0
      %v4553 = vmul.f32 %v4055, 0.5
      %v4554 = vmul.f32 %v4057, 0.5
      %v4555 = vmul.f32 %v4301, 0.5
      %v4556 = vmul.f32 %v4303, 0.5
      %v4557 = vmul.f32 %v4547, 0.5
      %v4558 = vmul.f32 %v4549, 0.5
      %v4559 = vmul.f32 %v4055, 0.70710677
      %v4560 = vmul.f32 %v4057, 0.70710677
      %v4561 = vmul.f32 %v4301, 0.70710677
      %v4562 = vmul.f32 %v4303, 0.70710677
      %v4563 = vmul.f32 %v4547, 0.70710677
      %v4564 = vmul.f32 %v4549, 0.70710677
      %v4565 = verf.f32.pop %v4559
      %v4566 = verf.f32.pop %v4560
      %v4567 = verf.f32.pop %v4561
      %v4568 = verf.f32.pop %v4562
      %v4569 = verf.f32.pop %v4563
      %v4570 = verf.f32.pop %v4564
      %v4571 = vadd.f32 %v4565, 1.0
      %v4572 = vadd.f32 %v4566, 1.0
      %v4573 = vadd.f32 %v4567, 1.0
      %v4574 = vadd.f32 %v4568, 1.0
      %v4575 = vadd.f32 %v4569, 1.0
      %v4576 = vadd.f32 %v4570, 1.0
      %v4577 = vmul.f32 %v4553, %v4571
      %v4578 = vmul.f32 %v4554, %v4572
      %v4579 = vmul.f32 %v4555, %v4573
      %v4580 = vmul.f32 %v4556, %v4574
      %v4581 = vmul.f32 %v4557, %v4575
      %v4582 = vmul.f32 %v4558, %v4576
      %v4583 = vadd.f32 %v4577, %v4578
      %v4584 = vadd.f32 %v4583, %v4579
      %v4585 = vadd.f32 %v4584, %v4580
      %v4586 = vadd.f32 %v4585, %v4581
      %v4587 = vadd.f32 %v4586, %v4582
      %4588 = vadd.xlane.f32.xlu0 %v4587
      %v4589 = vpop.xlane.xlu0 %4588
      %v4590 = vrcp.pop 768.0
      %v4591 = vmul.f32 %v4589, %v4590
      %v4592 = vsub.f32 %v4577, %v4591
      %v4593 = vsub.f32 %v4578, %v4591
      %v4594 = vsub.f32 %v4579, %v4591
      %v4595 = vsub.f32 %v4580, %v4591
      %v4596 = vsub.f32 %v4581, %v4591
      %v4597 = vsub.f32 %v4582, %v4591
      %v4598 = vmul.f32 %v4592, %v4592
      %v4599 = vmul.f32 %v4593, %v4593
      %v4600 = vmul.f32 %v4594, %v4594
      %v4601 = vmul.f32 %v4595, %v4595
      %v4602 = vmul.f32 %v4596, %v4596
      %v4603 = vmul.f32 %v4597, %v4597
      %v4604 = vadd.f32 %v4598, %v4599
      %v4605 = vadd.f32 %v4604, %v4600
      %v4606 = vadd.f32 %v4605, %v4601
      %v4607 = vadd.f32 %v4606, %v4602
      %v4608 = vadd.f32 %v4607, %v4603
      %4609 = vadd.xlane.f32.xlu0 %v4608
      %v4610 = vpop.xlane.xlu0 %4609
      %v4611 = vmul.f32 %v4610, %v4590
      %v4612 = vadd.f32 %v4611, 1e-05
      %v4613 = vrsqrt.pop %v4612
      %v4614 = vmul.f32 %v4592, %v4613
      %v4615 = vmul.f32 %v4593, %v4613
      %v4616 = vmul.f32 %v4594, %v4613
      %v4617 = vmul.f32 %v4595, %v4613
      %v4618 = vmul.f32 %v4596, %v4613
      %v4619 = vmul.f32 %v4597, %v4613
      %v4620 = vld [vmem:[%s3] sm:$0x3f]
      %v4622 = vlaneseq
      %v4623 = vshrl.u32 %v4622, 7
      %v4624 = vsub.s32 0, %v4623
      %v4625 = vrot.slane %v4620, %v4624
      %v4626 = vlaneseq
      %v4627 = vshrl.u32 %v4626, 7
      %v4628 = vsub.s32 1, %v4627
      %v4629 = vrot.slane %v4620, %v4628
      %v4630 = vlaneseq
      %v4631 = vshrl.u32 %v4630, 7
      %v4632 = vsub.s32 2, %v4631
      %v4633 = vrot.slane %v4620, %v4632
      %v4634 = vlaneseq
      %v4635 = vshrl.u32 %v4634, 7
      %v4636 = vsub.s32 3, %v4635
      %v4637 = vrot.slane %v4620, %v4636
      %v4638 = vlaneseq
      %v4639 = vshrl.u32 %v4638, 7
      %v4640 = vsub.s32 4, %v4639
      %v4641 = vrot.slane %v4620, %v4640
      %v4642 = vlaneseq
      %v4643 = vshrl.u32 %v4642, 7
      %v4644 = vsub.s32 5, %v4643
      %v4645 = vrot.slane %v4620, %v4644
      %v4652 = vmul.f32 %v4614, %v4625
      %v4653 = vmul.f32 %v4615, %v4629
      %v4654 = vmul.f32 %v4616, %v4633
      %v4655 = vmul.f32 %v4617, %v4637
      %v4656 = vmul.f32 %v4618, %v4641
      %v4657 = vmul.f32 %v4619, %v4645
      %v4658 = vld [vmem:[%s4] sm:$0x3f]
      %v4660 = vlaneseq
      %v4661 = vshrl.u32 %v4660, 7
      %v4662 = vsub.s32 0, %v4661
      %v4663 = vrot.slane %v4658, %v4662
      %v4664 = vlaneseq
      %v4665 = vshrl.u32 %v4664, 7
      %v4666 = vsub.s32 1, %v4665
      %v4667 = vrot.slane %v4658, %v4666
      %v4668 = vlaneseq
      %v4669 = vshrl.u32 %v4668, 7
      %v4670 = vsub.s32 2, %v4669
      %v4671 = vrot.slane %v4658, %v4670
      %v4672 = vlaneseq
      %v4673 = vshrl.u32 %v4672, 7
      %v4674 = vsub.s32 3, %v4673
      %v4675 = vrot.slane %v4658, %v4674
      %v4676 = vlaneseq
      %v4677 = vshrl.u32 %v4676, 7
      %v4678 = vsub.s32 4, %v4677
      %v4679 = vrot.slane %v4658, %v4678
      %v4680 = vlaneseq
      %v4681 = vshrl.u32 %v4680, 7
      %v4682 = vsub.s32 5, %v4681
      %v4683 = vrot.slane %v4658, %v4682
      %v4690 = vadd.f32 %v4652, %v4663
      %v4691 = vadd.f32 %v4653, %v4667
      %v4692 = vadd.f32 %v4654, %v4671
      %v4693 = vadd.f32 %v4655, %v4675
      %v4694 = vadd.f32 %v4656, %v4679
      %v4695 = vadd.f32 %v4657, %v4683
      %v4696 = vpack.c.bf16 %v4690, %v4690
      %v4697 = vpack.c.bf16 %v4691, %v4691
      %v4698 = vpack.c.bf16 %v4692, %v4692
      %v4699 = vpack.c.bf16 %v4693, %v4693
      %v4700 = vpack.c.bf16 %v4694, %v4694
      %v4701 = vpack.c.bf16 %v4695, %v4695
      %v4702 = vld [vmem:[%s5] sm:$0xff]
      %v4703 = vld [vmem:[%s5 + $0x8] sm:$0xff]
      %v4704 = vld [vmem:[%s5 + $0x10] sm:$0xff]
      %v4705 = vld [vmem:[%s5 + $0x18] sm:$0xff]
      %v4706 = vld [vmem:[%s5 + $0x20] sm:$0xff]
      %v4707 = vld [vmem:[%s5 + $0x28] sm:$0xff]
      %v4708 = vld [vmem:[%s5 + $0x30] sm:$0xff]
      %v4709 = vld [vmem:[%s5 + $0x38] sm:$0xff]
      %v4710 = vld [vmem:[%s5 + $0x40] sm:$0xff]
      %v4711 = vld [vmem:[%s5 + $0x48] sm:$0xff]
      %v4712 = vld [vmem:[%s5 + $0x50] sm:$0xff]
      %v4713 = vld [vmem:[%s5 + $0x58] sm:$0xff]
      %v4714 = vld [vmem:[%s5 + $0x60] sm:$0xff]
      %v4715 = vld [vmem:[%s5 + $0x68] sm:$0xff]
      %v4716 = vld [vmem:[%s5 + $0x70] sm:$0xff]
      %v4717 = vld [vmem:[%s5 + $0x78] sm:$0xff]
      %v4718 = vld [vmem:[%s5 + $0x80] sm:$0xff]
      %v4719 = vld [vmem:[%s5 + $0x88] sm:$0xff]
      %v4720 = vld [vmem:[%s5 + $0x90] sm:$0xff]
      %v4721 = vld [vmem:[%s5 + $0x98] sm:$0xff]
      %v4722 = vld [vmem:[%s5 + $0xa0] sm:$0xff]
      %v4723 = vld [vmem:[%s5 + $0xa8] sm:$0xff]
      %v4724 = vld [vmem:[%s5 + $0xb0] sm:$0xff]
      %v4725 = vld [vmem:[%s5 + $0xb8] sm:$0xff]
      %v4726 = vld [vmem:[%s5 + $0xc0] sm:$0xff]
      %v4727 = vld [vmem:[%s5 + $0xc8] sm:$0xff]
      %v4728 = vld [vmem:[%s5 + $0xd0] sm:$0xff]
      %v4729 = vld [vmem:[%s5 + $0xd8] sm:$0xff]
      %v4730 = vld [vmem:[%s5 + $0xe0] sm:$0xff]
      %v4731 = vld [vmem:[%s5 + $0xe8] sm:$0xff]
      %v4732 = vld [vmem:[%s5 + $0xf0] sm:$0xff]
      %v4733 = vld [vmem:[%s5 + $0xf8] sm:$0xff]
      %v4734 = vld [vmem:[%s5 + $0x100] sm:$0xff]
      %v4735 = vld [vmem:[%s5 + $0x108] sm:$0xff]
      %v4736 = vld [vmem:[%s5 + $0x110] sm:$0xff]
      %v4737 = vld [vmem:[%s5 + $0x118] sm:$0xff]
      %v4738 = vld [vmem:[%s5 + $0x120] sm:$0xff]
      %v4739 = vld [vmem:[%s5 + $0x128] sm:$0xff]
      %v4740 = vld [vmem:[%s5 + $0x130] sm:$0xff]
      %v4741 = vld [vmem:[%s5 + $0x138] sm:$0xff]
      %v4742 = vld [vmem:[%s5 + $0x140] sm:$0xff]
      %v4743 = vld [vmem:[%s5 + $0x148] sm:$0xff]
      %v4744 = vld [vmem:[%s5 + $0x150] sm:$0xff]
      %v4745 = vld [vmem:[%s5 + $0x158] sm:$0xff]
      %v4746 = vld [vmem:[%s5 + $0x160] sm:$0xff]
      %v4747 = vld [vmem:[%s5 + $0x168] sm:$0xff]
      %v4748 = vld [vmem:[%s5 + $0x170] sm:$0xff]
      %v4749 = vld [vmem:[%s5 + $0x178] sm:$0xff]
      %v4750 = vld [vmem:[%s5 + $0x180] sm:$0xff]
      %v4751 = vld [vmem:[%s5 + $0x188] sm:$0xff]
      %v4752 = vld [vmem:[%s5 + $0x190] sm:$0xff]
      %v4753 = vld [vmem:[%s5 + $0x198] sm:$0xff]
      %v4754 = vld [vmem:[%s5 + $0x1a0] sm:$0xff]
      %v4755 = vld [vmem:[%s5 + $0x1a8] sm:$0xff]
      %v4756 = vld [vmem:[%s5 + $0x1b0] sm:$0xff]
      %v4757 = vld [vmem:[%s5 + $0x1b8] sm:$0xff]
      %v4758 = vld [vmem:[%s5 + $0x1c0] sm:$0xff]
      %v4759 = vld [vmem:[%s5 + $0x1c8] sm:$0xff]
      %v4760 = vld [vmem:[%s5 + $0x1d0] sm:$0xff]
      %v4761 = vld [vmem:[%s5 + $0x1d8] sm:$0xff]
      %v4762 = vld [vmem:[%s5 + $0x1e0] sm:$0xff]
      %v4763 = vld [vmem:[%s5 + $0x1e8] sm:$0xff]
      %v4764 = vld [vmem:[%s5 + $0x1f0] sm:$0xff]
      %v4765 = vld [vmem:[%s5 + $0x1f8] sm:$0xff]
      %v4766 = vld [vmem:[%s5 + $0x200] sm:$0xff]
      %v4767 = vld [vmem:[%s5 + $0x208] sm:$0xff]
      %v4768 = vld [vmem:[%s5 + $0x210] sm:$0xff]
      %v4769 = vld [vmem:[%s5 + $0x218] sm:$0xff]
      %v4770 = vld [vmem:[%s5 + $0x220] sm:$0xff]
      %v4771 = vld [vmem:[%s5 + $0x228] sm:$0xff]
      %v4772 = vld [vmem:[%s5 + $0x230] sm:$0xff]
      %v4773 = vld [vmem:[%s5 + $0x238] sm:$0xff]
      %v4774 = vld [vmem:[%s5 + $0x240] sm:$0xff]
      %v4775 = vld [vmem:[%s5 + $0x248] sm:$0xff]
      %v4776 = vld [vmem:[%s5 + $0x250] sm:$0xff]
      %v4777 = vld [vmem:[%s5 + $0x258] sm:$0xff]
      %v4778 = vld [vmem:[%s5 + $0x260] sm:$0xff]
      %v4779 = vld [vmem:[%s5 + $0x268] sm:$0xff]
      %v4780 = vld [vmem:[%s5 + $0x270] sm:$0xff]
      %v4781 = vld [vmem:[%s5 + $0x278] sm:$0xff]
      %v4782 = vld [vmem:[%s5 + $0x280] sm:$0xff]
      %v4783 = vld [vmem:[%s5 + $0x288] sm:$0xff]
      %v4784 = vld [vmem:[%s5 + $0x290] sm:$0xff]
      %v4785 = vld [vmem:[%s5 + $0x298] sm:$0xff]
      %v4786 = vld [vmem:[%s5 + $0x2a0] sm:$0xff]
      %v4787 = vld [vmem:[%s5 + $0x2a8] sm:$0xff]
      %v4788 = vld [vmem:[%s5 + $0x2b0] sm:$0xff]
      %v4789 = vld [vmem:[%s5 + $0x2b8] sm:$0xff]
      %v4790 = vld [vmem:[%s5 + $0x2c0] sm:$0xff]
      %v4791 = vld [vmem:[%s5 + $0x2c8] sm:$0xff]
      %v4792 = vld [vmem:[%s5 + $0x2d0] sm:$0xff]
      %v4793 = vld [vmem:[%s5 + $0x2d8] sm:$0xff]
      %v4794 = vld [vmem:[%s5 + $0x2e0] sm:$0xff]
      %v4795 = vld [vmem:[%s5 + $0x2e8] sm:$0xff]
      %v4796 = vld [vmem:[%s5 + $0x2f0] sm:$0xff]
      %v4797 = vld [vmem:[%s5 + $0x2f8] sm:$0xff]
      %v4798 = vld [vmem:[%s5 + $0x300] sm:$0xff]
      %v4799 = vld [vmem:[%s5 + $0x308] sm:$0xff]
      %v4800 = vld [vmem:[%s5 + $0x310] sm:$0xff]
      %v4801 = vld [vmem:[%s5 + $0x318] sm:$0xff]
      %v4802 = vld [vmem:[%s5 + $0x320] sm:$0xff]
      %v4803 = vld [vmem:[%s5 + $0x328] sm:$0xff]
      %v4804 = vld [vmem:[%s5 + $0x330] sm:$0xff]
      %v4805 = vld [vmem:[%s5 + $0x338] sm:$0xff]
      %v4806 = vld [vmem:[%s5 + $0x340] sm:$0xff]
      %v4807 = vld [vmem:[%s5 + $0x348] sm:$0xff]
      %v4808 = vld [vmem:[%s5 + $0x350] sm:$0xff]
      %v4809 = vld [vmem:[%s5 + $0x358] sm:$0xff]
      %v4810 = vld [vmem:[%s5 + $0x360] sm:$0xff]
      %v4811 = vld [vmem:[%s5 + $0x368] sm:$0xff]
      %v4812 = vld [vmem:[%s5 + $0x370] sm:$0xff]
      %v4813 = vld [vmem:[%s5 + $0x378] sm:$0xff]
      %v4814 = vld [vmem:[%s5 + $0x380] sm:$0xff]
      %v4815 = vld [vmem:[%s5 + $0x388] sm:$0xff]
      %v4816 = vld [vmem:[%s5 + $0x390] sm:$0xff]
      %v4817 = vld [vmem:[%s5 + $0x398] sm:$0xff]
      %v4818 = vld [vmem:[%s5 + $0x3a0] sm:$0xff]
      %v4819 = vld [vmem:[%s5 + $0x3a8] sm:$0xff]
      %v4820 = vld [vmem:[%s5 + $0x3b0] sm:$0xff]
      %v4821 = vld [vmem:[%s5 + $0x3b8] sm:$0xff]
      %v4822 = vld [vmem:[%s5 + $0x3c0] sm:$0xff]
      %v4823 = vld [vmem:[%s5 + $0x3c8] sm:$0xff]
      %v4824 = vld [vmem:[%s5 + $0x3d0] sm:$0xff]
      %v4825 = vld [vmem:[%s5 + $0x3d8] sm:$0xff]
      %v4826 = vld [vmem:[%s5 + $0x3e0] sm:$0xff]
      %v4827 = vld [vmem:[%s5 + $0x3e8] sm:$0xff]
      %v4828 = vld [vmem:[%s5 + $0x3f0] sm:$0xff]
      %v4829 = vld [vmem:[%s5 + $0x3f8] sm:$0xff]
      %v4830 = vld [vmem:[%s5 + $0x400] sm:$0xff]
      %v4831 = vld [vmem:[%s5 + $0x408] sm:$0xff]
      %v4832 = vld [vmem:[%s5 + $0x410] sm:$0xff]
      %v4833 = vld [vmem:[%s5 + $0x418] sm:$0xff]
      %v4834 = vld [vmem:[%s5 + $0x420] sm:$0xff]
      %v4835 = vld [vmem:[%s5 + $0x428] sm:$0xff]
      %v4836 = vld [vmem:[%s5 + $0x430] sm:$0xff]
      %v4837 = vld [vmem:[%s5 + $0x438] sm:$0xff]
      %v4838 = vld [vmem:[%s5 + $0x440] sm:$0xff]
      %v4839 = vld [vmem:[%s5 + $0x448] sm:$0xff]
      %v4840 = vld [vmem:[%s5 + $0x450] sm:$0xff]
      %v4841 = vld [vmem:[%s5 + $0x458] sm:$0xff]
      %v4842 = vld [vmem:[%s5 + $0x460] sm:$0xff]
      %v4843 = vld [vmem:[%s5 + $0x468] sm:$0xff]
      %v4844 = vld [vmem:[%s5 + $0x470] sm:$0xff]
      %v4845 = vld [vmem:[%s5 + $0x478] sm:$0xff]
      %v4846 = vld [vmem:[%s5 + $0x480] sm:$0xff]
      %v4847 = vld [vmem:[%s5 + $0x488] sm:$0xff]
      %v4848 = vld [vmem:[%s5 + $0x490] sm:$0xff]
      %v4849 = vld [vmem:[%s5 + $0x498] sm:$0xff]
      %v4850 = vld [vmem:[%s5 + $0x4a0] sm:$0xff]
      %v4851 = vld [vmem:[%s5 + $0x4a8] sm:$0xff]
      %v4852 = vld [vmem:[%s5 + $0x4b0] sm:$0xff]
      %v4853 = vld [vmem:[%s5 + $0x4b8] sm:$0xff]
      %v4854 = vld [vmem:[%s5 + $0x4c0] sm:$0xff]
      %v4855 = vld [vmem:[%s5 + $0x4c8] sm:$0xff]
      %v4856 = vld [vmem:[%s5 + $0x4d0] sm:$0xff]
      %v4857 = vld [vmem:[%s5 + $0x4d8] sm:$0xff]
      %v4858 = vld [vmem:[%s5 + $0x4e0] sm:$0xff]
      %v4859 = vld [vmem:[%s5 + $0x4e8] sm:$0xff]
      %v4860 = vld [vmem:[%s5 + $0x4f0] sm:$0xff]
      %v4861 = vld [vmem:[%s5 + $0x4f8] sm:$0xff]
      %v4862 = vld [vmem:[%s5 + $0x500] sm:$0xff]
      %v4863 = vld [vmem:[%s5 + $0x508] sm:$0xff]
      %v4864 = vld [vmem:[%s5 + $0x510] sm:$0xff]
      %v4865 = vld [vmem:[%s5 + $0x518] sm:$0xff]
      %v4866 = vld [vmem:[%s5 + $0x520] sm:$0xff]
      %v4867 = vld [vmem:[%s5 + $0x528] sm:$0xff]
      %v4868 = vld [vmem:[%s5 + $0x530] sm:$0xff]
      %v4869 = vld [vmem:[%s5 + $0x538] sm:$0xff]
      %v4870 = vld [vmem:[%s5 + $0x540] sm:$0xff]
      %v4871 = vld [vmem:[%s5 + $0x548] sm:$0xff]
      %v4872 = vld [vmem:[%s5 + $0x550] sm:$0xff]
      %v4873 = vld [vmem:[%s5 + $0x558] sm:$0xff]
      %v4874 = vld [vmem:[%s5 + $0x560] sm:$0xff]
      %v4875 = vld [vmem:[%s5 + $0x568] sm:$0xff]
      %v4876 = vld [vmem:[%s5 + $0x570] sm:$0xff]
      %v4877 = vld [vmem:[%s5 + $0x578] sm:$0xff]
      %v4878 = vld [vmem:[%s5 + $0x580] sm:$0xff]
      %v4879 = vld [vmem:[%s5 + $0x588] sm:$0xff]
      %v4880 = vld [vmem:[%s5 + $0x590] sm:$0xff]
      %v4881 = vld [vmem:[%s5 + $0x598] sm:$0xff]
      %v4882 = vld [vmem:[%s5 + $0x5a0] sm:$0xff]
      %v4883 = vld [vmem:[%s5 + $0x5a8] sm:$0xff]
      %v4884 = vld [vmem:[%s5 + $0x5b0] sm:$0xff]
      %v4885 = vld [vmem:[%s5 + $0x5b8] sm:$0xff]
      %v4886 = vld [vmem:[%s5 + $0x5c0] sm:$0xff]
      %v4887 = vld [vmem:[%s5 + $0x5c8] sm:$0xff]
      %v4888 = vld [vmem:[%s5 + $0x5d0] sm:$0xff]
      %v4889 = vld [vmem:[%s5 + $0x5d8] sm:$0xff]
      %v4890 = vld [vmem:[%s5 + $0x5e0] sm:$0xff]
      %v4891 = vld [vmem:[%s5 + $0x5e8] sm:$0xff]
      %v4892 = vld [vmem:[%s5 + $0x5f0] sm:$0xff]
      %v4893 = vld [vmem:[%s5 + $0x5f8] sm:$0xff]
      %v4894 = vld [vmem:[%s5 + $0x600] sm:$0xff]
      %v4895 = vld [vmem:[%s5 + $0x608] sm:$0xff]
      %v4896 = vld [vmem:[%s5 + $0x610] sm:$0xff]
      %v4897 = vld [vmem:[%s5 + $0x618] sm:$0xff]
      %v4898 = vld [vmem:[%s5 + $0x620] sm:$0xff]
      %v4899 = vld [vmem:[%s5 + $0x628] sm:$0xff]
      %v4900 = vld [vmem:[%s5 + $0x630] sm:$0xff]
      %v4901 = vld [vmem:[%s5 + $0x638] sm:$0xff]
      %v4902 = vld [vmem:[%s5 + $0x640] sm:$0xff]
      %v4903 = vld [vmem:[%s5 + $0x648] sm:$0xff]
      %v4904 = vld [vmem:[%s5 + $0x650] sm:$0xff]
      %v4905 = vld [vmem:[%s5 + $0x658] sm:$0xff]
      %v4906 = vld [vmem:[%s5 + $0x660] sm:$0xff]
      %v4907 = vld [vmem:[%s5 + $0x668] sm:$0xff]
      %v4908 = vld [vmem:[%s5 + $0x670] sm:$0xff]
      %v4909 = vld [vmem:[%s5 + $0x678] sm:$0xff]
      %v4910 = vld [vmem:[%s5 + $0x680] sm:$0xff]
      %v4911 = vld [vmem:[%s5 + $0x688] sm:$0xff]
      %v4912 = vld [vmem:[%s5 + $0x690] sm:$0xff]
      %v4913 = vld [vmem:[%s5 + $0x698] sm:$0xff]
      %v4914 = vld [vmem:[%s5 + $0x6a0] sm:$0xff]
      %v4915 = vld [vmem:[%s5 + $0x6a8] sm:$0xff]
      %v4916 = vld [vmem:[%s5 + $0x6b0] sm:$0xff]
      %v4917 = vld [vmem:[%s5 + $0x6b8] sm:$0xff]
      %v4918 = vld [vmem:[%s5 + $0x6c0] sm:$0xff]
      %v4919 = vld [vmem:[%s5 + $0x6c8] sm:$0xff]
      %v4920 = vld [vmem:[%s5 + $0x6d0] sm:$0xff]
      %v4921 = vld [vmem:[%s5 + $0x6d8] sm:$0xff]
      %v4922 = vld [vmem:[%s5 + $0x6e0] sm:$0xff]
      %v4923 = vld [vmem:[%s5 + $0x6e8] sm:$0xff]
      %v4924 = vld [vmem:[%s5 + $0x6f0] sm:$0xff]
      %v4925 = vld [vmem:[%s5 + $0x6f8] sm:$0xff]
      %v4926 = vld [vmem:[%s5 + $0x700] sm:$0xff]
      %v4927 = vld [vmem:[%s5 + $0x708] sm:$0xff]
      %v4928 = vld [vmem:[%s5 + $0x710] sm:$0xff]
      %v4929 = vld [vmem:[%s5 + $0x718] sm:$0xff]
      %v4930 = vld [vmem:[%s5 + $0x720] sm:$0xff]
      %v4931 = vld [vmem:[%s5 + $0x728] sm:$0xff]
      %v4932 = vld [vmem:[%s5 + $0x730] sm:$0xff]
      %v4933 = vld [vmem:[%s5 + $0x738] sm:$0xff]
      %v4934 = vld [vmem:[%s5 + $0x740] sm:$0xff]
      %v4935 = vld [vmem:[%s5 + $0x748] sm:$0xff]
      %v4936 = vld [vmem:[%s5 + $0x750] sm:$0xff]
      %v4937 = vld [vmem:[%s5 + $0x758] sm:$0xff]
      %v4938 = vld [vmem:[%s5 + $0x760] sm:$0xff]
      %v4939 = vld [vmem:[%s5 + $0x768] sm:$0xff]
      %v4940 = vld [vmem:[%s5 + $0x770] sm:$0xff]
      %v4941 = vld [vmem:[%s5 + $0x778] sm:$0xff]
      %v4942 = vld [vmem:[%s5 + $0x780] sm:$0xff]
      %v4943 = vld [vmem:[%s5 + $0x788] sm:$0xff]
      %v4944 = vld [vmem:[%s5 + $0x790] sm:$0xff]
      %v4945 = vld [vmem:[%s5 + $0x798] sm:$0xff]
      %v4946 = vld [vmem:[%s5 + $0x7a0] sm:$0xff]
      %v4947 = vld [vmem:[%s5 + $0x7a8] sm:$0xff]
      %v4948 = vld [vmem:[%s5 + $0x7b0] sm:$0xff]
      %v4949 = vld [vmem:[%s5 + $0x7b8] sm:$0xff]
      %v4950 = vld [vmem:[%s5 + $0x7c0] sm:$0xff]
      %v4951 = vld [vmem:[%s5 + $0x7c8] sm:$0xff]
      %v4952 = vld [vmem:[%s5 + $0x7d0] sm:$0xff]
      %v4953 = vld [vmem:[%s5 + $0x7d8] sm:$0xff]
      %v4954 = vld [vmem:[%s5 + $0x7e0] sm:$0xff]
      %v4955 = vld [vmem:[%s5 + $0x7e8] sm:$0xff]
      %v4956 = vld [vmem:[%s5 + $0x7f0] sm:$0xff]
      %v4957 = vld [vmem:[%s5 + $0x7f8] sm:$0xff]
      %v4958 = vld [vmem:[%s5 + $0x800] sm:$0xff]
      %v4959 = vld [vmem:[%s5 + $0x808] sm:$0xff]
      %v4960 = vld [vmem:[%s5 + $0x810] sm:$0xff]
      %v4961 = vld [vmem:[%s5 + $0x818] sm:$0xff]
      %v4962 = vld [vmem:[%s5 + $0x820] sm:$0xff]
      %v4963 = vld [vmem:[%s5 + $0x828] sm:$0xff]
      %v4964 = vld [vmem:[%s5 + $0x830] sm:$0xff]
      %v4965 = vld [vmem:[%s5 + $0x838] sm:$0xff]
      %v4966 = vld [vmem:[%s5 + $0x840] sm:$0xff]
      %v4967 = vld [vmem:[%s5 + $0x848] sm:$0xff]
      %v4968 = vld [vmem:[%s5 + $0x850] sm:$0xff]
      %v4969 = vld [vmem:[%s5 + $0x858] sm:$0xff]
      %v4970 = vld [vmem:[%s5 + $0x860] sm:$0xff]
      %v4971 = vld [vmem:[%s5 + $0x868] sm:$0xff]
      %v4972 = vld [vmem:[%s5 + $0x870] sm:$0xff]
      %v4973 = vld [vmem:[%s5 + $0x878] sm:$0xff]
      %v4974 = vld [vmem:[%s5 + $0x880] sm:$0xff]
      %v4975 = vld [vmem:[%s5 + $0x888] sm:$0xff]
      %v4976 = vld [vmem:[%s5 + $0x890] sm:$0xff]
      %v4977 = vld [vmem:[%s5 + $0x898] sm:$0xff]
      %v4978 = vld [vmem:[%s5 + $0x8a0] sm:$0xff]
      %v4979 = vld [vmem:[%s5 + $0x8a8] sm:$0xff]
      %v4980 = vld [vmem:[%s5 + $0x8b0] sm:$0xff]
      %v4981 = vld [vmem:[%s5 + $0x8b8] sm:$0xff]
      %v4982 = vld [vmem:[%s5 + $0x8c0] sm:$0xff]
      %v4983 = vld [vmem:[%s5 + $0x8c8] sm:$0xff]
      %v4984 = vld [vmem:[%s5 + $0x8d0] sm:$0xff]
      %v4985 = vld [vmem:[%s5 + $0x8d8] sm:$0xff]
      %v4986 = vld [vmem:[%s5 + $0x8e0] sm:$0xff]
      %v4987 = vld [vmem:[%s5 + $0x8e8] sm:$0xff]
      %v4988 = vld [vmem:[%s5 + $0x8f0] sm:$0xff]
      %v4989 = vld [vmem:[%s5 + $0x8f8] sm:$0xff]
      %v4990 = vld [vmem:[%s5 + $0x900] sm:$0xff]
      %v4991 = vld [vmem:[%s5 + $0x908] sm:$0xff]
      %v4992 = vld [vmem:[%s5 + $0x910] sm:$0xff]
      %v4993 = vld [vmem:[%s5 + $0x918] sm:$0xff]
      %v4994 = vld [vmem:[%s5 + $0x920] sm:$0xff]
      %v4995 = vld [vmem:[%s5 + $0x928] sm:$0xff]
      %v4996 = vld [vmem:[%s5 + $0x930] sm:$0xff]
      %v4997 = vld [vmem:[%s5 + $0x938] sm:$0xff]
      %v4998 = vld [vmem:[%s5 + $0x940] sm:$0xff]
      %v4999 = vld [vmem:[%s5 + $0x948] sm:$0xff]
      %v5000 = vld [vmem:[%s5 + $0x950] sm:$0xff]
      %v5001 = vld [vmem:[%s5 + $0x958] sm:$0xff]
      %v5002 = vld [vmem:[%s5 + $0x960] sm:$0xff]
      %v5003 = vld [vmem:[%s5 + $0x968] sm:$0xff]
      %v5004 = vld [vmem:[%s5 + $0x970] sm:$0xff]
      %v5005 = vld [vmem:[%s5 + $0x978] sm:$0xff]
      %v5006 = vld [vmem:[%s5 + $0x980] sm:$0xff]
      %v5007 = vld [vmem:[%s5 + $0x988] sm:$0xff]
      %v5008 = vld [vmem:[%s5 + $0x990] sm:$0xff]
      %v5009 = vld [vmem:[%s5 + $0x998] sm:$0xff]
      %v5010 = vld [vmem:[%s5 + $0x9a0] sm:$0xff]
      %v5011 = vld [vmem:[%s5 + $0x9a8] sm:$0xff]
      %v5012 = vld [vmem:[%s5 + $0x9b0] sm:$0xff]
      %v5013 = vld [vmem:[%s5 + $0x9b8] sm:$0xff]
      %v5014 = vld [vmem:[%s5 + $0x9c0] sm:$0xff]
      %v5015 = vld [vmem:[%s5 + $0x9c8] sm:$0xff]
      %v5016 = vld [vmem:[%s5 + $0x9d0] sm:$0xff]
      %v5017 = vld [vmem:[%s5 + $0x9d8] sm:$0xff]
      %v5018 = vld [vmem:[%s5 + $0x9e0] sm:$0xff]
      %v5019 = vld [vmem:[%s5 + $0x9e8] sm:$0xff]
      %v5020 = vld [vmem:[%s5 + $0x9f0] sm:$0xff]
      %v5021 = vld [vmem:[%s5 + $0x9f8] sm:$0xff]
      %v5022 = vld [vmem:[%s5 + $0xa00] sm:$0xff]
      %v5023 = vld [vmem:[%s5 + $0xa08] sm:$0xff]
      %v5024 = vld [vmem:[%s5 + $0xa10] sm:$0xff]
      %v5025 = vld [vmem:[%s5 + $0xa18] sm:$0xff]
      %v5026 = vld [vmem:[%s5 + $0xa20] sm:$0xff]
      %v5027 = vld [vmem:[%s5 + $0xa28] sm:$0xff]
      %v5028 = vld [vmem:[%s5 + $0xa30] sm:$0xff]
      %v5029 = vld [vmem:[%s5 + $0xa38] sm:$0xff]
      %v5030 = vld [vmem:[%s5 + $0xa40] sm:$0xff]
      %v5031 = vld [vmem:[%s5 + $0xa48] sm:$0xff]
      %v5032 = vld [vmem:[%s5 + $0xa50] sm:$0xff]
      %v5033 = vld [vmem:[%s5 + $0xa58] sm:$0xff]
      %v5034 = vld [vmem:[%s5 + $0xa60] sm:$0xff]
      %v5035 = vld [vmem:[%s5 + $0xa68] sm:$0xff]
      %v5036 = vld [vmem:[%s5 + $0xa70] sm:$0xff]
      %v5037 = vld [vmem:[%s5 + $0xa78] sm:$0xff]
      %v5038 = vld [vmem:[%s5 + $0xa80] sm:$0xff]
      %v5039 = vld [vmem:[%s5 + $0xa88] sm:$0xff]
      %v5040 = vld [vmem:[%s5 + $0xa90] sm:$0xff]
      %v5041 = vld [vmem:[%s5 + $0xa98] sm:$0xff]
      %v5042 = vld [vmem:[%s5 + $0xaa0] sm:$0xff]
      %v5043 = vld [vmem:[%s5 + $0xaa8] sm:$0xff]
      %v5044 = vld [vmem:[%s5 + $0xab0] sm:$0xff]
      %v5045 = vld [vmem:[%s5 + $0xab8] sm:$0xff]
      %v5046 = vld [vmem:[%s5 + $0xac0] sm:$0xff]
      %v5047 = vld [vmem:[%s5 + $0xac8] sm:$0xff]
      %v5048 = vld [vmem:[%s5 + $0xad0] sm:$0xff]
      %v5049 = vld [vmem:[%s5 + $0xad8] sm:$0xff]
      %v5050 = vld [vmem:[%s5 + $0xae0] sm:$0xff]
      %v5051 = vld [vmem:[%s5 + $0xae8] sm:$0xff]
      %v5052 = vld [vmem:[%s5 + $0xaf0] sm:$0xff]
      %v5053 = vld [vmem:[%s5 + $0xaf8] sm:$0xff]
      %v5054 = vld [vmem:[%s5 + $0xb00] sm:$0xff]
      %v5055 = vld [vmem:[%s5 + $0xb08] sm:$0xff]
      %v5056 = vld [vmem:[%s5 + $0xb10] sm:$0xff]
      %v5057 = vld [vmem:[%s5 + $0xb18] sm:$0xff]
      %v5058 = vld [vmem:[%s5 + $0xb20] sm:$0xff]
      %v5059 = vld [vmem:[%s5 + $0xb28] sm:$0xff]
      %v5060 = vld [vmem:[%s5 + $0xb30] sm:$0xff]
      %v5061 = vld [vmem:[%s5 + $0xb38] sm:$0xff]
      %v5062 = vld [vmem:[%s5 + $0xb40] sm:$0xff]
      %v5063 = vld [vmem:[%s5 + $0xb48] sm:$0xff]
      %v5064 = vld [vmem:[%s5 + $0xb50] sm:$0xff]
      %v5065 = vld [vmem:[%s5 + $0xb58] sm:$0xff]
      %v5066 = vld [vmem:[%s5 + $0xb60] sm:$0xff]
      %v5067 = vld [vmem:[%s5 + $0xb68] sm:$0xff]
      %v5068 = vld [vmem:[%s5 + $0xb70] sm:$0xff]
      %v5069 = vld [vmem:[%s5 + $0xb78] sm:$0xff]
      %v5070 = vld [vmem:[%s5 + $0xb80] sm:$0xff]
      %v5071 = vld [vmem:[%s5 + $0xb88] sm:$0xff]
      %v5072 = vld [vmem:[%s5 + $0xb90] sm:$0xff]
      %v5073 = vld [vmem:[%s5 + $0xb98] sm:$0xff]
      %v5074 = vld [vmem:[%s5 + $0xba0] sm:$0xff]
      %v5075 = vld [vmem:[%s5 + $0xba8] sm:$0xff]
      %v5076 = vld [vmem:[%s5 + $0xbb0] sm:$0xff]
      %v5077 = vld [vmem:[%s5 + $0xbb8] sm:$0xff]
      %v5078 = vld [vmem:[%s5 + $0xbc0] sm:$0xff]
      %v5079 = vld [vmem:[%s5 + $0xbc8] sm:$0xff]
      %v5080 = vld [vmem:[%s5 + $0xbd0] sm:$0xff]
      %v5081 = vld [vmem:[%s5 + $0xbd8] sm:$0xff]
      %v5082 = vld [vmem:[%s5 + $0xbe0] sm:$0xff]
      %v5083 = vld [vmem:[%s5 + $0xbe8] sm:$0xff]
      %v5084 = vld [vmem:[%s5 + $0xbf0] sm:$0xff]
      %v5085 = vld [vmem:[%s5 + $0xbf8] sm:$0xff]
      %v5086 = vld [vmem:[%s6] sm:$0xff]
      %v5088 = vlaneseq
      %v5089 = vshrl.u32 %v5088, 7
      %v5090 = vsub.s32 0, %v5089
      %v5091 = vrot.slane %v5086, %v5090
      %v5092 = vlaneseq
      %v5093 = vshrl.u32 %v5092, 7
      %v5094 = vsub.s32 1, %v5093
      %v5095 = vrot.slane %v5086, %v5094
      %v5096 = vlaneseq
      %v5097 = vshrl.u32 %v5096, 7
      %v5098 = vsub.s32 2, %v5097
      %v5099 = vrot.slane %v5086, %v5098
      %v5100 = vlaneseq
      %v5101 = vshrl.u32 %v5100, 7
      %v5102 = vsub.s32 3, %v5101
      %v5103 = vrot.slane %v5086, %v5102
      %v5104 = vlaneseq
      %v5105 = vshrl.u32 %v5104, 7
      %v5106 = vsub.s32 4, %v5105
      %v5107 = vrot.slane %v5086, %v5106
      %v5108 = vlaneseq
      %v5109 = vshrl.u32 %v5108, 7
      %v5110 = vsub.s32 5, %v5109
      %v5111 = vrot.slane %v5086, %v5110
      %v5112 = vlaneseq
      %v5113 = vshrl.u32 %v5112, 7
      %v5114 = vsub.s32 6, %v5113
      %v5115 = vrot.slane %v5086, %v5114
      %v5116 = vlaneseq
      %v5117 = vshrl.u32 %v5116, 7
      %v5118 = vsub.s32 7, %v5117
      %v5119 = vrot.slane %v5086, %v5118
      %v5512 = vunpack.c.l.b16 %v4702
      %v5513 = vunpack.c.h.b16 %v4702
      %v5514 = vunpack.c.l.b16 %v4703
      %v5515 = vunpack.c.h.b16 %v4703
      %v5516 = vunpack.c.l.b16 %v4704
      %v5517 = vunpack.c.h.b16 %v4704
      %v5518 = vunpack.c.l.b16 %v4705
      %v5519 = vunpack.c.h.b16 %v4705
      %v5520 = vunpack.c.l.b16 %v4706
      %v5521 = vunpack.c.h.b16 %v4706
      %v5522 = vunpack.c.l.b16 %v4707
      %v5523 = vunpack.c.h.b16 %v4707
      %v5524 = vunpack.c.l.b16 %v4708
      %v5525 = vunpack.c.h.b16 %v4708
      %v5526 = vunpack.c.l.b16 %v4709
      %v5527 = vunpack.c.h.b16 %v4709
      %v5528 = vunpack.c.l.b16 %v4710
      %v5529 = vunpack.c.h.b16 %v4710
      %v5530 = vunpack.c.l.b16 %v4711
      %v5531 = vunpack.c.h.b16 %v4711
      %v5532 = vunpack.c.l.b16 %v4712
      %v5533 = vunpack.c.h.b16 %v4712
      %v5534 = vunpack.c.l.b16 %v4713
      %v5535 = vunpack.c.h.b16 %v4713
      %v5536 = vunpack.c.l.b16 %v4714
      %v5537 = vunpack.c.h.b16 %v4714
      %v5538 = vunpack.c.l.b16 %v4715
      %v5539 = vunpack.c.h.b16 %v4715
      %v5540 = vunpack.c.l.b16 %v4716
      %v5541 = vunpack.c.h.b16 %v4716
      %v5542 = vunpack.c.l.b16 %v4717
      %v5543 = vunpack.c.h.b16 %v4717
      %v5544 = vunpack.c.l.b16 %v4718
      %v5545 = vunpack.c.h.b16 %v4718
      %v5546 = vunpack.c.l.b16 %v4719
      %v5547 = vunpack.c.h.b16 %v4719
      %v5548 = vunpack.c.l.b16 %v4720
      %v5549 = vunpack.c.h.b16 %v4720
      %v5550 = vunpack.c.l.b16 %v4721
      %v5551 = vunpack.c.h.b16 %v4721
      %v5552 = vunpack.c.l.b16 %v4722
      %v5553 = vunpack.c.h.b16 %v4722
      %v5554 = vunpack.c.l.b16 %v4723
      %v5555 = vunpack.c.h.b16 %v4723
      %v5556 = vunpack.c.l.b16 %v4724
      %v5557 = vunpack.c.h.b16 %v4724
      %v5558 = vunpack.c.l.b16 %v4725
      %v5559 = vunpack.c.h.b16 %v4725
      %v5560 = vunpack.c.l.b16 %v4726
      %v5561 = vunpack.c.h.b16 %v4726
      %v5562 = vunpack.c.l.b16 %v4727
      %v5563 = vunpack.c.h.b16 %v4727
      %v5564 = vunpack.c.l.b16 %v4728
      %v5565 = vunpack.c.h.b16 %v4728
      %v5566 = vunpack.c.l.b16 %v4729
      %v5567 = vunpack.c.h.b16 %v4729
      %v5568 = vunpack.c.l.b16 %v4730
      %v5569 = vunpack.c.h.b16 %v4730
      %v5570 = vunpack.c.l.b16 %v4731
      %v5571 = vunpack.c.h.b16 %v4731
      %v5572 = vunpack.c.l.b16 %v4732
      %v5573 = vunpack.c.h.b16 %v4732
      %v5574 = vunpack.c.l.b16 %v4733
      %v5575 = vunpack.c.h.b16 %v4733
      %v5576 = vunpack.c.l.b16 %v4734
      %v5577 = vunpack.c.h.b16 %v4734
      %v5578 = vunpack.c.l.b16 %v4735
      %v5579 = vunpack.c.h.b16 %v4735
      %v5580 = vunpack.c.l.b16 %v4736
      %v5581 = vunpack.c.h.b16 %v4736
      %v5582 = vunpack.c.l.b16 %v4737
      %v5583 = vunpack.c.h.b16 %v4737
      %v5584 = vunpack.c.l.b16 %v4738
      %v5585 = vunpack.c.h.b16 %v4738
      %v5586 = vunpack.c.l.b16 %v4739
      %v5587 = vunpack.c.h.b16 %v4739
      %v5588 = vunpack.c.l.b16 %v4740
      %v5589 = vunpack.c.h.b16 %v4740
      %v5590 = vunpack.c.l.b16 %v4741
      %v5591 = vunpack.c.h.b16 %v4741
      %v5592 = vunpack.c.l.b16 %v4742
      %v5593 = vunpack.c.h.b16 %v4742
      %v5594 = vunpack.c.l.b16 %v4743
      %v5595 = vunpack.c.h.b16 %v4743
      %v5596 = vunpack.c.l.b16 %v4744
      %v5597 = vunpack.c.h.b16 %v4744
      %v5598 = vunpack.c.l.b16 %v4745
      %v5599 = vunpack.c.h.b16 %v4745
      %v5600 = vunpack.c.l.b16 %v4746
      %v5601 = vunpack.c.h.b16 %v4746
      %v5602 = vunpack.c.l.b16 %v4747
      %v5603 = vunpack.c.h.b16 %v4747
      %v5604 = vunpack.c.l.b16 %v4748
      %v5605 = vunpack.c.h.b16 %v4748
      %v5606 = vunpack.c.l.b16 %v4749
      %v5607 = vunpack.c.h.b16 %v4749
      %v5608 = vunpack.c.l.b16 %v4750
      %v5609 = vunpack.c.h.b16 %v4750
      %v5610 = vunpack.c.l.b16 %v4751
      %v5611 = vunpack.c.h.b16 %v4751
      %v5612 = vunpack.c.l.b16 %v4752
      %v5613 = vunpack.c.h.b16 %v4752
      %v5614 = vunpack.c.l.b16 %v4753
      %v5615 = vunpack.c.h.b16 %v4753
      %v5616 = vunpack.c.l.b16 %v4754
      %v5617 = vunpack.c.h.b16 %v4754
      %v5618 = vunpack.c.l.b16 %v4755
      %v5619 = vunpack.c.h.b16 %v4755
      %v5620 = vunpack.c.l.b16 %v4756
      %v5621 = vunpack.c.h.b16 %v4756
      %v5622 = vunpack.c.l.b16 %v4757
      %v5623 = vunpack.c.h.b16 %v4757
      %v5624 = vunpack.c.l.b16 %v4758
      %v5625 = vunpack.c.h.b16 %v4758
      %v5626 = vunpack.c.l.b16 %v4759
      %v5627 = vunpack.c.h.b16 %v4759
      %v5628 = vunpack.c.l.b16 %v4760
      %v5629 = vunpack.c.h.b16 %v4760
      %v5630 = vunpack.c.l.b16 %v4761
      %v5631 = vunpack.c.h.b16 %v4761
      %v5632 = vunpack.c.l.b16 %v4762
      %v5633 = vunpack.c.h.b16 %v4762
      %v5634 = vunpack.c.l.b16 %v4763
      %v5635 = vunpack.c.h.b16 %v4763
      %v5636 = vunpack.c.l.b16 %v4764
      %v5637 = vunpack.c.h.b16 %v4764
      %v5638 = vunpack.c.l.b16 %v4765
      %v5639 = vunpack.c.h.b16 %v4765
      %v5640 = vunpack.c.l.b16 %v4766
      %v5641 = vunpack.c.h.b16 %v4766
      %v5642 = vunpack.c.l.b16 %v4767
      %v5643 = vunpack.c.h.b16 %v4767
      %v5644 = vunpack.c.l.b16 %v4768
      %v5645 = vunpack.c.h.b16 %v4768
      %v5646 = vunpack.c.l.b16 %v4769
      %v5647 = vunpack.c.h.b16 %v4769
      %v5648 = vunpack.c.l.b16 %v4770
      %v5649 = vunpack.c.h.b16 %v4770
      %v5650 = vunpack.c.l.b16 %v4771
      %v5651 = vunpack.c.h.b16 %v4771
      %v5652 = vunpack.c.l.b16 %v4772
      %v5653 = vunpack.c.h.b16 %v4772
      %v5654 = vunpack.c.l.b16 %v4773
      %v5655 = vunpack.c.h.b16 %v4773
      %v5656 = vunpack.c.l.b16 %v4774
      %v5657 = vunpack.c.h.b16 %v4774
      %v5658 = vunpack.c.l.b16 %v4775
      %v5659 = vunpack.c.h.b16 %v4775
      %v5660 = vunpack.c.l.b16 %v4776
      %v5661 = vunpack.c.h.b16 %v4776
      %v5662 = vunpack.c.l.b16 %v4777
      %v5663 = vunpack.c.h.b16 %v4777
      %v5664 = vunpack.c.l.b16 %v4778
      %v5665 = vunpack.c.h.b16 %v4778
      %v5666 = vunpack.c.l.b16 %v4779
      %v5667 = vunpack.c.h.b16 %v4779
      %v5668 = vunpack.c.l.b16 %v4780
      %v5669 = vunpack.c.h.b16 %v4780
      %v5670 = vunpack.c.l.b16 %v4781
      %v5671 = vunpack.c.h.b16 %v4781
      %v5672 = vunpack.c.l.b16 %v4782
      %v5673 = vunpack.c.h.b16 %v4782
      %v5674 = vunpack.c.l.b16 %v4783
      %v5675 = vunpack.c.h.b16 %v4783
      %v5676 = vunpack.c.l.b16 %v4784
      %v5677 = vunpack.c.h.b16 %v4784
      %v5678 = vunpack.c.l.b16 %v4785
      %v5679 = vunpack.c.h.b16 %v4785
      %v5680 = vunpack.c.l.b16 %v4786
      %v5681 = vunpack.c.h.b16 %v4786
      %v5682 = vunpack.c.l.b16 %v4787
      %v5683 = vunpack.c.h.b16 %v4787
      %v5684 = vunpack.c.l.b16 %v4788
      %v5685 = vunpack.c.h.b16 %v4788
      %v5686 = vunpack.c.l.b16 %v4789
      %v5687 = vunpack.c.h.b16 %v4789
      %v5688 = vunpack.c.l.b16 %v4790
      %v5689 = vunpack.c.h.b16 %v4790
      %v5690 = vunpack.c.l.b16 %v4791
      %v5691 = vunpack.c.h.b16 %v4791
      %v5692 = vunpack.c.l.b16 %v4792
      %v5693 = vunpack.c.h.b16 %v4792
      %v5694 = vunpack.c.l.b16 %v4793
      %v5695 = vunpack.c.h.b16 %v4793
      %v5696 = vunpack.c.l.b16 %v4794
      %v5697 = vunpack.c.h.b16 %v4794
      %v5698 = vunpack.c.l.b16 %v4795
      %v5699 = vunpack.c.h.b16 %v4795
      %v5700 = vunpack.c.l.b16 %v4796
      %v5701 = vunpack.c.h.b16 %v4796
      %v5702 = vunpack.c.l.b16 %v4797
      %v5703 = vunpack.c.h.b16 %v4797
      %v5704 = vunpack.c.l.b16 %v4798
      %v5705 = vunpack.c.h.b16 %v4798
      %v5706 = vunpack.c.l.b16 %v4799
      %v5707 = vunpack.c.h.b16 %v4799
      %v5708 = vunpack.c.l.b16 %v4800
      %v5709 = vunpack.c.h.b16 %v4800
      %v5710 = vunpack.c.l.b16 %v4801
      %v5711 = vunpack.c.h.b16 %v4801
      %v5712 = vunpack.c.l.b16 %v4802
      %v5713 = vunpack.c.h.b16 %v4802
      %v5714 = vunpack.c.l.b16 %v4803
      %v5715 = vunpack.c.h.b16 %v4803
      %v5716 = vunpack.c.l.b16 %v4804
      %v5717 = vunpack.c.h.b16 %v4804
      %v5718 = vunpack.c.l.b16 %v4805
      %v5719 = vunpack.c.h.b16 %v4805
      %v5720 = vunpack.c.l.b16 %v4806
      %v5721 = vunpack.c.h.b16 %v4806
      %v5722 = vunpack.c.l.b16 %v4807
      %v5723 = vunpack.c.h.b16 %v4807
      %v5724 = vunpack.c.l.b16 %v4808
      %v5725 = vunpack.c.h.b16 %v4808
      %v5726 = vunpack.c.l.b16 %v4809
      %v5727 = vunpack.c.h.b16 %v4809
      %v5728 = vunpack.c.l.b16 %v4810
      %v5729 = vunpack.c.h.b16 %v4810
      %v5730 = vunpack.c.l.b16 %v4811
      %v5731 = vunpack.c.h.b16 %v4811
      %v5732 = vunpack.c.l.b16 %v4812
      %v5733 = vunpack.c.h.b16 %v4812
      %v5734 = vunpack.c.l.b16 %v4813
      %v5735 = vunpack.c.h.b16 %v4813
      %v5736 = vunpack.c.l.b16 %v4814
      %v5737 = vunpack.c.h.b16 %v4814
      %v5738 = vunpack.c.l.b16 %v4815
      %v5739 = vunpack.c.h.b16 %v4815
      %v5740 = vunpack.c.l.b16 %v4816
      %v5741 = vunpack.c.h.b16 %v4816
      %v5742 = vunpack.c.l.b16 %v4817
      %v5743 = vunpack.c.h.b16 %v4817
      %v5744 = vunpack.c.l.b16 %v4818
      %v5745 = vunpack.c.h.b16 %v4818
      %v5746 = vunpack.c.l.b16 %v4819
      %v5747 = vunpack.c.h.b16 %v4819
      %v5748 = vunpack.c.l.b16 %v4820
      %v5749 = vunpack.c.h.b16 %v4820
      %v5750 = vunpack.c.l.b16 %v4821
      %v5751 = vunpack.c.h.b16 %v4821
      %v5752 = vunpack.c.l.b16 %v4822
      %v5753 = vunpack.c.h.b16 %v4822
      %v5754 = vunpack.c.l.b16 %v4823
      %v5755 = vunpack.c.h.b16 %v4823
      %v5756 = vunpack.c.l.b16 %v4824
      %v5757 = vunpack.c.h.b16 %v4824
      %v5758 = vunpack.c.l.b16 %v4825
      %v5759 = vunpack.c.h.b16 %v4825
      %v5760 = vunpack.c.l.b16 %v4826
      %v5761 = vunpack.c.h.b16 %v4826
      %v5762 = vunpack.c.l.b16 %v4827
      %v5763 = vunpack.c.h.b16 %v4827
      %v5764 = vunpack.c.l.b16 %v4828
      %v5765 = vunpack.c.h.b16 %v4828
      %v5766 = vunpack.c.l.b16 %v4829
      %v5767 = vunpack.c.h.b16 %v4829
      %v5768 = vunpack.c.l.b16 %v4830
      %v5769 = vunpack.c.h.b16 %v4830
      %v5770 = vunpack.c.l.b16 %v4831
      %v5771 = vunpack.c.h.b16 %v4831
      %v5772 = vunpack.c.l.b16 %v4832
      %v5773 = vunpack.c.h.b16 %v4832
      %v5774 = vunpack.c.l.b16 %v4833
      %v5775 = vunpack.c.h.b16 %v4833
      %v5776 = vunpack.c.l.b16 %v4834
      %v5777 = vunpack.c.h.b16 %v4834
      %v5778 = vunpack.c.l.b16 %v4835
      %v5779 = vunpack.c.h.b16 %v4835
      %v5780 = vunpack.c.l.b16 %v4836
      %v5781 = vunpack.c.h.b16 %v4836
      %v5782 = vunpack.c.l.b16 %v4837
      %v5783 = vunpack.c.h.b16 %v4837
      %v5784 = vunpack.c.l.b16 %v4838
      %v5785 = vunpack.c.h.b16 %v4838
      %v5786 = vunpack.c.l.b16 %v4839
      %v5787 = vunpack.c.h.b16 %v4839
      %v5788 = vunpack.c.l.b16 %v4840
      %v5789 = vunpack.c.h.b16 %v4840
      %v5790 = vunpack.c.l.b16 %v4841
      %v5791 = vunpack.c.h.b16 %v4841
      %v5792 = vunpack.c.l.b16 %v4842
      %v5793 = vunpack.c.h.b16 %v4842
      %v5794 = vunpack.c.l.b16 %v4843
      %v5795 = vunpack.c.h.b16 %v4843
      %v5796 = vunpack.c.l.b16 %v4844
      %v5797 = vunpack.c.h.b16 %v4844
      %v5798 = vunpack.c.l.b16 %v4845
      %v5799 = vunpack.c.h.b16 %v4845
      %v5800 = vunpack.c.l.b16 %v4846
      %v5801 = vunpack.c.h.b16 %v4846
      %v5802 = vunpack.c.l.b16 %v4847
      %v5803 = vunpack.c.h.b16 %v4847
      %v5804 = vunpack.c.l.b16 %v4848
      %v5805 = vunpack.c.h.b16 %v4848
      %v5806 = vunpack.c.l.b16 %v4849
      %v5807 = vunpack.c.h.b16 %v4849
      %v5808 = vunpack.c.l.b16 %v4850
      %v5809 = vunpack.c.h.b16 %v4850
      %v5810 = vunpack.c.l.b16 %v4851
      %v5811 = vunpack.c.h.b16 %v4851
      %v5812 = vunpack.c.l.b16 %v4852
      %v5813 = vunpack.c.h.b16 %v4852
      %v5814 = vunpack.c.l.b16 %v4853
      %v5815 = vunpack.c.h.b16 %v4853
      %v5816 = vunpack.c.l.b16 %v4854
      %v5817 = vunpack.c.h.b16 %v4854
      %v5818 = vunpack.c.l.b16 %v4855
      %v5819 = vunpack.c.h.b16 %v4855
      %v5820 = vunpack.c.l.b16 %v4856
      %v5821 = vunpack.c.h.b16 %v4856
      %v5822 = vunpack.c.l.b16 %v4857
      %v5823 = vunpack.c.h.b16 %v4857
      %v5824 = vunpack.c.l.b16 %v4858
      %v5825 = vunpack.c.h.b16 %v4858
      %v5826 = vunpack.c.l.b16 %v4859
      %v5827 = vunpack.c.h.b16 %v4859
      %v5828 = vunpack.c.l.b16 %v4860
      %v5829 = vunpack.c.h.b16 %v4860
      %v5830 = vunpack.c.l.b16 %v4861
      %v5831 = vunpack.c.h.b16 %v4861
      %v5832 = vunpack.c.l.b16 %v4862
      %v5833 = vunpack.c.h.b16 %v4862
      %v5834 = vunpack.c.l.b16 %v4863
      %v5835 = vunpack.c.h.b16 %v4863
      %v5836 = vunpack.c.l.b16 %v4864
      %v5837 = vunpack.c.h.b16 %v4864
      %v5838 = vunpack.c.l.b16 %v4865
      %v5839 = vunpack.c.h.b16 %v4865
      %v5840 = vunpack.c.l.b16 %v4866
      %v5841 = vunpack.c.h.b16 %v4866
      %v5842 = vunpack.c.l.b16 %v4867
      %v5843 = vunpack.c.h.b16 %v4867
      %v5844 = vunpack.c.l.b16 %v4868
      %v5845 = vunpack.c.h.b16 %v4868
      %v5846 = vunpack.c.l.b16 %v4869
      %v5847 = vunpack.c.h.b16 %v4869
      %v5848 = vunpack.c.l.b16 %v4870
      %v5849 = vunpack.c.h.b16 %v4870
      %v5850 = vunpack.c.l.b16 %v4871
      %v5851 = vunpack.c.h.b16 %v4871
      %v5852 = vunpack.c.l.b16 %v4872
      %v5853 = vunpack.c.h.b16 %v4872
      %v5854 = vunpack.c.l.b16 %v4873
      %v5855 = vunpack.c.h.b16 %v4873
      %v5856 = vunpack.c.l.b16 %v4874
      %v5857 = vunpack.c.h.b16 %v4874
      %v5858 = vunpack.c.l.b16 %v4875
      %v5859 = vunpack.c.h.b16 %v4875
      %v5860 = vunpack.c.l.b16 %v4876
      %v5861 = vunpack.c.h.b16 %v4876
      %v5862 = vunpack.c.l.b16 %v4877
      %v5863 = vunpack.c.h.b16 %v4877
      %v5864 = vunpack.c.l.b16 %v4878
      %v5865 = vunpack.c.h.b16 %v4878
      %v5866 = vunpack.c.l.b16 %v4879
      %v5867 = vunpack.c.h.b16 %v4879
      %v5868 = vunpack.c.l.b16 %v4880
      %v5869 = vunpack.c.h.b16 %v4880
      %v5870 = vunpack.c.l.b16 %v4881
      %v5871 = vunpack.c.h.b16 %v4881
      %v5872 = vunpack.c.l.b16 %v4882
      %v5873 = vunpack.c.h.b16 %v4882
      %v5874 = vunpack.c.l.b16 %v4883
      %v5875 = vunpack.c.h.b16 %v4883
      %v5876 = vunpack.c.l.b16 %v4884
      %v5877 = vunpack.c.h.b16 %v4884
      %v5878 = vunpack.c.l.b16 %v4885
      %v5879 = vunpack.c.h.b16 %v4885
      %v5880 = vunpack.c.l.b16 %v4886
      %v5881 = vunpack.c.h.b16 %v4886
      %v5882 = vunpack.c.l.b16 %v4887
      %v5883 = vunpack.c.h.b16 %v4887
      %v5884 = vunpack.c.l.b16 %v4888
      %v5885 = vunpack.c.h.b16 %v4888
      %v5886 = vunpack.c.l.b16 %v4889
      %v5887 = vunpack.c.h.b16 %v4889
      %v5888 = vunpack.c.l.b16 %v4890
      %v5889 = vunpack.c.h.b16 %v4890
      %v5890 = vunpack.c.l.b16 %v4891
      %v5891 = vunpack.c.h.b16 %v4891
      %v5892 = vunpack.c.l.b16 %v4892
      %v5893 = vunpack.c.h.b16 %v4892
      %v5894 = vunpack.c.l.b16 %v4893
      %v5895 = vunpack.c.h.b16 %v4893
      %v5896 = vunpack.c.l.b16 %v4894
      %v5897 = vunpack.c.h.b16 %v4894
      %v5898 = vunpack.c.l.b16 %v4895
      %v5899 = vunpack.c.h.b16 %v4895
      %v5900 = vunpack.c.l.b16 %v4896
      %v5901 = vunpack.c.h.b16 %v4896
      %v5902 = vunpack.c.l.b16 %v4897
      %v5903 = vunpack.c.h.b16 %v4897
      %v5904 = vunpack.c.l.b16 %v4898
      %v5905 = vunpack.c.h.b16 %v4898
      %v5906 = vunpack.c.l.b16 %v4899
      %v5907 = vunpack.c.h.b16 %v4899
      %v5908 = vunpack.c.l.b16 %v4900
      %v5909 = vunpack.c.h.b16 %v4900
      %v5910 = vunpack.c.l.b16 %v4901
      %v5911 = vunpack.c.h.b16 %v4901
      %v5912 = vunpack.c.l.b16 %v4902
      %v5913 = vunpack.c.h.b16 %v4902
      %v5914 = vunpack.c.l.b16 %v4903
      %v5915 = vunpack.c.h.b16 %v4903
      %v5916 = vunpack.c.l.b16 %v4904
      %v5917 = vunpack.c.h.b16 %v4904
      %v5918 = vunpack.c.l.b16 %v4905
      %v5919 = vunpack.c.h.b16 %v4905
      %v5920 = vunpack.c.l.b16 %v4906
      %v5921 = vunpack.c.h.b16 %v4906
      %v5922 = vunpack.c.l.b16 %v4907
      %v5923 = vunpack.c.h.b16 %v4907
      %v5924 = vunpack.c.l.b16 %v4908
      %v5925 = vunpack.c.h.b16 %v4908
      %v5926 = vunpack.c.l.b16 %v4909
      %v5927 = vunpack.c.h.b16 %v4909
      %v5928 = vunpack.c.l.b16 %v4910
      %v5929 = vunpack.c.h.b16 %v4910
      %v5930 = vunpack.c.l.b16 %v4911
      %v5931 = vunpack.c.h.b16 %v4911
      %v5932 = vunpack.c.l.b16 %v4912
      %v5933 = vunpack.c.h.b16 %v4912
      %v5934 = vunpack.c.l.b16 %v4913
      %v5935 = vunpack.c.h.b16 %v4913
      %v5936 = vunpack.c.l.b16 %v4914
      %v5937 = vunpack.c.h.b16 %v4914
      %v5938 = vunpack.c.l.b16 %v4915
      %v5939 = vunpack.c.h.b16 %v4915
      %v5940 = vunpack.c.l.b16 %v4916
      %v5941 = vunpack.c.h.b16 %v4916
      %v5942 = vunpack.c.l.b16 %v4917
      %v5943 = vunpack.c.h.b16 %v4917
      %v5944 = vunpack.c.l.b16 %v4918
      %v5945 = vunpack.c.h.b16 %v4918
      %v5946 = vunpack.c.l.b16 %v4919
      %v5947 = vunpack.c.h.b16 %v4919
      %v5948 = vunpack.c.l.b16 %v4920
      %v5949 = vunpack.c.h.b16 %v4920
      %v5950 = vunpack.c.l.b16 %v4921
      %v5951 = vunpack.c.h.b16 %v4921
      %v5952 = vunpack.c.l.b16 %v4922
      %v5953 = vunpack.c.h.b16 %v4922
      %v5954 = vunpack.c.l.b16 %v4923
      %v5955 = vunpack.c.h.b16 %v4923
      %v5956 = vunpack.c.l.b16 %v4924
      %v5957 = vunpack.c.h.b16 %v4924
      %v5958 = vunpack.c.l.b16 %v4925
      %v5959 = vunpack.c.h.b16 %v4925
      %v5960 = vunpack.c.l.b16 %v4926
      %v5961 = vunpack.c.h.b16 %v4926
      %v5962 = vunpack.c.l.b16 %v4927
      %v5963 = vunpack.c.h.b16 %v4927
      %v5964 = vunpack.c.l.b16 %v4928
      %v5965 = vunpack.c.h.b16 %v4928
      %v5966 = vunpack.c.l.b16 %v4929
      %v5967 = vunpack.c.h.b16 %v4929
      %v5968 = vunpack.c.l.b16 %v4930
      %v5969 = vunpack.c.h.b16 %v4930
      %v5970 = vunpack.c.l.b16 %v4931
      %v5971 = vunpack.c.h.b16 %v4931
      %v5972 = vunpack.c.l.b16 %v4932
      %v5973 = vunpack.c.h.b16 %v4932
      %v5974 = vunpack.c.l.b16 %v4933
      %v5975 = vunpack.c.h.b16 %v4933
      %v5976 = vunpack.c.l.b16 %v4934
      %v5977 = vunpack.c.h.b16 %v4934
      %v5978 = vunpack.c.l.b16 %v4935
      %v5979 = vunpack.c.h.b16 %v4935
      %v5980 = vunpack.c.l.b16 %v4936
      %v5981 = vunpack.c.h.b16 %v4936
      %v5982 = vunpack.c.l.b16 %v4937
      %v5983 = vunpack.c.h.b16 %v4937
      %v5984 = vunpack.c.l.b16 %v4938
      %v5985 = vunpack.c.h.b16 %v4938
      %v5986 = vunpack.c.l.b16 %v4939
      %v5987 = vunpack.c.h.b16 %v4939
      %v5988 = vunpack.c.l.b16 %v4940
      %v5989 = vunpack.c.h.b16 %v4940
      %v5990 = vunpack.c.l.b16 %v4941
      %v5991 = vunpack.c.h.b16 %v4941
      %v5992 = vunpack.c.l.b16 %v4942
      %v5993 = vunpack.c.h.b16 %v4942
      %v5994 = vunpack.c.l.b16 %v4943
      %v5995 = vunpack.c.h.b16 %v4943
      %v5996 = vunpack.c.l.b16 %v4944
      %v5997 = vunpack.c.h.b16 %v4944
      %v5998 = vunpack.c.l.b16 %v4945
      %v5999 = vunpack.c.h.b16 %v4945
      %v6000 = vunpack.c.l.b16 %v4946
      %v6001 = vunpack.c.h.b16 %v4946
      %v6002 = vunpack.c.l.b16 %v4947
      %v6003 = vunpack.c.h.b16 %v4947
      %v6004 = vunpack.c.l.b16 %v4948
      %v6005 = vunpack.c.h.b16 %v4948
      %v6006 = vunpack.c.l.b16 %v4949
      %v6007 = vunpack.c.h.b16 %v4949
      %v6008 = vunpack.c.l.b16 %v4950
      %v6009 = vunpack.c.h.b16 %v4950
      %v6010 = vunpack.c.l.b16 %v4951
      %v6011 = vunpack.c.h.b16 %v4951
      %v6012 = vunpack.c.l.b16 %v4952
      %v6013 = vunpack.c.h.b16 %v4952
      %v6014 = vunpack.c.l.b16 %v4953
      %v6015 = vunpack.c.h.b16 %v4953
      %v6016 = vunpack.c.l.b16 %v4954
      %v6017 = vunpack.c.h.b16 %v4954
      %v6018 = vunpack.c.l.b16 %v4955
      %v6019 = vunpack.c.h.b16 %v4955
      %v6020 = vunpack.c.l.b16 %v4956
      %v6021 = vunpack.c.h.b16 %v4956
      %v6022 = vunpack.c.l.b16 %v4957
      %v6023 = vunpack.c.h.b16 %v4957
      %v6024 = vunpack.c.l.b16 %v4958
      %v6025 = vunpack.c.h.b16 %v4958
      %v6026 = vunpack.c.l.b16 %v4959
      %v6027 = vunpack.c.h.b16 %v4959
      %v6028 = vunpack.c.l.b16 %v4960
      %v6029 = vunpack.c.h.b16 %v4960
      %v6030 = vunpack.c.l.b16 %v4961
      %v6031 = vunpack.c.h.b16 %v4961
      %v6032 = vunpack.c.l.b16 %v4962
      %v6033 = vunpack.c.h.b16 %v4962
      %v6034 = vunpack.c.l.b16 %v4963
      %v6035 = vunpack.c.h.b16 %v4963
      %v6036 = vunpack.c.l.b16 %v4964
      %v6037 = vunpack.c.h.b16 %v4964
      %v6038 = vunpack.c.l.b16 %v4965
      %v6039 = vunpack.c.h.b16 %v4965
      %v6040 = vunpack.c.l.b16 %v4966
      %v6041 = vunpack.c.h.b16 %v4966
      %v6042 = vunpack.c.l.b16 %v4967
      %v6043 = vunpack.c.h.b16 %v4967
      %v6044 = vunpack.c.l.b16 %v4968
      %v6045 = vunpack.c.h.b16 %v4968
      %v6046 = vunpack.c.l.b16 %v4969
      %v6047 = vunpack.c.h.b16 %v4969
      %v6048 = vunpack.c.l.b16 %v4970
      %v6049 = vunpack.c.h.b16 %v4970
      %v6050 = vunpack.c.l.b16 %v4971
      %v6051 = vunpack.c.h.b16 %v4971
      %v6052 = vunpack.c.l.b16 %v4972
      %v6053 = vunpack.c.h.b16 %v4972
      %v6054 = vunpack.c.l.b16 %v4973
      %v6055 = vunpack.c.h.b16 %v4973
      %v6056 = vunpack.c.l.b16 %v4974
      %v6057 = vunpack.c.h.b16 %v4974
      %v6058 = vunpack.c.l.b16 %v4975
      %v6059 = vunpack.c.h.b16 %v4975
      %v6060 = vunpack.c.l.b16 %v4976
      %v6061 = vunpack.c.h.b16 %v4976
      %v6062 = vunpack.c.l.b16 %v4977
      %v6063 = vunpack.c.h.b16 %v4977
      %v6064 = vunpack.c.l.b16 %v4978
      %v6065 = vunpack.c.h.b16 %v4978
      %v6066 = vunpack.c.l.b16 %v4979
      %v6067 = vunpack.c.h.b16 %v4979
      %v6068 = vunpack.c.l.b16 %v4980
      %v6069 = vunpack.c.h.b16 %v4980
      %v6070 = vunpack.c.l.b16 %v4981
      %v6071 = vunpack.c.h.b16 %v4981
      %v6072 = vunpack.c.l.b16 %v4982
      %v6073 = vunpack.c.h.b16 %v4982
      %v6074 = vunpack.c.l.b16 %v4983
      %v6075 = vunpack.c.h.b16 %v4983
      %v6076 = vunpack.c.l.b16 %v4984
      %v6077 = vunpack.c.h.b16 %v4984
      %v6078 = vunpack.c.l.b16 %v4985
      %v6079 = vunpack.c.h.b16 %v4985
      %v6080 = vunpack.c.l.b16 %v4986
      %v6081 = vunpack.c.h.b16 %v4986
      %v6082 = vunpack.c.l.b16 %v4987
      %v6083 = vunpack.c.h.b16 %v4987
      %v6084 = vunpack.c.l.b16 %v4988
      %v6085 = vunpack.c.h.b16 %v4988
      %v6086 = vunpack.c.l.b16 %v4989
      %v6087 = vunpack.c.h.b16 %v4989
      %v6088 = vunpack.c.l.b16 %v4990
      %v6089 = vunpack.c.h.b16 %v4990
      %v6090 = vunpack.c.l.b16 %v4991
      %v6091 = vunpack.c.h.b16 %v4991
      %v6092 = vunpack.c.l.b16 %v4992
      %v6093 = vunpack.c.h.b16 %v4992
      %v6094 = vunpack.c.l.b16 %v4993
      %v6095 = vunpack.c.h.b16 %v4993
      %v6096 = vunpack.c.l.b16 %v4994
      %v6097 = vunpack.c.h.b16 %v4994
      %v6098 = vunpack.c.l.b16 %v4995
      %v6099 = vunpack.c.h.b16 %v4995
      %v6100 = vunpack.c.l.b16 %v4996
      %v6101 = vunpack.c.h.b16 %v4996
      %v6102 = vunpack.c.l.b16 %v4997
      %v6103 = vunpack.c.h.b16 %v4997
      %v6104 = vunpack.c.l.b16 %v4998
      %v6105 = vunpack.c.h.b16 %v4998
      %v6106 = vunpack.c.l.b16 %v4999
      %v6107 = vunpack.c.h.b16 %v4999
      %v6108 = vunpack.c.l.b16 %v5000
      %v6109 = vunpack.c.h.b16 %v5000
      %v6110 = vunpack.c.l.b16 %v5001
      %v6111 = vunpack.c.h.b16 %v5001
      %v6112 = vunpack.c.l.b16 %v5002
      %v6113 = vunpack.c.h.b16 %v5002
      %v6114 = vunpack.c.l.b16 %v5003
      %v6115 = vunpack.c.h.b16 %v5003
      %v6116 = vunpack.c.l.b16 %v5004
      %v6117 = vunpack.c.h.b16 %v5004
      %v6118 = vunpack.c.l.b16 %v5005
      %v6119 = vunpack.c.h.b16 %v5005
      %v6120 = vunpack.c.l.b16 %v5006
      %v6121 = vunpack.c.h.b16 %v5006
      %v6122 = vunpack.c.l.b16 %v5007
      %v6123 = vunpack.c.h.b16 %v5007
      %v6124 = vunpack.c.l.b16 %v5008
      %v6125 = vunpack.c.h.b16 %v5008
      %v6126 = vunpack.c.l.b16 %v5009
      %v6127 = vunpack.c.h.b16 %v5009
      %v6128 = vunpack.c.l.b16 %v5010
      %v6129 = vunpack.c.h.b16 %v5010
      %v6130 = vunpack.c.l.b16 %v5011
      %v6131 = vunpack.c.h.b16 %v5011
      %v6132 = vunpack.c.l.b16 %v5012
      %v6133 = vunpack.c.h.b16 %v5012
      %v6134 = vunpack.c.l.b16 %v5013
      %v6135 = vunpack.c.h.b16 %v5013
      %v6136 = vunpack.c.l.b16 %v5014
      %v6137 = vunpack.c.h.b16 %v5014
      %v6138 = vunpack.c.l.b16 %v5015
      %v6139 = vunpack.c.h.b16 %v5015
      %v6140 = vunpack.c.l.b16 %v5016
      %v6141 = vunpack.c.h.b16 %v5016
      %v6142 = vunpack.c.l.b16 %v5017
      %v6143 = vunpack.c.h.b16 %v5017
      %v6144 = vunpack.c.l.b16 %v5018
      %v6145 = vunpack.c.h.b16 %v5018
      %v6146 = vunpack.c.l.b16 %v5019
      %v6147 = vunpack.c.h.b16 %v5019
      %v6148 = vunpack.c.l.b16 %v5020
      %v6149 = vunpack.c.h.b16 %v5020
      %v6150 = vunpack.c.l.b16 %v5021
      %v6151 = vunpack.c.h.b16 %v5021
      %v6152 = vunpack.c.l.b16 %v5022
      %v6153 = vunpack.c.h.b16 %v5022
      %v6154 = vunpack.c.l.b16 %v5023
      %v6155 = vunpack.c.h.b16 %v5023
      %v6156 = vunpack.c.l.b16 %v5024
      %v6157 = vunpack.c.h.b16 %v5024
      %v6158 = vunpack.c.l.b16 %v5025
      %v6159 = vunpack.c.h.b16 %v5025
      %v6160 = vunpack.c.l.b16 %v5026
      %v6161 = vunpack.c.h.b16 %v5026
      %v6162 = vunpack.c.l.b16 %v5027
      %v6163 = vunpack.c.h.b16 %v5027
      %v6164 = vunpack.c.l.b16 %v5028
      %v6165 = vunpack.c.h.b16 %v5028
      %v6166 = vunpack.c.l.b16 %v5029
      %v6167 = vunpack.c.h.b16 %v5029
      %v6168 = vunpack.c.l.b16 %v5030
      %v6169 = vunpack.c.h.b16 %v5030
      %v6170 = vunpack.c.l.b16 %v5031
      %v6171 = vunpack.c.h.b16 %v5031
      %v6172 = vunpack.c.l.b16 %v5032
      %v6173 = vunpack.c.h.b16 %v5032
      %v6174 = vunpack.c.l.b16 %v5033
      %v6175 = vunpack.c.h.b16 %v5033
      %v6176 = vunpack.c.l.b16 %v5034
      %v6177 = vunpack.c.h.b16 %v5034
      %v6178 = vunpack.c.l.b16 %v5035
      %v6179 = vunpack.c.h.b16 %v5035
      %v6180 = vunpack.c.l.b16 %v5036
      %v6181 = vunpack.c.h.b16 %v5036
      %v6182 = vunpack.c.l.b16 %v5037
      %v6183 = vunpack.c.h.b16 %v5037
      %v6184 = vunpack.c.l.b16 %v5038
      %v6185 = vunpack.c.h.b16 %v5038
      %v6186 = vunpack.c.l.b16 %v5039
      %v6187 = vunpack.c.h.b16 %v5039
      %v6188 = vunpack.c.l.b16 %v5040
      %v6189 = vunpack.c.h.b16 %v5040
      %v6190 = vunpack.c.l.b16 %v5041
      %v6191 = vunpack.c.h.b16 %v5041
      %v6192 = vunpack.c.l.b16 %v5042
      %v6193 = vunpack.c.h.b16 %v5042
      %v6194 = vunpack.c.l.b16 %v5043
      %v6195 = vunpack.c.h.b16 %v5043
      %v6196 = vunpack.c.l.b16 %v5044
      %v6197 = vunpack.c.h.b16 %v5044
      %v6198 = vunpack.c.l.b16 %v5045
      %v6199 = vunpack.c.h.b16 %v5045
      %v6200 = vunpack.c.l.b16 %v5046
      %v6201 = vunpack.c.h.b16 %v5046
      %v6202 = vunpack.c.l.b16 %v5047
      %v6203 = vunpack.c.h.b16 %v5047
      %v6204 = vunpack.c.l.b16 %v5048
      %v6205 = vunpack.c.h.b16 %v5048
      %v6206 = vunpack.c.l.b16 %v5049
      %v6207 = vunpack.c.h.b16 %v5049
      %v6208 = vunpack.c.l.b16 %v5050
      %v6209 = vunpack.c.h.b16 %v5050
      %v6210 = vunpack.c.l.b16 %v5051
      %v6211 = vunpack.c.h.b16 %v5051
      %v6212 = vunpack.c.l.b16 %v5052
      %v6213 = vunpack.c.h.b16 %v5052
      %v6214 = vunpack.c.l.b16 %v5053
      %v6215 = vunpack.c.h.b16 %v5053
      %v6216 = vunpack.c.l.b16 %v5054
      %v6217 = vunpack.c.h.b16 %v5054
      %v6218 = vunpack.c.l.b16 %v5055
      %v6219 = vunpack.c.h.b16 %v5055
      %v6220 = vunpack.c.l.b16 %v5056
      %v6221 = vunpack.c.h.b16 %v5056
      %v6222 = vunpack.c.l.b16 %v5057
      %v6223 = vunpack.c.h.b16 %v5057
      %v6224 = vunpack.c.l.b16 %v5058
      %v6225 = vunpack.c.h.b16 %v5058
      %v6226 = vunpack.c.l.b16 %v5059
      %v6227 = vunpack.c.h.b16 %v5059
      %v6228 = vunpack.c.l.b16 %v5060
      %v6229 = vunpack.c.h.b16 %v5060
      %v6230 = vunpack.c.l.b16 %v5061
      %v6231 = vunpack.c.h.b16 %v5061
      %v6232 = vunpack.c.l.b16 %v5062
      %v6233 = vunpack.c.h.b16 %v5062
      %v6234 = vunpack.c.l.b16 %v5063
      %v6235 = vunpack.c.h.b16 %v5063
      %v6236 = vunpack.c.l.b16 %v5064
      %v6237 = vunpack.c.h.b16 %v5064
      %v6238 = vunpack.c.l.b16 %v5065
      %v6239 = vunpack.c.h.b16 %v5065
      %v6240 = vunpack.c.l.b16 %v5066
      %v6241 = vunpack.c.h.b16 %v5066
      %v6242 = vunpack.c.l.b16 %v5067
      %v6243 = vunpack.c.h.b16 %v5067
      %v6244 = vunpack.c.l.b16 %v5068
      %v6245 = vunpack.c.h.b16 %v5068
      %v6246 = vunpack.c.l.b16 %v5069
      %v6247 = vunpack.c.h.b16 %v5069
      %v6248 = vunpack.c.l.b16 %v5070
      %v6249 = vunpack.c.h.b16 %v5070
      %v6250 = vunpack.c.l.b16 %v5071
      %v6251 = vunpack.c.h.b16 %v5071
      %v6252 = vunpack.c.l.b16 %v5072
      %v6253 = vunpack.c.h.b16 %v5072
      %v6254 = vunpack.c.l.b16 %v5073
      %v6255 = vunpack.c.h.b16 %v5073
      %v6256 = vunpack.c.l.b16 %v5074
      %v6257 = vunpack.c.h.b16 %v5074
      %v6258 = vunpack.c.l.b16 %v5075
      %v6259 = vunpack.c.h.b16 %v5075
      %v6260 = vunpack.c.l.b16 %v5076
      %v6261 = vunpack.c.h.b16 %v5076
      %v6262 = vunpack.c.l.b16 %v5077
      %v6263 = vunpack.c.h.b16 %v5077
      %v6264 = vunpack.c.l.b16 %v5078
      %v6265 = vunpack.c.h.b16 %v5078
      %v6266 = vunpack.c.l.b16 %v5079
      %v6267 = vunpack.c.h.b16 %v5079
      %v6268 = vunpack.c.l.b16 %v5080
      %v6269 = vunpack.c.h.b16 %v5080
      %v6270 = vunpack.c.l.b16 %v5081
      %v6271 = vunpack.c.h.b16 %v5081
      %v6272 = vunpack.c.l.b16 %v5082
      %v6273 = vunpack.c.h.b16 %v5082
      %v6274 = vunpack.c.l.b16 %v5083
      %v6275 = vunpack.c.h.b16 %v5083
      %v6276 = vunpack.c.l.b16 %v5084
      %v6277 = vunpack.c.h.b16 %v5084
      %v6278 = vunpack.c.l.b16 %v5085
      %v6279 = vunpack.c.h.b16 %v5085
      %v6280 = vpack.c.b16 %v5520, %v5512
      %v6281 = vpack.c.b16 %v5521, %v5513
      %v6282 = vpack.c.b16 %v5522, %v5514
      %v6283 = vpack.c.b16 %v5523, %v5515
      %v6284 = vpack.c.b16 %v5524, %v5516
      %v6285 = vpack.c.b16 %v5525, %v5517
      %v6286 = vpack.c.b16 %v5526, %v5518
      %v6287 = vpack.c.b16 %v5527, %v5519
      %v6288 = vpack.c.b16 %v5536, %v5528
      %v6289 = vpack.c.b16 %v5537, %v5529
      %v6290 = vpack.c.b16 %v5538, %v5530
      %v6291 = vpack.c.b16 %v5539, %v5531
      %v6292 = vpack.c.b16 %v5540, %v5532
      %v6293 = vpack.c.b16 %v5541, %v5533
      %v6294 = vpack.c.b16 %v5542, %v5534
      %v6295 = vpack.c.b16 %v5543, %v5535
      %v6296 = vpack.c.b16 %v5552, %v5544
      %v6297 = vpack.c.b16 %v5553, %v5545
      %v6298 = vpack.c.b16 %v5554, %v5546
      %v6299 = vpack.c.b16 %v5555, %v5547
      %v6300 = vpack.c.b16 %v5556, %v5548
      %v6301 = vpack.c.b16 %v5557, %v5549
      %v6302 = vpack.c.b16 %v5558, %v5550
      %v6303 = vpack.c.b16 %v5559, %v5551
      %v6304 = vpack.c.b16 %v5568, %v5560
      %v6305 = vpack.c.b16 %v5569, %v5561
      %v6306 = vpack.c.b16 %v5570, %v5562
      %v6307 = vpack.c.b16 %v5571, %v5563
      %v6308 = vpack.c.b16 %v5572, %v5564
      %v6309 = vpack.c.b16 %v5573, %v5565
      %v6310 = vpack.c.b16 %v5574, %v5566
      %v6311 = vpack.c.b16 %v5575, %v5567
      %v6312 = vpack.c.b16 %v5584, %v5576
      %v6313 = vpack.c.b16 %v5585, %v5577
      %v6314 = vpack.c.b16 %v5586, %v5578
      %v6315 = vpack.c.b16 %v5587, %v5579
      %v6316 = vpack.c.b16 %v5588, %v5580
      %v6317 = vpack.c.b16 %v5589, %v5581
      %v6318 = vpack.c.b16 %v5590, %v5582
      %v6319 = vpack.c.b16 %v5591, %v5583
      %v6320 = vpack.c.b16 %v5600, %v5592
      %v6321 = vpack.c.b16 %v5601, %v5593
      %v6322 = vpack.c.b16 %v5602, %v5594
      %v6323 = vpack.c.b16 %v5603, %v5595
      %v6324 = vpack.c.b16 %v5604, %v5596
      %v6325 = vpack.c.b16 %v5605, %v5597
      %v6326 = vpack.c.b16 %v5606, %v5598
      %v6327 = vpack.c.b16 %v5607, %v5599
      %v6328 = vpack.c.b16 %v5616, %v5608
      %v6329 = vpack.c.b16 %v5617, %v5609
      %v6330 = vpack.c.b16 %v5618, %v5610
      %v6331 = vpack.c.b16 %v5619, %v5611
      %v6332 = vpack.c.b16 %v5620, %v5612
      %v6333 = vpack.c.b16 %v5621, %v5613
      %v6334 = vpack.c.b16 %v5622, %v5614
      %v6335 = vpack.c.b16 %v5623, %v5615
      %v6336 = vpack.c.b16 %v5632, %v5624
      %v6337 = vpack.c.b16 %v5633, %v5625
      %v6338 = vpack.c.b16 %v5634, %v5626
      %v6339 = vpack.c.b16 %v5635, %v5627
      %v6340 = vpack.c.b16 %v5636, %v5628
      %v6341 = vpack.c.b16 %v5637, %v5629
      %v6342 = vpack.c.b16 %v5638, %v5630
      %v6343 = vpack.c.b16 %v5639, %v5631
      %v6344 = vpack.c.b16 %v5648, %v5640
      %v6345 = vpack.c.b16 %v5649, %v5641
      %v6346 = vpack.c.b16 %v5650, %v5642
      %v6347 = vpack.c.b16 %v5651, %v5643
      %v6348 = vpack.c.b16 %v5652, %v5644
      %v6349 = vpack.c.b16 %v5653, %v5645
      %v6350 = vpack.c.b16 %v5654, %v5646
      %v6351 = vpack.c.b16 %v5655, %v5647
      %v6352 = vpack.c.b16 %v5664, %v5656
      %v6353 = vpack.c.b16 %v5665, %v5657
      %v6354 = vpack.c.b16 %v5666, %v5658
      %v6355 = vpack.c.b16 %v5667, %v5659
      %v6356 = vpack.c.b16 %v5668, %v5660
      %v6357 = vpack.c.b16 %v5669, %v5661
      %v6358 = vpack.c.b16 %v5670, %v5662
      %v6359 = vpack.c.b16 %v5671, %v5663
      %v6360 = vpack.c.b16 %v5680, %v5672
      %v6361 = vpack.c.b16 %v5681, %v5673
      %v6362 = vpack.c.b16 %v5682, %v5674
      %v6363 = vpack.c.b16 %v5683, %v5675
      %v6364 = vpack.c.b16 %v5684, %v5676
      %v6365 = vpack.c.b16 %v5685, %v5677
      %v6366 = vpack.c.b16 %v5686, %v5678
      %v6367 = vpack.c.b16 %v5687, %v5679
      %v6368 = vpack.c.b16 %v5696, %v5688
      %v6369 = vpack.c.b16 %v5697, %v5689
      %v6370 = vpack.c.b16 %v5698, %v5690
      %v6371 = vpack.c.b16 %v5699, %v5691
      %v6372 = vpack.c.b16 %v5700, %v5692
      %v6373 = vpack.c.b16 %v5701, %v5693
      %v6374 = vpack.c.b16 %v5702, %v5694
      %v6375 = vpack.c.b16 %v5703, %v5695
      %v6376 = vpack.c.b16 %v5712, %v5704
      %v6377 = vpack.c.b16 %v5713, %v5705
      %v6378 = vpack.c.b16 %v5714, %v5706
      %v6379 = vpack.c.b16 %v5715, %v5707
      %v6380 = vpack.c.b16 %v5716, %v5708
      %v6381 = vpack.c.b16 %v5717, %v5709
      %v6382 = vpack.c.b16 %v5718, %v5710
      %v6383 = vpack.c.b16 %v5719, %v5711
      %v6384 = vpack.c.b16 %v5728, %v5720
      %v6385 = vpack.c.b16 %v5729, %v5721
      %v6386 = vpack.c.b16 %v5730, %v5722
      %v6387 = vpack.c.b16 %v5731, %v5723
      %v6388 = vpack.c.b16 %v5732, %v5724
      %v6389 = vpack.c.b16 %v5733, %v5725
      %v6390 = vpack.c.b16 %v5734, %v5726
      %v6391 = vpack.c.b16 %v5735, %v5727
      %v6392 = vpack.c.b16 %v5744, %v5736
      %v6393 = vpack.c.b16 %v5745, %v5737
      %v6394 = vpack.c.b16 %v5746, %v5738
      %v6395 = vpack.c.b16 %v5747, %v5739
      %v6396 = vpack.c.b16 %v5748, %v5740
      %v6397 = vpack.c.b16 %v5749, %v5741
      %v6398 = vpack.c.b16 %v5750, %v5742
      %v6399 = vpack.c.b16 %v5751, %v5743
      %v6400 = vpack.c.b16 %v5760, %v5752
      %v6401 = vpack.c.b16 %v5761, %v5753
      %v6402 = vpack.c.b16 %v5762, %v5754
      %v6403 = vpack.c.b16 %v5763, %v5755
      %v6404 = vpack.c.b16 %v5764, %v5756
      %v6405 = vpack.c.b16 %v5765, %v5757
      %v6406 = vpack.c.b16 %v5766, %v5758
      %v6407 = vpack.c.b16 %v5767, %v5759
      %v6408 = vpack.c.b16 %v5776, %v5768
      %v6409 = vpack.c.b16 %v5777, %v5769
      %v6410 = vpack.c.b16 %v5778, %v5770
      %v6411 = vpack.c.b16 %v5779, %v5771
      %v6412 = vpack.c.b16 %v5780, %v5772
      %v6413 = vpack.c.b16 %v5781, %v5773
      %v6414 = vpack.c.b16 %v5782, %v5774
      %v6415 = vpack.c.b16 %v5783, %v5775
      %v6416 = vpack.c.b16 %v5792, %v5784
      %v6417 = vpack.c.b16 %v5793, %v5785
      %v6418 = vpack.c.b16 %v5794, %v5786
      %v6419 = vpack.c.b16 %v5795, %v5787
      %v6420 = vpack.c.b16 %v5796, %v5788
      %v6421 = vpack.c.b16 %v5797, %v5789
      %v6422 = vpack.c.b16 %v5798, %v5790
      %v6423 = vpack.c.b16 %v5799, %v5791
      %v6424 = vpack.c.b16 %v5808, %v5800
      %v6425 = vpack.c.b16 %v5809, %v5801
      %v6426 = vpack.c.b16 %v5810, %v5802
      %v6427 = vpack.c.b16 %v5811, %v5803
      %v6428 = vpack.c.b16 %v5812, %v5804
      %v6429 = vpack.c.b16 %v5813, %v5805
      %v6430 = vpack.c.b16 %v5814, %v5806
      %v6431 = vpack.c.b16 %v5815, %v5807
      %v6432 = vpack.c.b16 %v5824, %v5816
      %v6433 = vpack.c.b16 %v5825, %v5817
      %v6434 = vpack.c.b16 %v5826, %v5818
      %v6435 = vpack.c.b16 %v5827, %v5819
      %v6436 = vpack.c.b16 %v5828, %v5820
      %v6437 = vpack.c.b16 %v5829, %v5821
      %v6438 = vpack.c.b16 %v5830, %v5822
      %v6439 = vpack.c.b16 %v5831, %v5823
      %v6440 = vpack.c.b16 %v5840, %v5832
      %v6441 = vpack.c.b16 %v5841, %v5833
      %v6442 = vpack.c.b16 %v5842, %v5834
      %v6443 = vpack.c.b16 %v5843, %v5835
      %v6444 = vpack.c.b16 %v5844, %v5836
      %v6445 = vpack.c.b16 %v5845, %v5837
      %v6446 = vpack.c.b16 %v5846, %v5838
      %v6447 = vpack.c.b16 %v5847, %v5839
      %v6448 = vpack.c.b16 %v5856, %v5848
      %v6449 = vpack.c.b16 %v5857, %v5849
      %v6450 = vpack.c.b16 %v5858, %v5850
      %v6451 = vpack.c.b16 %v5859, %v5851
      %v6452 = vpack.c.b16 %v5860, %v5852
      %v6453 = vpack.c.b16 %v5861, %v5853
      %v6454 = vpack.c.b16 %v5862, %v5854
      %v6455 = vpack.c.b16 %v5863, %v5855
      %v6456 = vpack.c.b16 %v5872, %v5864
      %v6457 = vpack.c.b16 %v5873, %v5865
      %v6458 = vpack.c.b16 %v5874, %v5866
      %v6459 = vpack.c.b16 %v5875, %v5867
      %v6460 = vpack.c.b16 %v5876, %v5868
      %v6461 = vpack.c.b16 %v5877, %v5869
      %v6462 = vpack.c.b16 %v5878, %v5870
      %v6463 = vpack.c.b16 %v5879, %v5871
      %v6464 = vpack.c.b16 %v5888, %v5880
      %v6465 = vpack.c.b16 %v5889, %v5881
      %v6466 = vpack.c.b16 %v5890, %v5882
      %v6467 = vpack.c.b16 %v5891, %v5883
      %v6468 = vpack.c.b16 %v5892, %v5884
      %v6469 = vpack.c.b16 %v5893, %v5885
      %v6470 = vpack.c.b16 %v5894, %v5886
      %v6471 = vpack.c.b16 %v5895, %v5887
      %v6472 = vpack.c.b16 %v5904, %v5896
      %v6473 = vpack.c.b16 %v5905, %v5897
      %v6474 = vpack.c.b16 %v5906, %v5898
      %v6475 = vpack.c.b16 %v5907, %v5899
      %v6476 = vpack.c.b16 %v5908, %v5900
      %v6477 = vpack.c.b16 %v5909, %v5901
      %v6478 = vpack.c.b16 %v5910, %v5902
      %v6479 = vpack.c.b16 %v5911, %v5903
      %v6480 = vpack.c.b16 %v5920, %v5912
      %v6481 = vpack.c.b16 %v5921, %v5913
      %v6482 = vpack.c.b16 %v5922, %v5914
      %v6483 = vpack.c.b16 %v5923, %v5915
      %v6484 = vpack.c.b16 %v5924, %v5916
      %v6485 = vpack.c.b16 %v5925, %v5917
      %v6486 = vpack.c.b16 %v5926, %v5918
      %v6487 = vpack.c.b16 %v5927, %v5919
      %v6488 = vpack.c.b16 %v5936, %v5928
      %v6489 = vpack.c.b16 %v5937, %v5929
      %v6490 = vpack.c.b16 %v5938, %v5930
      %v6491 = vpack.c.b16 %v5939, %v5931
      %v6492 = vpack.c.b16 %v5940, %v5932
      %v6493 = vpack.c.b16 %v5941, %v5933
      %v6494 = vpack.c.b16 %v5942, %v5934
      %v6495 = vpack.c.b16 %v5943, %v5935
      %v6496 = vpack.c.b16 %v5952, %v5944
      %v6497 = vpack.c.b16 %v5953, %v5945
      %v6498 = vpack.c.b16 %v5954, %v5946
      %v6499 = vpack.c.b16 %v5955, %v5947
      %v6500 = vpack.c.b16 %v5956, %v5948
      %v6501 = vpack.c.b16 %v5957, %v5949
      %v6502 = vpack.c.b16 %v5958, %v5950
      %v6503 = vpack.c.b16 %v5959, %v5951
      %v6504 = vpack.c.b16 %v5968, %v5960
      %v6505 = vpack.c.b16 %v5969, %v5961
      %v6506 = vpack.c.b16 %v5970, %v5962
      %v6507 = vpack.c.b16 %v5971, %v5963
      %v6508 = vpack.c.b16 %v5972, %v5964
      %v6509 = vpack.c.b16 %v5973, %v5965
      %v6510 = vpack.c.b16 %v5974, %v5966
      %v6511 = vpack.c.b16 %v5975, %v5967
      %v6512 = vpack.c.b16 %v5984, %v5976
      %v6513 = vpack.c.b16 %v5985, %v5977
      %v6514 = vpack.c.b16 %v5986, %v5978
      %v6515 = vpack.c.b16 %v5987, %v5979
      %v6516 = vpack.c.b16 %v5988, %v5980
      %v6517 = vpack.c.b16 %v5989, %v5981
      %v6518 = vpack.c.b16 %v5990, %v5982
      %v6519 = vpack.c.b16 %v5991, %v5983
      %v6520 = vpack.c.b16 %v6000, %v5992
      %v6521 = vpack.c.b16 %v6001, %v5993
      %v6522 = vpack.c.b16 %v6002, %v5994
      %v6523 = vpack.c.b16 %v6003, %v5995
      %v6524 = vpack.c.b16 %v6004, %v5996
      %v6525 = vpack.c.b16 %v6005, %v5997
      %v6526 = vpack.c.b16 %v6006, %v5998
      %v6527 = vpack.c.b16 %v6007, %v5999
      %v6528 = vpack.c.b16 %v6016, %v6008
      %v6529 = vpack.c.b16 %v6017, %v6009
      %v6530 = vpack.c.b16 %v6018, %v6010
      %v6531 = vpack.c.b16 %v6019, %v6011
      %v6532 = vpack.c.b16 %v6020, %v6012
      %v6533 = vpack.c.b16 %v6021, %v6013
      %v6534 = vpack.c.b16 %v6022, %v6014
      %v6535 = vpack.c.b16 %v6023, %v6015
      %v6536 = vpack.c.b16 %v6032, %v6024
      %v6537 = vpack.c.b16 %v6033, %v6025
      %v6538 = vpack.c.b16 %v6034, %v6026
      %v6539 = vpack.c.b16 %v6035, %v6027
      %v6540 = vpack.c.b16 %v6036, %v6028
      %v6541 = vpack.c.b16 %v6037, %v6029
      %v6542 = vpack.c.b16 %v6038, %v6030
      %v6543 = vpack.c.b16 %v6039, %v6031
      %v6544 = vpack.c.b16 %v6048, %v6040
      %v6545 = vpack.c.b16 %v6049, %v6041
      %v6546 = vpack.c.b16 %v6050, %v6042
      %v6547 = vpack.c.b16 %v6051, %v6043
      %v6548 = vpack.c.b16 %v6052, %v6044
      %v6549 = vpack.c.b16 %v6053, %v6045
      %v6550 = vpack.c.b16 %v6054, %v6046
      %v6551 = vpack.c.b16 %v6055, %v6047
      %v6552 = vpack.c.b16 %v6064, %v6056
      %v6553 = vpack.c.b16 %v6065, %v6057
      %v6554 = vpack.c.b16 %v6066, %v6058
      %v6555 = vpack.c.b16 %v6067, %v6059
      %v6556 = vpack.c.b16 %v6068, %v6060
      %v6557 = vpack.c.b16 %v6069, %v6061
      %v6558 = vpack.c.b16 %v6070, %v6062
      %v6559 = vpack.c.b16 %v6071, %v6063
      %v6560 = vpack.c.b16 %v6080, %v6072
      %v6561 = vpack.c.b16 %v6081, %v6073
      %v6562 = vpack.c.b16 %v6082, %v6074
      %v6563 = vpack.c.b16 %v6083, %v6075
      %v6564 = vpack.c.b16 %v6084, %v6076
      %v6565 = vpack.c.b16 %v6085, %v6077
      %v6566 = vpack.c.b16 %v6086, %v6078
      %v6567 = vpack.c.b16 %v6087, %v6079
      %v6568 = vpack.c.b16 %v6096, %v6088
      %v6569 = vpack.c.b16 %v6097, %v6089
      %v6570 = vpack.c.b16 %v6098, %v6090
      %v6571 = vpack.c.b16 %v6099, %v6091
      %v6572 = vpack.c.b16 %v6100, %v6092
      %v6573 = vpack.c.b16 %v6101, %v6093
      %v6574 = vpack.c.b16 %v6102, %v6094
      %v6575 = vpack.c.b16 %v6103, %v6095
      %v6576 = vpack.c.b16 %v6112, %v6104
      %v6577 = vpack.c.b16 %v6113, %v6105
      %v6578 = vpack.c.b16 %v6114, %v6106
      %v6579 = vpack.c.b16 %v6115, %v6107
      %v6580 = vpack.c.b16 %v6116, %v6108
      %v6581 = vpack.c.b16 %v6117, %v6109
      %v6582 = vpack.c.b16 %v6118, %v6110
      %v6583 = vpack.c.b16 %v6119, %v6111
      %v6584 = vpack.c.b16 %v6128, %v6120
      %v6585 = vpack.c.b16 %v6129, %v6121
      %v6586 = vpack.c.b16 %v6130, %v6122
      %v6587 = vpack.c.b16 %v6131, %v6123
      %v6588 = vpack.c.b16 %v6132, %v6124
      %v6589 = vpack.c.b16 %v6133, %v6125
      %v6590 = vpack.c.b16 %v6134, %v6126
      %v6591 = vpack.c.b16 %v6135, %v6127
      %v6592 = vpack.c.b16 %v6144, %v6136
      %v6593 = vpack.c.b16 %v6145, %v6137
      %v6594 = vpack.c.b16 %v6146, %v6138
      %v6595 = vpack.c.b16 %v6147, %v6139
      %v6596 = vpack.c.b16 %v6148, %v6140
      %v6597 = vpack.c.b16 %v6149, %v6141
      %v6598 = vpack.c.b16 %v6150, %v6142
      %v6599 = vpack.c.b16 %v6151, %v6143
      %v6600 = vpack.c.b16 %v6160, %v6152
      %v6601 = vpack.c.b16 %v6161, %v6153
      %v6602 = vpack.c.b16 %v6162, %v6154
      %v6603 = vpack.c.b16 %v6163, %v6155
      %v6604 = vpack.c.b16 %v6164, %v6156
      %v6605 = vpack.c.b16 %v6165, %v6157
      %v6606 = vpack.c.b16 %v6166, %v6158
      %v6607 = vpack.c.b16 %v6167, %v6159
      %v6608 = vpack.c.b16 %v6176, %v6168
      %v6609 = vpack.c.b16 %v6177, %v6169
      %v6610 = vpack.c.b16 %v6178, %v6170
      %v6611 = vpack.c.b16 %v6179, %v6171
      %v6612 = vpack.c.b16 %v6180, %v6172
      %v6613 = vpack.c.b16 %v6181, %v6173
      %v6614 = vpack.c.b16 %v6182, %v6174
      %v6615 = vpack.c.b16 %v6183, %v6175
      %v6616 = vpack.c.b16 %v6192, %v6184
      %v6617 = vpack.c.b16 %v6193, %v6185
      %v6618 = vpack.c.b16 %v6194, %v6186
      %v6619 = vpack.c.b16 %v6195, %v6187
      %v6620 = vpack.c.b16 %v6196, %v6188
      %v6621 = vpack.c.b16 %v6197, %v6189
      %v6622 = vpack.c.b16 %v6198, %v6190
      %v6623 = vpack.c.b16 %v6199, %v6191
      %v6624 = vpack.c.b16 %v6208, %v6200
      %v6625 = vpack.c.b16 %v6209, %v6201
      %v6626 = vpack.c.b16 %v6210, %v6202
      %v6627 = vpack.c.b16 %v6211, %v6203
      %v6628 = vpack.c.b16 %v6212, %v6204
      %v6629 = vpack.c.b16 %v6213, %v6205
      %v6630 = vpack.c.b16 %v6214, %v6206
      %v6631 = vpack.c.b16 %v6215, %v6207
      %v6632 = vpack.c.b16 %v6224, %v6216
      %v6633 = vpack.c.b16 %v6225, %v6217
      %v6634 = vpack.c.b16 %v6226, %v6218
      %v6635 = vpack.c.b16 %v6227, %v6219
      %v6636 = vpack.c.b16 %v6228, %v6220
      %v6637 = vpack.c.b16 %v6229, %v6221
      %v6638 = vpack.c.b16 %v6230, %v6222
      %v6639 = vpack.c.b16 %v6231, %v6223
      %v6640 = vpack.c.b16 %v6240, %v6232
      %v6641 = vpack.c.b16 %v6241, %v6233
      %v6642 = vpack.c.b16 %v6242, %v6234
      %v6643 = vpack.c.b16 %v6243, %v6235
      %v6644 = vpack.c.b16 %v6244, %v6236
      %v6645 = vpack.c.b16 %v6245, %v6237
      %v6646 = vpack.c.b16 %v6246, %v6238
      %v6647 = vpack.c.b16 %v6247, %v6239
      %v6648 = vpack.c.b16 %v6256, %v6248
      %v6649 = vpack.c.b16 %v6257, %v6249
      %v6650 = vpack.c.b16 %v6258, %v6250
      %v6651 = vpack.c.b16 %v6259, %v6251
      %v6652 = vpack.c.b16 %v6260, %v6252
      %v6653 = vpack.c.b16 %v6261, %v6253
      %v6654 = vpack.c.b16 %v6262, %v6254
      %v6655 = vpack.c.b16 %v6263, %v6255
      %v6656 = vpack.c.b16 %v6272, %v6264
      %v6657 = vpack.c.b16 %v6273, %v6265
      %v6658 = vpack.c.b16 %v6274, %v6266
      %v6659 = vpack.c.b16 %v6275, %v6267
      %v6660 = vpack.c.b16 %v6276, %v6268
      %v6661 = vpack.c.b16 %v6277, %v6269
      %v6662 = vpack.c.b16 %v6278, %v6270
      %v6663 = vpack.c.b16 %v6279, %v6271
      %7048 = vmatprep.subr.bf16.mxu0 %v6281
      %7049 = vmatpush1.bf16.msra.mxu0 %v6280
      %7050 = vmatprep.subr.bf16.mxu0 %v6289
      %7051 = vmatpush1.bf16.msra.mxu0 %v6288
      %7052 = vmatprep.subr.bf16.mxu0 %v6297
      %7053 = vmatpush1.bf16.msra.mxu0 %v6296
      %7054 = vmatprep.subr.bf16.mxu0 %v6305
      %7055 = vmatpush1.bf16.msra.mxu0 %v6304
      %7056 = vmatprep.subr.bf16.mxu0 %v6313
      %7057 = vmatpush1.bf16.msra.mxu0 %v6312
      %7058 = vmatprep.subr.bf16.mxu0 %v6321
      %7059 = vmatpush1.bf16.msra.mxu0 %v6320
      %7060 = vmatprep.subr.bf16.mxu0 %v6329
      %7061 = vmatpush1.bf16.msra.mxu0 %v6328
      %7062 = vmatprep.subr.bf16.mxu0 %v6337
      %7063 = vmatpush1.bf16.msra.mxu0 %v6336
      %7064 = vmatprep.subr.bf16.mxu0 %v6345
      %7065 = vmatpush1.bf16.msra.mxu0 %v6344
      %7066 = vmatprep.subr.bf16.mxu0 %v6353
      %7067 = vmatpush1.bf16.msra.mxu0 %v6352
      %7068 = vmatprep.subr.bf16.mxu0 %v6361
      %7069 = vmatpush1.bf16.msra.mxu0 %v6360
      %7070 = vmatprep.subr.bf16.mxu0 %v6369
      %7071 = vmatpush1.bf16.msra.mxu0 %v6368
      %7072 = vmatprep.subr.bf16.mxu0 %v6377
      %7073 = vmatpush1.bf16.msra.mxu0 %v6376
      %7074 = vmatprep.subr.bf16.mxu0 %v6385
      %7075 = vmatpush1.bf16.msra.mxu0 %v6384
      %7076 = vmatprep.subr.bf16.mxu0 %v6393
      %7077 = vmatpush1.bf16.msra.mxu0 %v6392
      %7078 = vmatprep.subr.bf16.mxu0 %v6401
      %7079 = vmatpush1.bf16.msra.mxu0 %v6400
      %7080 = vmatprep.mubr.bf16.mxu0 %v4697
      %7081 = vmatmul.mubr.bf16.gmra.mrb[0].mxu0 %v4696
      %v7082 = vpop.f32.mrb[0].mxu0
      %v7083 = vadd.f32 %v5091, %v7082
      %v7084 = vpop.f32.mrb[0].mxu0
      %v7085 = vadd.f32 %v5095, %v7084
      %v7086 = vpop.f32.mrb[0].mxu0
      %v7087 = vpop.f32.mrb[0].mxu0
      %7088 = vdwg.mxu0
      %7089 = vmatprep.subr.bf16.mxu0 %v6409
      %7090 = vmatpush1.bf16.msra.mxu0 %v6408
      %7091 = vmatprep.subr.bf16.mxu0 %v6417
      %7092 = vmatpush1.bf16.msra.mxu0 %v6416
      %7093 = vmatprep.subr.bf16.mxu0 %v6425
      %7094 = vmatpush1.bf16.msra.mxu0 %v6424
      %7095 = vmatprep.subr.bf16.mxu0 %v6433
      %7096 = vmatpush1.bf16.msra.mxu0 %v6432
      %7097 = vmatprep.subr.bf16.mxu0 %v6441
      %7098 = vmatpush1.bf16.msra.mxu0 %v6440
      %7099 = vmatprep.subr.bf16.mxu0 %v6449
      %7100 = vmatpush1.bf16.msra.mxu0 %v6448
      %7101 = vmatprep.subr.bf16.mxu0 %v6457
      %7102 = vmatpush1.bf16.msra.mxu0 %v6456
      %7103 = vmatprep.subr.bf16.mxu0 %v6465
      %7104 = vmatpush1.bf16.msra.mxu0 %v6464
      %7105 = vmatprep.subr.bf16.mxu0 %v6473
      %7106 = vmatpush1.bf16.msra.mxu0 %v6472
      %7107 = vmatprep.subr.bf16.mxu0 %v6481
      %7108 = vmatpush1.bf16.msra.mxu0 %v6480
      %7109 = vmatprep.subr.bf16.mxu0 %v6489
      %7110 = vmatpush1.bf16.msra.mxu0 %v6488
      %7111 = vmatprep.subr.bf16.mxu0 %v6497
      %7112 = vmatpush1.bf16.msra.mxu0 %v6496
      %7113 = vmatprep.subr.bf16.mxu0 %v6505
      %7114 = vmatpush1.bf16.msra.mxu0 %v6504
      %7115 = vmatprep.subr.bf16.mxu0 %v6513
      %7116 = vmatpush1.bf16.msra.mxu0 %v6512
      %7117 = vmatprep.subr.bf16.mxu0 %v6521
      %7118 = vmatpush1.bf16.msra.mxu0 %v6520
      %7119 = vmatprep.subr.bf16.mxu0 %v6529
      %7120 = vmatpush1.bf16.msra.mxu0 %v6528
      %7121 = vmatprep.mubr.bf16.mxu0 %v4699
      %7122 = vmatmul.mubr.bf16.gmra.mrb[0].mxu0 %v4698
      %v7123 = vpop.f32.mrb[0].mxu0
      %v7124 = vadd.f32 %v7083, %v7123
      %v7125 = vpop.f32.mrb[0].mxu0
      %v7126 = vadd.f32 %v7085, %v7125
      %v7127 = vpop.f32.mrb[0].mxu0
      %v7128 = vpop.f32.mrb[0].mxu0
      %7129 = vdwg.mxu0
      %7130 = vmatprep.subr.bf16.mxu0 %v6537
      %7131 = vmatpush1.bf16.msra.mxu0 %v6536
      %7132 = vmatprep.subr.bf16.mxu0 %v6545
      %7133 = vmatpush1.bf16.msra.mxu0 %v6544
      %7134 = vmatprep.subr.bf16.mxu0 %v6553
      %7135 = vmatpush1.bf16.msra.mxu0 %v6552
      %7136 = vmatprep.subr.bf16.mxu0 %v6561
      %7137 = vmatpush1.bf16.msra.mxu0 %v6560
      %7138 = vmatprep.subr.bf16.mxu0 %v6569
      %7139 = vmatpush1.bf16.msra.mxu0 %v6568
      %7140 = vmatprep.subr.bf16.mxu0 %v6577
      %7141 = vmatpush1.bf16.msra.mxu0 %v6576
      %7142 = vmatprep.subr.bf16.mxu0 %v6585
      %7143 = vmatpush1.bf16.msra.mxu0 %v6584
      %7144 = vmatprep.subr.bf16.mxu0 %v6593
      %7145 = vmatpush1.bf16.msra.mxu0 %v6592
      %7146 = vmatprep.subr.bf16.mxu0 %v6601
      %7147 = vmatpush1.bf16.msra.mxu0 %v6600
      %7148 = vmatprep.subr.bf16.mxu0 %v6609
      %7149 = vmatpush1.bf16.msra.mxu0 %v6608
      %7150 = vmatprep.subr.bf16.mxu0 %v6617
      %7151 = vmatpush1.bf16.msra.mxu0 %v6616
      %7152 = vmatprep.subr.bf16.mxu0 %v6625
      %7153 = vmatpush1.bf16.msra.mxu0 %v6624
      %7154 = vmatprep.subr.bf16.mxu0 %v6633
      %7155 = vmatpush1.bf16.msra.mxu0 %v6632
      %7156 = vmatprep.subr.bf16.mxu0 %v6641
      %7157 = vmatpush1.bf16.msra.mxu0 %v6640
      %7158 = vmatprep.subr.bf16.mxu0 %v6649
      %7159 = vmatpush1.bf16.msra.mxu0 %v6648
      %7160 = vmatprep.subr.bf16.mxu0 %v6657
      %7161 = vmatpush1.bf16.msra.mxu0 %v6656
      %7162 = vmatprep.mubr.bf16.mxu0 %v4701
      %7163 = vmatmul.mubr.bf16.gmra.mrb[0].mxu0 %v4700
      %v7164 = vpop.f32.mrb[0].mxu0
      %v7165 = vadd.f32 %v7124, %v7164
      %v7166 = vpop.f32.mrb[0].mxu0
      %v7167 = vadd.f32 %v7126, %v7166
      %v7168 = vpop.f32.mrb[0].mxu0
      %v7169 = vpop.f32.mrb[0].mxu0
      %7170 = vdwg.mxu0
      %7171 = vmatprep.subr.bf16.mxu0 %v6283
      %7172 = vmatpush1.bf16.msra.mxu0 %v6282
      %7173 = vmatprep.subr.bf16.mxu0 %v6291
      %7174 = vmatpush1.bf16.msra.mxu0 %v6290
      %7175 = vmatprep.subr.bf16.mxu0 %v6299
      %7176 = vmatpush1.bf16.msra.mxu0 %v6298
      %7177 = vmatprep.subr.bf16.mxu0 %v6307
      %7178 = vmatpush1.bf16.msra.mxu0 %v6306
      %7179 = vmatprep.subr.bf16.mxu0 %v6315
      %7180 = vmatpush1.bf16.msra.mxu0 %v6314
      %7181 = vmatprep.subr.bf16.mxu0 %v6323
      %7182 = vmatpush1.bf16.msra.mxu0 %v6322
      %7183 = vmatprep.subr.bf16.mxu0 %v6331
      %7184 = vmatpush1.bf16.msra.mxu0 %v6330
      %7185 = vmatprep.subr.bf16.mxu0 %v6339
      %7186 = vmatpush1.bf16.msra.mxu0 %v6338
      %7187 = vmatprep.subr.bf16.mxu0 %v6347
      %7188 = vmatpush1.bf16.msra.mxu0 %v6346
      %7189 = vmatprep.subr.bf16.mxu0 %v6355
      %7190 = vmatpush1.bf16.msra.mxu0 %v6354
      %7191 = vmatprep.subr.bf16.mxu0 %v6363
      %7192 = vmatpush1.bf16.msra.mxu0 %v6362
      %7193 = vmatprep.subr.bf16.mxu0 %v6371
      %7194 = vmatpush1.bf16.msra.mxu0 %v6370
      %7195 = vmatprep.subr.bf16.mxu0 %v6379
      %7196 = vmatpush1.bf16.msra.mxu0 %v6378
      %7197 = vmatprep.subr.bf16.mxu0 %v6387
      %7198 = vmatpush1.bf16.msra.mxu0 %v6386
      %7199 = vmatprep.subr.bf16.mxu0 %v6395
      %7200 = vmatpush1.bf16.msra.mxu0 %v6394
      %7201 = vmatprep.subr.bf16.mxu0 %v6403
      %7202 = vmatpush1.bf16.msra.mxu0 %v6402
      %7203 = vmatprep.mubr.bf16.mxu0 %v4697
      %7204 = vmatmul.mubr.bf16.gmra.mrb[0].mxu0 %v4696
      %v7205 = vpop.f32.mrb[0].mxu0
      %v7206 = vadd.f32 %v5099, %v7205
      %v7207 = vpop.f32.mrb[0].mxu0
      %v7208 = vadd.f32 %v5103, %v7207
      %v7209 = vpop.f32.mrb[0].mxu0
      %v7210 = vpop.f32.mrb[0].mxu0
      %7211 = vdwg.mxu0
      %7212 = vmatprep.subr.bf16.mxu0 %v6411
      %7213 = vmatpush1.bf16.msra.mxu0 %v6410
      %7214 = vmatprep.subr.bf16.mxu0 %v6419
      %7215 = vmatpush1.bf16.msra.mxu0 %v6418
      %7216 = vmatprep.subr.bf16.mxu0 %v6427
      %7217 = vmatpush1.bf16.msra.mxu0 %v6426
      %7218 = vmatprep.subr.bf16.mxu0 %v6435
      %7219 = vmatpush1.bf16.msra.mxu0 %v6434
      %7220 = vmatprep.subr.bf16.mxu0 %v6443
      %7221 = vmatpush1.bf16.msra.mxu0 %v6442
      %7222 = vmatprep.subr.bf16.mxu0 %v6451
      %7223 = vmatpush1.bf16.msra.mxu0 %v6450
      %7224 = vmatprep.subr.bf16.mxu0 %v6459
      %7225 = vmatpush1.bf16.msra.mxu0 %v6458
      %7226 = vmatprep.subr.bf16.mxu0 %v6467
      %7227 = vmatpush1.bf16.msra.mxu0 %v6466
      %7228 = vmatprep.subr.bf16.mxu0 %v6475
      %7229 = vmatpush1.bf16.msra.mxu0 %v6474
      %7230 = vmatprep.subr.bf16.mxu0 %v6483
      %7231 = vmatpush1.bf16.msra.mxu0 %v6482
      %7232 = vmatprep.subr.bf16.mxu0 %v6491
      %7233 = vmatpush1.bf16.msra.mxu0 %v6490
      %7234 = vmatprep.subr.bf16.mxu0 %v6499
      %7235 = vmatpush1.bf16.msra.mxu0 %v6498
      %7236 = vmatprep.subr.bf16.mxu0 %v6507
      %7237 = vmatpush1.bf16.msra.mxu0 %v6506
      %7238 = vmatprep.subr.bf16.mxu0 %v6515
      %7239 = vmatpush1.bf16.msra.mxu0 %v6514
      %7240 = vmatprep.subr.bf16.mxu0 %v6523
      %7241 = vmatpush1.bf16.msra.mxu0 %v6522
      %7242 = vmatprep.subr.bf16.mxu0 %v6531
      %7243 = vmatpush1.bf16.msra.mxu0 %v6530
      %7244 = vmatprep.mubr.bf16.mxu0 %v4699
      %7245 = vmatmul.mubr.bf16.gmra.mrb[0].mxu0 %v4698
      %v7246 = vpop.f32.mrb[0].mxu0
      %v7247 = vadd.f32 %v7206, %v7246
      %v7248 = vpop.f32.mrb[0].mxu0
      %v7249 = vadd.f32 %v7208, %v7248
      %v7250 = vpop.f32.mrb[0].mxu0
      %v7251 = vpop.f32.mrb[0].mxu0
      %7252 = vdwg.mxu0
      %7253 = vmatprep.subr.bf16.mxu0 %v6539
      %7254 = vmatpush1.bf16.msra.mxu0 %v6538
      %7255 = vmatprep.subr.bf16.mxu0 %v6547
      %7256 = vmatpush1.bf16.msra.mxu0 %v6546
      %7257 = vmatprep.subr.bf16.mxu0 %v6555
      %7258 = vmatpush1.bf16.msra.mxu0 %v6554
      %7259 = vmatprep.subr.bf16.mxu0 %v6563
      %7260 = vmatpush1.bf16.msra.mxu0 %v6562
      %7261 = vmatprep.subr.bf16.mxu0 %v6571
      %7262 = vmatpush1.bf16.msra.mxu0 %v6570
      %7263 = vmatprep.subr.bf16.mxu0 %v6579
      %7264 = vmatpush1.bf16.msra.mxu0 %v6578
      %7265 = vmatprep.subr.bf16.mxu0 %v6587
      %7266 = vmatpush1.bf16.msra.mxu0 %v6586
      %7267 = vmatprep.subr.bf16.mxu0 %v6595
      %7268 = vmatpush1.bf16.msra.mxu0 %v6594
      %7269 = vmatprep.subr.bf16.mxu0 %v6603
      %7270 = vmatpush1.bf16.msra.mxu0 %v6602
      %7271 = vmatprep.subr.bf16.mxu0 %v6611
      %7272 = vmatpush1.bf16.msra.mxu0 %v6610
      %7273 = vmatprep.subr.bf16.mxu0 %v6619
      %7274 = vmatpush1.bf16.msra.mxu0 %v6618
      %7275 = vmatprep.subr.bf16.mxu0 %v6627
      %7276 = vmatpush1.bf16.msra.mxu0 %v6626
      %7277 = vmatprep.subr.bf16.mxu0 %v6635
      %7278 = vmatpush1.bf16.msra.mxu0 %v6634
      %7279 = vmatprep.subr.bf16.mxu0 %v6643
      %7280 = vmatpush1.bf16.msra.mxu0 %v6642
      %7281 = vmatprep.subr.bf16.mxu0 %v6651
      %7282 = vmatpush1.bf16.msra.mxu0 %v6650
      %7283 = vmatprep.subr.bf16.mxu0 %v6659
      %7284 = vmatpush1.bf16.msra.mxu0 %v6658
      %7285 = vmatprep.mubr.bf16.mxu0 %v4701
      %7286 = vmatmul.mubr.bf16.gmra.mrb[0].mxu0 %v4700
      %v7287 = vpop.f32.mrb[0].mxu0
      %v7288 = vadd.f32 %v7247, %v7287
      %v7289 = vpop.f32.mrb[0].mxu0
      %v7290 = vadd.f32 %v7249, %v7289
      %v7291 = vpop.f32.mrb[0].mxu0
      %v7292 = vpop.f32.mrb[0].mxu0
      %7293 = vdwg.mxu0
      %7294 = vmatprep.subr.bf16.mxu0 %v6285
      %7295 = vmatpush1.bf16.msra.mxu0 %v6284
      %7296 = vmatprep.subr.bf16.mxu0 %v6293
      %7297 = vmatpush1.bf16.msra.mxu0 %v6292
      %7298 = vmatprep.subr.bf16.mxu0 %v6301
      %7299 = vmatpush1.bf16.msra.mxu0 %v6300
      %7300 = vmatprep.subr.bf16.mxu0 %v6309
      %7301 = vmatpush1.bf16.msra.mxu0 %v6308
      %7302 = vmatprep.subr.bf16.mxu0 %v6317
      %7303 = vmatpush1.bf16.msra.mxu0 %v6316
      %7304 = vmatprep.subr.bf16.mxu0 %v6325
      %7305 = vmatpush1.bf16.msra.mxu0 %v6324
      %7306 = vmatprep.subr.bf16.mxu0 %v6333
      %7307 = vmatpush1.bf16.msra.mxu0 %v6332
      %7308 = vmatprep.subr.bf16.mxu0 %v6341
      %7309 = vmatpush1.bf16.msra.mxu0 %v6340
      %7310 = vmatprep.subr.bf16.mxu0 %v6349
      %7311 = vmatpush1.bf16.msra.mxu0 %v6348
      %7312 = vmatprep.subr.bf16.mxu0 %v6357
      %7313 = vmatpush1.bf16.msra.mxu0 %v6356
      %7314 = vmatprep.subr.bf16.mxu0 %v6365
      %7315 = vmatpush1.bf16.msra.mxu0 %v6364
      %7316 = vmatprep.subr.bf16.mxu0 %v6373
      %7317 = vmatpush1.bf16.msra.mxu0 %v6372
      %7318 = vmatprep.subr.bf16.mxu0 %v6381
      %7319 = vmatpush1.bf16.msra.mxu0 %v6380
      %7320 = vmatprep.subr.bf16.mxu0 %v6389
      %7321 = vmatpush1.bf16.msra.mxu0 %v6388
      %7322 = vmatprep.subr.bf16.mxu0 %v6397
      %7323 = vmatpush1.bf16.msra.mxu0 %v6396
      %7324 = vmatprep.subr.bf16.mxu0 %v6405
      %7325 = vmatpush1.bf16.msra.mxu0 %v6404
      %7326 = vmatprep.mubr.bf16.mxu0 %v4697
      %7327 = vmatmul.mubr.bf16.gmra.mrb[0].mxu0 %v4696
      %v7328 = vpop.f32.mrb[0].mxu0
      %v7329 = vadd.f32 %v5107, %v7328
      %v7330 = vpop.f32.mrb[0].mxu0
      %v7331 = vadd.f32 %v5111, %v7330
      %v7332 = vpop.f32.mrb[0].mxu0
      %v7333 = vpop.f32.mrb[0].mxu0
      %7334 = vdwg.mxu0
      %7335 = vmatprep.subr.bf16.mxu0 %v6413
      %7336 = vmatpush1.bf16.msra.mxu0 %v6412
      %7337 = vmatprep.subr.bf16.mxu0 %v6421
      %7338 = vmatpush1.bf16.msra.mxu0 %v6420
      %7339 = vmatprep.subr.bf16.mxu0 %v6429
      %7340 = vmatpush1.bf16.msra.mxu0 %v6428
      %7341 = vmatprep.subr.bf16.mxu0 %v6437
      %7342 = vmatpush1.bf16.msra.mxu0 %v6436
      %7343 = vmatprep.subr.bf16.mxu0 %v6445
      %7344 = vmatpush1.bf16.msra.mxu0 %v6444
      %7345 = vmatprep.subr.bf16.mxu0 %v6453
      %7346 = vmatpush1.bf16.msra.mxu0 %v6452
      %7347 = vmatprep.subr.bf16.mxu0 %v6461
      %7348 = vmatpush1.bf16.msra.mxu0 %v6460
      %7349 = vmatprep.subr.bf16.mxu0 %v6469
      %7350 = vmatpush1.bf16.msra.mxu0 %v6468
      %7351 = vmatprep.subr.bf16.mxu0 %v6477
      %7352 = vmatpush1.bf16.msra.mxu0 %v6476
      %7353 = vmatprep.subr.bf16.mxu0 %v6485
      %7354 = vmatpush1.bf16.msra.mxu0 %v6484
      %7355 = vmatprep.subr.bf16.mxu0 %v6493
      %7356 = vmatpush1.bf16.msra.mxu0 %v6492
      %7357 = vmatprep.subr.bf16.mxu0 %v6501
      %7358 = vmatpush1.bf16.msra.mxu0 %v6500
      %7359 = vmatprep.subr.bf16.mxu0 %v6509
      %7360 = vmatpush1.bf16.msra.mxu0 %v6508
      %7361 = vmatprep.subr.bf16.mxu0 %v6517
      %7362 = vmatpush1.bf16.msra.mxu0 %v6516
      %7363 = vmatprep.subr.bf16.mxu0 %v6525
      %7364 = vmatpush1.bf16.msra.mxu0 %v6524
      %7365 = vmatprep.subr.bf16.mxu0 %v6533
      %7366 = vmatpush1.bf16.msra.mxu0 %v6532
      %7367 = vmatprep.mubr.bf16.mxu0 %v4699
      %7368 = vmatmul.mubr.bf16.gmra.mrb[0].mxu0 %v4698
      %v7369 = vpop.f32.mrb[0].mxu0
      %v7370 = vadd.f32 %v7329, %v7369
      %v7371 = vpop.f32.mrb[0].mxu0
      %v7372 = vadd.f32 %v7331, %v7371
      %v7373 = vpop.f32.mrb[0].mxu0
      %v7374 = vpop.f32.mrb[0].mxu0
      %7375 = vdwg.mxu0
      %7376 = vmatprep.subr.bf16.mxu0 %v6541
      %7377 = vmatpush1.bf16.msra.mxu0 %v6540
      %7378 = vmatprep.subr.bf16.mxu0 %v6549
      %7379 = vmatpush1.bf16.msra.mxu0 %v6548
      %7380 = vmatprep.subr.bf16.mxu0 %v6557
      %7381 = vmatpush1.bf16.msra.mxu0 %v6556
      %7382 = vmatprep.subr.bf16.mxu0 %v6565
      %7383 = vmatpush1.bf16.msra.mxu0 %v6564
      %7384 = vmatprep.subr.bf16.mxu0 %v6573
      %7385 = vmatpush1.bf16.msra.mxu0 %v6572
      %7386 = vmatprep.subr.bf16.mxu0 %v6581
      %7387 = vmatpush1.bf16.msra.mxu0 %v6580
      %7388 = vmatprep.subr.bf16.mxu0 %v6589
      %7389 = vmatpush1.bf16.msra.mxu0 %v6588
      %7390 = vmatprep.subr.bf16.mxu0 %v6597
      %7391 = vmatpush1.bf16.msra.mxu0 %v6596
      %7392 = vmatprep.subr.bf16.mxu0 %v6605
      %7393 = vmatpush1.bf16.msra.mxu0 %v6604
      %7394 = vmatprep.subr.bf16.mxu0 %v6613
      %7395 = vmatpush1.bf16.msra.mxu0 %v6612
      %7396 = vmatprep.subr.bf16.mxu0 %v6621
      %7397 = vmatpush1.bf16.msra.mxu0 %v6620
      %7398 = vmatprep.subr.bf16.mxu0 %v6629
      %7399 = vmatpush1.bf16.msra.mxu0 %v6628
      %7400 = vmatprep.subr.bf16.mxu0 %v6637
      %7401 = vmatpush1.bf16.msra.mxu0 %v6636
      %7402 = vmatprep.subr.bf16.mxu0 %v6645
      %7403 = vmatpush1.bf16.msra.mxu0 %v6644
      %7404 = vmatprep.subr.bf16.mxu0 %v6653
      %7405 = vmatpush1.bf16.msra.mxu0 %v6652
      %7406 = vmatprep.subr.bf16.mxu0 %v6661
      %7407 = vmatpush1.bf16.msra.mxu0 %v6660
      %7408 = vmatprep.mubr.bf16.mxu0 %v4701
      %7409 = vmatmul.mubr.bf16.gmra.mrb[0].mxu0 %v4700
      %v7410 = vpop.f32.mrb[0].mxu0
      %v7411 = vadd.f32 %v7370, %v7410
      %v7412 = vpop.f32.mrb[0].mxu0
      %v7413 = vadd.f32 %v7372, %v7412
      %v7414 = vpop.f32.mrb[0].mxu0
      %v7415 = vpop.f32.mrb[0].mxu0
      %7416 = vdwg.mxu0
      %7417 = vmatprep.subr.bf16.mxu0 %v6287
      %7418 = vmatpush1.bf16.msra.mxu0 %v6286
      %7419 = vmatprep.subr.bf16.mxu0 %v6295
      %7420 = vmatpush1.bf16.msra.mxu0 %v6294
      %7421 = vmatprep.subr.bf16.mxu0 %v6303
      %7422 = vmatpush1.bf16.msra.mxu0 %v6302
      %7423 = vmatprep.subr.bf16.mxu0 %v6311
      %7424 = vmatpush1.bf16.msra.mxu0 %v6310
      %7425 = vmatprep.subr.bf16.mxu0 %v6319
      %7426 = vmatpush1.bf16.msra.mxu0 %v6318
      %7427 = vmatprep.subr.bf16.mxu0 %v6327
      %7428 = vmatpush1.bf16.msra.mxu0 %v6326
      %7429 = vmatprep.subr.bf16.mxu0 %v6335
      %7430 = vmatpush1.bf16.msra.mxu0 %v6334
      %7431 = vmatprep.subr.bf16.mxu0 %v6343
      %7432 = vmatpush1.bf16.msra.mxu0 %v6342
      %7433 = vmatprep.subr.bf16.mxu0 %v6351
      %7434 = vmatpush1.bf16.msra.mxu0 %v6350
      %7435 = vmatprep.subr.bf16.mxu0 %v6359
      %7436 = vmatpush1.bf16.msra.mxu0 %v6358
      %7437 = vmatprep.subr.bf16.mxu0 %v6367
      %7438 = vmatpush1.bf16.msra.mxu0 %v6366
      %7439 = vmatprep.subr.bf16.mxu0 %v6375
      %7440 = vmatpush1.bf16.msra.mxu0 %v6374
      %7441 = vmatprep.subr.bf16.mxu0 %v6383
      %7442 = vmatpush1.bf16.msra.mxu0 %v6382
      %7443 = vmatprep.subr.bf16.mxu0 %v6391
      %7444 = vmatpush1.bf16.msra.mxu0 %v6390
      %7445 = vmatprep.subr.bf16.mxu0 %v6399
      %7446 = vmatpush1.bf16.msra.mxu0 %v6398
      %7447 = vmatprep.subr.bf16.mxu0 %v6407
      %7448 = vmatpush1.bf16.msra.mxu0 %v6406
      %7449 = vmatprep.mubr.bf16.mxu0 %v4697
      %7450 = vmatmul.mubr.bf16.gmra.mrb[0].mxu0 %v4696
      %v7451 = vpop.f32.mrb[0].mxu0
      %v7452 = vadd.f32 %v5115, %v7451
      %v7453 = vpop.f32.mrb[0].mxu0
      %v7454 = vadd.f32 %v5119, %v7453
      %v7455 = vpop.f32.mrb[0].mxu0
      %v7456 = vpop.f32.mrb[0].mxu0
      %7457 = vdwg.mxu0
      %7458 = vmatprep.subr.bf16.mxu0 %v6415
      %7459 = vmatpush1.bf16.msra.mxu0 %v6414
      %7460 = vmatprep.subr.bf16.mxu0 %v6423
      %7461 = vmatpush1.bf16.msra.mxu0 %v6422
      %7462 = vmatprep.subr.bf16.mxu0 %v6431
      %7463 = vmatpush1.bf16.msra.mxu0 %v6430
      %7464 = vmatprep.subr.bf16.mxu0 %v6439
      %7465 = vmatpush1.bf16.msra.mxu0 %v6438
      %7466 = vmatprep.subr.bf16.mxu0 %v6447
      %7467 = vmatpush1.bf16.msra.mxu0 %v6446
      %7468 = vmatprep.subr.bf16.mxu0 %v6455
      %7469 = vmatpush1.bf16.msra.mxu0 %v6454
      %7470 = vmatprep.subr.bf16.mxu0 %v6463
      %7471 = vmatpush1.bf16.msra.mxu0 %v6462
      %7472 = vmatprep.subr.bf16.mxu0 %v6471
      %7473 = vmatpush1.bf16.msra.mxu0 %v6470
      %7474 = vmatprep.subr.bf16.mxu0 %v6479
      %7475 = vmatpush1.bf16.msra.mxu0 %v6478
      %7476 = vmatprep.subr.bf16.mxu0 %v6487
      %7477 = vmatpush1.bf16.msra.mxu0 %v6486
      %7478 = vmatprep.subr.bf16.mxu0 %v6495
      %7479 = vmatpush1.bf16.msra.mxu0 %v6494
      %7480 = vmatprep.subr.bf16.mxu0 %v6503
      %7481 = vmatpush1.bf16.msra.mxu0 %v6502
      %7482 = vmatprep.subr.bf16.mxu0 %v6511
      %7483 = vmatpush1.bf16.msra.mxu0 %v6510
      %7484 = vmatprep.subr.bf16.mxu0 %v6519
      %7485 = vmatpush1.bf16.msra.mxu0 %v6518
      %7486 = vmatprep.subr.bf16.mxu0 %v6527
      %7487 = vmatpush1.bf16.msra.mxu0 %v6526
      %7488 = vmatprep.subr.bf16.mxu0 %v6535
      %7489 = vmatpush1.bf16.msra.mxu0 %v6534
      %7490 = vmatprep.mubr.bf16.mxu0 %v4699
      %7491 = vmatmul.mubr.bf16.gmra.mrb[0].mxu0 %v4698
      %v7492 = vpop.f32.mrb[0].mxu0
      %v7493 = vadd.f32 %v7452, %v7492
      %v7494 = vpop.f32.mrb[0].mxu0
      %v7495 = vadd.f32 %v7454, %v7494
      %v7496 = vpop.f32.mrb[0].mxu0
      %v7497 = vpop.f32.mrb[0].mxu0
      %7498 = vdwg.mxu0
      %7499 = vmatprep.subr.bf16.mxu0 %v6543
      %7500 = vmatpush1.bf16.msra.mxu0 %v6542
      %7501 = vmatprep.subr.bf16.mxu0 %v6551
      %7502 = vmatpush1.bf16.msra.mxu0 %v6550
      %7503 = vmatprep.subr.bf16.mxu0 %v6559
      %7504 = vmatpush1.bf16.msra.mxu0 %v6558
      %7505 = vmatprep.subr.bf16.mxu0 %v6567
      %7506 = vmatpush1.bf16.msra.mxu0 %v6566
      %7507 = vmatprep.subr.bf16.mxu0 %v6575
      %7508 = vmatpush1.bf16.msra.mxu0 %v6574
      %7509 = vmatprep.subr.bf16.mxu0 %v6583
      %7510 = vmatpush1.bf16.msra.mxu0 %v6582
      %7511 = vmatprep.subr.bf16.mxu0 %v6591
      %7512 = vmatpush1.bf16.msra.mxu0 %v6590
      %7513 = vmatprep.subr.bf16.mxu0 %v6599
      %7514 = vmatpush1.bf16.msra.mxu0 %v6598
      %7515 = vmatprep.subr.bf16.mxu0 %v6607
      %7516 = vmatpush1.bf16.msra.mxu0 %v6606
      %7517 = vmatprep.subr.bf16.mxu0 %v6615
      %7518 = vmatpush1.bf16.msra.mxu0 %v6614
      %7519 = vmatprep.subr.bf16.mxu0 %v6623
      %7520 = vmatpush1.bf16.msra.mxu0 %v6622
      %7521 = vmatprep.subr.bf16.mxu0 %v6631
      %7522 = vmatpush1.bf16.msra.mxu0 %v6630
      %7523 = vmatprep.subr.bf16.mxu0 %v6639
      %7524 = vmatpush1.bf16.msra.mxu0 %v6638
      %7525 = vmatprep.subr.bf16.mxu0 %v6647
      %7526 = vmatpush1.bf16.msra.mxu0 %v6646
      %7527 = vmatprep.subr.bf16.mxu0 %v6655
      %7528 = vmatpush1.bf16.msra.mxu0 %v6654
      %7529 = vmatprep.subr.bf16.mxu0 %v6663
      %7530 = vmatpush1.bf16.msra.mxu0 %v6662
      %7531 = vmatprep.mubr.bf16.mxu0 %v4701
      %7532 = vmatmul.mubr.bf16.gmra.mrb[0].mxu0 %v4700
      %v7533 = vpop.f32.mrb[0].mxu0
      %v7534 = vadd.f32 %v7493, %v7533
      %v7535 = vpop.f32.mrb[0].mxu0
      %v7536 = vadd.f32 %v7495, %v7535
      %v7537 = vpop.f32.mrb[0].mxu0
      %v7538 = vpop.f32.mrb[0].mxu0
      %7539 = vdwg.mxu0
      %7540 = vst [vmem:[%s278] sm:$0xff] %v7165
      %7541 = vst [vmem:[%s278 + $0x8] sm:$0xff] %v7167
      %7542 = vst [vmem:[%s278 + $0x10] sm:$0xff] %v7288
      %7543 = vst [vmem:[%s278 + $0x18] sm:$0xff] %v7290
      %7544 = vst [vmem:[%s278 + $0x20] sm:$0xff] %v7411
      %7545 = vst [vmem:[%s278 + $0x28] sm:$0xff] %v7413
      %7546 = vst [vmem:[%s278 + $0x30] sm:$0xff] %v7534
      %7547 = vst [vmem:[%s278 + $0x38] sm:$0xff] %v7536
      %p7548 = scmp.lt.s32.totalorder %s18, 1
      %s7549 = scalar_select %p7548, %s18, 1
      %s7550 = smul.addr %s7549, 8
      %s7551 = smul.addr %s7550, 8
      %s7552 = scalar_lea.vmem %s7, %s7551
      // Predicated region
      $region49: #{sd_model_forward.1} parent=47 // pred_check
        %p7553 = pneg %p188
      $region50: #{sd_model_forward.1} parent=47 // pred_check_branch
        %7555 = sbr.rel (%p7553) target = $region52
      $region51: #{sd_model_forward.1} parent=47 // pred_region
        _
      $region52: #{sd_model_forward.1} parent=47 // pred_fallthru
        _
    $region48: #{sd_model_forward.1} parent=5 // pred_fallthru
      _
    %p7556 = scmp.le.s32.totalorder 2, %s13
    // Predicated region
    $region53: #{sd_model_forward.1} parent=5 // pred_check
      %p7557 = pneg %p7556
    $region54: #{sd_model_forward.1} parent=5 // pred_check_branch
      %7559 = sbr.rel (%p7557) target = $region56
    $region55: #{sd_model_forward.1} parent=5 // pred_region
      %s7560 = ssub.s32 %s13, 2
      // Predicated region
      $region57: #{sd_model_forward.1} parent=55 // pred_check
        %p7561 = pneg %p194
      $region58: #{sd_model_forward.1} parent=55 // pred_check_branch
        %7563 = sbr.rel (%p7561) target = $region60
      $region59: #{sd_model_forward.1} parent=55 // pred_region
        %p7564 = scmp.lt.s32.totalorder %s19, 1
        %s7565 = scalar_select %p7564, %s19, 1
        %s7566 = smul.addr %s7565, 8
        %s7567 = smul.addr %s7566, 8
        %s7568 = scalar_lea.vmem %s7, %s7567
      $region60: #{sd_model_forward.1} parent=55 // pred_fallthru
        _
    $region56: #{sd_model_forward.1} parent=5 // pred_fallthru
      _
  $region6: #{sd_model_forward.1} parent=0 // loop_footer
    %s17 = sadd.s32 1, %s13
  $region7: #{sd_model_forward.1} parent=0 // loop_footer_branch
    %12 = sbr.rel target = $region3
  $region8: #{sd_model_forward.1} parent=0 // loop_exit
    _

</llo_original>
